<compile_context>
chip_gen: v7x
topology: tpu7x:2x2x1
jax: 0.10.0
libtpu: 0.0.40
codegen_flags: <defaults>
</compile_context>

<pallas_src>
import jax
import jax.numpy as jnp
from jax import lax
from jax.experimental import pallas as pl
from jax.experimental.pallas import tpu as pltpu


def _sigmoid_fast(x):
    # tanh-form sigmoid: one EUP op + one VPU FMA (mathematically == 1/(1+exp(-x))).
    return 0.5 * jnp.tanh(0.5 * x) + 0.5


def _lstm_mlp_shot_kernel(x_ref, wih0_ref, bl0_ref, whh0_ref, wl1_ref, bl1_ref,
                          w1_ref, b1_ref, w2_ref, b2_ref, o_ref, xg_ref):
    T, tb, inp_p = x_ref.shape
    H = whh0_ref.shape[0]
    H4 = 4 * H

    # ---- Hoisted layer-0 input projection (one matmul per batch tile, bias fused) ----
    x_flat = x_ref[...].reshape(T * tb, inp_p)                       # leading-dim merge (no-op)
    xg = jnp.dot(x_flat, wih0_ref[...],
                 preferred_element_type=jnp.float32) + bl0_ref[...]  # (T*tb, 4H)
    xg_ref[...] = xg.reshape(T, tb, H4)

    # Resident (grid-invariant) recurrent weights, loaded once.
    whh0 = whh0_ref[...]        # (H, 4H)   bf16
    wl1 = wl1_ref[...]          # (2H, 4H)  bf16  = [W_ih_l1.T ; W_hh_l1.T]
    bl1 = bl1_ref[...]          # (1, 4H)   f32

    def gates_to_hc(g, c):
        # gates are lane-dense (tb, 4H); slices below are 128-lane aligned (H = 128).
        i = _sigmoid_fast(g[:, 0:H])
        f = _sigmoid_fast(g[:, H:2 * H])
        gg = jnp.tanh(g[:, 2 * H:3 * H])
        o = _sigmoid_fast(g[:, 3 * H:4 * H])
        c_new = f * c + i * gg
        h_new = o * jnp.tanh(c_new)
        return h_new, c_new

    def step(t, carry):
        h0, c0, h1, c1 = carry
        # Layer 0: input term precomputed; only the K=128 recurrent matmul stays serial.
        g0 = xg_ref[t] + jnp.dot(h0.astype(jnp.bfloat16), whh0,
                                 preferred_element_type=jnp.float32)
        h0, c0 = gates_to_hc(g0, c0)
        # Layer 1: fused K=256 matmul fills the MXU depth on v6e/v7x.
        hcat = jnp.concatenate([h0, h1], axis=-1).astype(jnp.bfloat16)   # (tb, 2H)
        g1 = jnp.dot(hcat, wl1, preferred_element_type=jnp.float32) + bl1
        h1, c1 = gates_to_hc(g1, c1)
        return (h0, c0, h1, c1)

    z = jnp.zeros((tb, H), jnp.float32)
    unroll = True if T <= 16 else 4
    _, _, h1, _ = lax.fori_loop(0, T, step, (z, z, z, z), unroll=unroll)

    # MLP head: Linear(H, 32) + ReLU on the MXU, then Linear(32, 1) as a
    # transpose-free VPU multiply + XLU reduce (avoids a 1-wide matmul).
    f1 = jnp.maximum(
        jnp.dot(h1, w1_ref[...], preferred_element_type=jnp.float32) + b1_ref[...],
        0.0)                                                          # (tb, 32)
    logit = jnp.sum(f1 * w2_ref[...], axis=-1, keepdims=True) + b2_ref[0]
    o_ref[...] = _sigmoid_fast(logit).astype(o_ref.dtype)


def lstm_mlp_shot_forward(x, params, *, tile_b=256):
    """x: (B, T, inp_dim) float32 -> (B, 1) float32 sigmoid probabilities."""
    x = jnp.asarray(x, jnp.float32)
    B, T, inp = x.shape
    H = params["whh_l0"].shape[1]          # lstm hidden (128)
    M = params["w1"].shape[0]              # MLP hidden (32)

    f32 = lambda a: jnp.asarray(a, jnp.float32)
    bf16 = lambda a: jnp.asarray(a, jnp.bfloat16)
    r8 = lambda n: -(-n // 8) * 8

    # Batch tiling: tiles are multiples of 8 (f32 sublane). Aim for >= 2 tiles when the
    # batch allows it so the "parallel" axis can feed both TensorCores on v7x.
    b8 = r8(max(B, 8))
    cap = max(8, r8(tile_b))
    tb = min(cap, r8(-(-b8 // 2))) if b8 >= 16 else b8
    Bp = -(-b8 // tb) * tb

    # Pad the tiny feature dim to a multiple of 8 (zero rows in W_ih keep math exact)
    # and go time-major so the kernel indexes x_ref / xg_ref along the leading dim.
    inp_p = r8(inp)
    xp = jnp.zeros((Bp, T, inp_p), jnp.float32).at[:B, :, :inp].set(x)
    xt = jnp.transpose(xp, (1, 0, 2))      # (T, Bp, inp_p)

    # Pre-transposed weights (no in-kernel transposes). Recurrent weights cast to bf16
    # once here; biases of each LSTM layer fused. Layer-1 input/recurrent weights are
    # stacked so the kernel issues a single K=2H matmul per step.
    wih0 = jnp.zeros((inp_p, 4 * H), jnp.float32).at[:inp].set(f32(params["wih_l0"]).T)
    bl0 = (f32(params["bih_l0"]) + f32(params["bhh_l0"])).reshape(1, 4 * H)
    whh0 = bf16(f32(params["whh_l0"]).T)                              # (H, 4H)
    wl1 = bf16(jnp.concatenate([f32(params["wih_l1"]).T,
                                f32(params["whh_l1"]).T], axis=0))    # (2H, 4H)
    bl1 = (f32(params["bih_l1"]) + f32(params["bhh_l1"])).reshape(1, 4 * H)
    w1 = f32(params["w1"]).T                                          # (H, M)
    b1 = f32(params["b1"]).reshape(1, M)
    w2 = f32(params["w2"]).reshape(1, M)
    b2 = f32(params["b2"]).reshape(1)                                 # SMEM scalar

    grid = (Bp // tb,)
    flops = int(2 * Bp * T * 4 * H * (inp_p + H + 2 * H) + 2 * Bp * (H * M + M))
    transcendentals = int(Bp * T * 2 * 5 * H + Bp)
    bytes_accessed = int(4 * (xt.size + wih0.size + bl0.size + bl1.size + w1.size
                              + b1.size + w2.size + 1 + Bp)
                         + 2 * (whh0.size + wl1.size))

    out = pl.pallas_call(
        _lstm_mlp_shot_kernel,
        out_shape=jax.ShapeDtypeStruct((Bp, 1), jnp.float32),
        grid_spec=pltpu.PrefetchScalarGridSpec(
            num_scalar_prefetch=0,
            grid=grid,
            in_specs=[
                pl.BlockSpec((T, tb, inp_p), lambda i: (0, i, 0)),    # x: tiled over batch
                pl.BlockSpec((inp_p, 4 * H), lambda i: (0, 0)),       # weights stay resident
                pl.BlockSpec((1, 4 * H), lambda i: (0, 0)),
                pl.BlockSpec((H, 4 * H), lambda i: (0, 0)),
                pl.BlockSpec((2 * H, 4 * H), lambda i: (0, 0)),
                pl.BlockSpec((1, 4 * H), lambda i: (0, 0)),
                pl.BlockSpec((H, M), lambda i: (0, 0)),
                pl.BlockSpec((1, M), lambda i: (0, 0)),
                pl.BlockSpec((1, M), lambda i: (0, 0)),
                pl.BlockSpec(memory_space=pltpu.MemorySpace.SMEM),    # scalar output bias
            ],
            out_specs=pl.BlockSpec((tb, 1), lambda i: (i, 0)),
            scratch_shapes=[pltpu.VMEM((T, tb, 4 * H), jnp.float32)],  # hoisted x-gates
        ),
        compiler_params=pltpu.CompilerParams(
            dimension_semantics=("parallel",),
        ),
        cost_estimate=pl.CostEstimate(
            flops=flops,
            transcendentals=transcendentals,
            bytes_accessed=bytes_accessed,
        ),
    )(xt, wih0, bl0, whh0, wl1, bl1, w1, b1, w2, b2)

    return out[:B]


def _ref_forward(x, params):
    """Pure-JAX f32 reference of LSTM_MLP_Shot.forward."""
    B = x.shape[0]
    H = params["whh_l0"].shape[1]
    sig = lambda v: 1.0 / (1.0 + jnp.exp(-v))

    def cell(x_t, h, c, wih, whh, bih, bhh):
        g = x_t @ wih.T + h @ whh.T + bih + bhh
        i, f, gg, o = jnp.split(g, 4, axis=-1)
        c = sig(f) * c + sig(i) * jnp.tanh(gg)
        h = sig(o) * jnp.tanh(c)
        return h, c

    h0 = c0 = h1 = c1 = jnp.zeros((B, H), jnp.float32)
    for t in range(x.shape[1]):
        h0, c0 = cell(x[:, t, :], h0, c0, params["wih_l0"], params["whh_l0"],
                      params["bih_l0"], params["bhh_l0"])
        h1, c1 = cell(h0, h1, c1, params["wih_l1"], params["whh_l1"],
                      params["bih_l1"], params["bhh_l1"])
    f1 = jnp.maximum(h1 @ params["w1"].T + params["b1"], 0.0)
    return sig(f1 @ params["w2"].T + params["b2"])


if __name__ == "__main__":
    # Module defaults: lstm_hidden_dim=128, lstm_hidden_layer=2, inp_dim=4, MLP hidden 32.
    B, T, INP = 2, 8, 4
    H, M = 128, 32

    key = jax.random.PRNGKey(0)
    ks = jax.random.split(key, 13)
    bound = 1.0 / (H ** 0.5)
    u = lambda k, shape: jax.random.uniform(k, shape, jnp.float32, -bound, bound)
    xavier = lambda k, shape: (jax.random.normal(k, shape, jnp.float32)
                               * (2.0 / (shape[0] + shape[1])) ** 0.5)

    params = {
        "wih_l0": u(ks[0], (4 * H, INP)),
        "whh_l0": u(ks[1], (4 * H, H)),
        "bih_l0": u(ks[2], (4 * H,)),
        "bhh_l0": u(ks[3], (4 * H,)),
        "wih_l1": u(ks[4], (4 * H, H)),
        "whh_l1": u(ks[5], (4 * H, H)),
        "bih_l1": u(ks[6], (4 * H,)),
        "bhh_l1": u(ks[7], (4 * H,)),
        "w1": xavier(ks[8], (M, H)),       # nn.Linear(128, 32), xavier_normal_
        "b1": u(ks[9], (M,)),
        "w2": xavier(ks[10], (1, M)),      # nn.Linear(32, 1), xavier_normal_
        "b2": u(ks[11], (1,)),
    }
    x = jax.random.normal(ks[12], (B, T, INP), jnp.float32)

    out = jax.block_until_ready(lstm_mlp_shot_forward(x, params))
    ref = _ref_forward(x, params)

    assert out.shape == (B, 1), out.shape
    # bf16 recurrent matmul operands (f32 accumulate / f32 carries) vs the f32 reference.
    assert jnp.allclose(out, ref, atol=5e-3, rtol=5e-3), (
        f"max abs err = {float(jnp.max(jnp.abs(out - ref)))}")
    print("KERNEL_OK")
</pallas_src>

<mosaic_0001>
module attributes {stable_mosaic.version = 11 : i64} {
  func.func @_lstm_mlp_shot_kernel(%arg0: i32, %arg1: memref<8x8x8xf32, #tpu.memory_space<vmem>>, %arg2: memref<8x512xf32, #tpu.memory_space<vmem>>, %arg3: memref<1x512xf32, #tpu.memory_space<vmem>>, %arg4: memref<128x512xbf16, #tpu.memory_space<vmem>>, %arg5: memref<256x512xbf16, #tpu.memory_space<vmem>>, %arg6: memref<1x512xf32, #tpu.memory_space<vmem>>, %arg7: memref<128x32xf32, #tpu.memory_space<vmem>>, %arg8: memref<1x32xf32, #tpu.memory_space<vmem>>, %arg9: memref<1x32xf32, #tpu.memory_space<vmem>>, %arg10: memref<1xf32, #tpu.memory_space<smem>>, %arg11: memref<8x1xf32, #tpu.memory_space<vmem>>, %arg12: memref<8x8x512xf32, #tpu.memory_space<vmem>>) attributes {dimension_semantics = [#tpu.dimension_semantics<parallel>], iteration_bounds = array<i64: 1>, scalar_prefetch = 0 : i64, scratch_operands = 1 : i64, tpu.core_type = #tpu.core_type<tc>, window_params = [{transform_indices = @transform_0, window_bounds = array<i64: 8, 8, 8>}, {pipeline_mode = #tpu.pipeline_mode<synchronous>, transform_indices = @transform_1, window_bounds = array<i64: 8, 512>}, {pipeline_mode = #tpu.pipeline_mode<synchronous>, transform_indices = @transform_2, window_bounds = array<i64: 1, 512>}, {pipeline_mode = #tpu.pipeline_mode<synchronous>, transform_indices = @transform_3, window_bounds = array<i64: 128, 512>}, {pipeline_mode = #tpu.pipeline_mode<synchronous>, transform_indices = @transform_4, window_bounds = array<i64: 256, 512>}, {pipeline_mode = #tpu.pipeline_mode<synchronous>, transform_indices = @transform_5, window_bounds = array<i64: 1, 512>}, {pipeline_mode = #tpu.pipeline_mode<synchronous>, transform_indices = @transform_6, window_bounds = array<i64: 128, 32>}, {pipeline_mode = #tpu.pipeline_mode<synchronous>, transform_indices = @transform_7, window_bounds = array<i64: 1, 32>}, {pipeline_mode = #tpu.pipeline_mode<synchronous>, transform_indices = @transform_8, window_bounds = array<i64: 1, 32>}, {transform_indices = @transform_9, window_bounds = array<i64: 1>}, {transform_indices = @transform_10, window_bounds = array<i64: 8, 1>}]} {
    %c0 = arith.constant 0 : index
    %c0_0 = arith.constant 0 : index
    %c0_1 = arith.constant 0 : index
    %0 = vector.load %arg1[%c0, %c0_0, %c0_1] : memref<8x8x8xf32, #tpu.memory_space<vmem>>, vector<8x8x8xf32>
    %1 = vector.shape_cast %0 : vector<8x8x8xf32> to vector<64x8xf32>
    %c0_2 = arith.constant 0 : index
    %c0_3 = arith.constant 0 : index
    %2 = vector.load %arg2[%c0_2, %c0_3] : memref<8x512xf32, #tpu.memory_space<vmem>>, vector<8x512xf32>
    %cst = arith.constant dense<0.000000e+00> : vector<64x512xf32>
    %3 = tpu.matmul %1, %2, %cst {dimension_numbers = #tpu.dot_dimension_numbers<[1], [0], [0], [1], [0, 0, 1, 1], [], []>} : vector<64x8xf32>, vector<8x512xf32>, vector<64x512xf32> -> vector<64x512xf32>
    %c0_4 = arith.constant 0 : index
    %c0_5 = arith.constant 0 : index
    %4 = vector.load %arg3[%c0_4, %c0_5] : memref<1x512xf32, #tpu.memory_space<vmem>>, vector<1x512xf32>
    %5 = vector.broadcast %4 : vector<1x512xf32> to vector<64x512xf32>
    %6 = arith.addf %3, %5 : vector<64x512xf32>
    %7 = vector.shape_cast %6 : vector<64x512xf32> to vector<8x8x512xf32>
    %c0_6 = arith.constant 0 : index
    %c0_7 = arith.constant 0 : index
    %c0_8 = arith.constant 0 : index
    %8 = vector.load %arg12[%c0_6, %c0_7, %c0_8] : memref<8x8x512xf32, #tpu.memory_space<vmem>>, vector<8x8x512xf32>
    tpu.vector_store %arg12[%c0_6, %c0_7, %c0_8], %7 {strides = array<i32>} : memref<8x8x512xf32, #tpu.memory_space<vmem>>, vector<8x8x512xf32>,
    %c0_9 = arith.constant 0 : index
    %c0_10 = arith.constant 0 : index
    %9 = vector.load %arg4[%c0_9, %c0_10] : memref<128x512xbf16, #tpu.memory_space<vmem>>, vector<128x512xbf16>
    %c0_11 = arith.constant 0 : index
    %c0_12 = arith.constant 0 : index
    %10 = vector.load %arg5[%c0_11, %c0_12] : memref<256x512xbf16, #tpu.memory_space<vmem>>, vector<256x512xbf16>
    %c0_13 = arith.constant 0 : index
    %c0_14 = arith.constant 0 : index
    %11 = vector.load %arg6[%c0_13, %c0_14] : memref<1x512xf32, #tpu.memory_space<vmem>>, vector<1x512xf32>
    %cst_15 = arith.constant 0.000000e+00 : f32
    %12 = vector.broadcast %cst_15 : f32 to vector<8x128xf32>
    %c0_i32 = arith.constant 0 : i32
    %13 = arith.index_cast %c0_i32 : i32 to index
    %c0_16 = arith.constant 0 : index
    %c0_17 = arith.constant 0 : index
    %14 = vector.load %arg12[%13, %c0_16, %c0_17] : memref<8x8x512xf32, #tpu.memory_space<vmem>>, vector<1x8x512xf32>
    %15 = vector.shape_cast %14 : vector<1x8x512xf32> to vector<8x512xf32>
    %16 = arith.truncf %12 : vector<8x128xf32> to vector<8x128xbf16>
    %cst_18 = arith.constant dense<0.000000e+00> : vector<8x512xf32>
    %17 = tpu.matmul %16, %9, %cst_18 {dimension_numbers = #tpu.dot_dimension_numbers<[1], [0], [0], [1], [0, 0, 1, 1], [], []>} : vector<8x128xbf16>, vector<128x512xbf16>, vector<8x512xf32> -> vector<8x512xf32>
    %18 = arith.addf %15, %17 : vector<8x512xf32>
    %19 = vector.extract_strided_slice %18 {offsets = [0, 0], sizes = [8, 128], strides = [1, 1]} : vector<8x512xf32> to vector<8x128xf32>
    %cst_19 = arith.constant 5.000000e-01 : f32
    %20 = vector.broadcast %cst_19 : f32 to vector<8x128xf32>
    %21 = arith.mulf %20, %19 : vector<8x128xf32>
    %22 = math.tanh %21 : vector<8x128xf32>
    %cst_20 = arith.constant 5.000000e-01 : f32
    %23 = vector.broadcast %cst_20 : f32 to vector<8x128xf32>
    %24 = arith.mulf %23, %22 : vector<8x128xf32>
    %cst_21 = arith.constant 5.000000e-01 : f32
    %25 = vector.broadcast %cst_21 : f32 to vector<8x128xf32>
    %26 = arith.addf %24, %25 : vector<8x128xf32>
    %27 = vector.extract_strided_slice %18 {offsets = [0, 128], sizes = [8, 128], strides = [1, 1]} : vector<8x512xf32> to vector<8x128xf32>
    %cst_22 = arith.constant 5.000000e-01 : f32
    %28 = vector.broadcast %cst_22 : f32 to vector<8x128xf32>
    %29 = arith.mulf %28, %27 : vector<8x128xf32>
    %30 = math.tanh %29 : vector<8x128xf32>
    %cst_23 = arith.constant 5.000000e-01 : f32
    %31 = vector.broadcast %cst_23 : f32 to vector<8x128xf32>
    %32 = arith.mulf %31, %30 : vector<8x128xf32>
    %cst_24 = arith.constant 5.000000e-01 : f32
    %33 = vector.broadcast %cst_24 : f32 to vector<8x128xf32>
    %34 = arith.addf %32, %33 : vector<8x128xf32>
    %35 = vector.extract_strided_slice %18 {offsets = [0, 256], sizes = [8, 128], strides = [1, 1]} : vector<8x512xf32> to vector<8x128xf32>
    %36 = math.tanh %35 : vector<8x128xf32>
    %37 = vector.extract_strided_slice %18 {offsets = [0, 384], sizes = [8, 128], strides = [1, 1]} : vector<8x512xf32> to vector<8x128xf32>
    %cst_25 = arith.constant 5.000000e-01 : f32
    %38 = vector.broadcast %cst_25 : f32 to vector<8x128xf32>
    %39 = arith.mulf %38, %37 : vector<8x128xf32>
    %40 = math.tanh %39 : vector<8x128xf32>
    %cst_26 = arith.constant 5.000000e-01 : f32
    %41 = vector.broadcast %cst_26 : f32 to vector<8x128xf32>
    %42 = arith.mulf %41, %40 : vector<8x128xf32>
    %cst_27 = arith.constant 5.000000e-01 : f32
    %43 = vector.broadcast %cst_27 : f32 to vector<8x128xf32>
    %44 = arith.addf %42, %43 : vector<8x128xf32>
    %45 = arith.mulf %34, %12 : vector<8x128xf32>
    %46 = arith.mulf %26, %36 : vector<8x128xf32>
    %47 = arith.addf %45, %46 : vector<8x128xf32>
    %48 = math.tanh %47 : vector<8x128xf32>
    %49 = arith.mulf %44, %48 : vector<8x128xf32>
    %50 = tpu.concatenate %49, %12 in 1 : vector<8x128xf32>, vector<8x128xf32> -> vector<8x256xf32>
    %51 = arith.truncf %50 : vector<8x256xf32> to vector<8x256xbf16>
    %cst_28 = arith.constant dense<0.000000e+00> : vector<8x512xf32>
    %52 = tpu.matmul %51, %10, %cst_28 {dimension_numbers = #tpu.dot_dimension_numbers<[1], [0], [0], [1], [0, 0, 1, 1], [], []>} : vector<8x256xbf16>, vector<256x512xbf16>, vector<8x512xf32> -> vector<8x512xf32>
    %53 = vector.broadcast %11 : vector<1x512xf32> to vector<8x512xf32>
    %54 = arith.addf %52, %53 : vector<8x512xf32>
    %55 = vector.extract_strided_slice %54 {offsets = [0, 0], sizes = [8, 128], strides = [1, 1]} : vector<8x512xf32> to vector<8x128xf32>
    %cst_29 = arith.constant 5.000000e-01 : f32
    %56 = vector.broadcast %cst_29 : f32 to vector<8x128xf32>
    %57 = arith.mulf %56, %55 : vector<8x128xf32>
    %58 = math.tanh %57 : vector<8x128xf32>
    %cst_30 = arith.constant 5.000000e-01 : f32
    %59 = vector.broadcast %cst_30 : f32 to vector<8x128xf32>
    %60 = arith.mulf %59, %58 : vector<8x128xf32>
    %cst_31 = arith.constant 5.000000e-01 : f32
    %61 = vector.broadcast %cst_31 : f32 to vector<8x128xf32>
    %62 = arith.addf %60, %61 : vector<8x128xf32>
    %63 = vector.extract_strided_slice %54 {offsets = [0, 128], sizes = [8, 128], strides = [1, 1]} : vector<8x512xf32> to vector<8x128xf32>
    %cst_32 = arith.constant 5.000000e-01 : f32
    %64 = vector.broadcast %cst_32 : f32 to vector<8x128xf32>
    %65 = arith.mulf %64, %63 : vector<8x128xf32>
    %66 = math.tanh %65 : vector<8x128xf32>
    %cst_33 = arith.constant 5.000000e-01 : f32
    %67 = vector.broadcast %cst_33 : f32 to vector<8x128xf32>
    %68 = arith.mulf %67, %66 : vector<8x128xf32>
    %cst_34 = arith.constant 5.000000e-01 : f32
    %69 = vector.broadcast %cst_34 : f32 to vector<8x128xf32>
    %70 = arith.addf %68, %69 : vector<8x128xf32>
    %71 = vector.extract_strided_slice %54 {offsets = [0, 256], sizes = [8, 128], strides = [1, 1]} : vector<8x512xf32> to vector<8x128xf32>
    %72 = math.tanh %71 : vector<8x128xf32>
    %73 = vector.extract_strided_slice %54 {offsets = [0, 384], sizes = [8, 128], strides = [1, 1]} : vector<8x512xf32> to vector<8x128xf32>
    %cst_35 = arith.constant 5.000000e-01 : f32
    %74 = vector.broadcast %cst_35 : f32 to vector<8x128xf32>
    %75 = arith.mulf %74, %73 : vector<8x128xf32>
    %76 = math.tanh %75 : vector<8x128xf32>
    %cst_36 = arith.constant 5.000000e-01 : f32
    %77 = vector.broadcast %cst_36 : f32 to vector<8x128xf32>
    %78 = arith.mulf %77, %76 : vector<8x128xf32>
    %cst_37 = arith.constant 5.000000e-01 : f32
    %79 = vector.broadcast %cst_37 : f32 to vector<8x128xf32>
    %80 = arith.addf %78, %79 : vector<8x128xf32>
    %81 = arith.mulf %70, %12 : vector<8x128xf32>
    %82 = arith.mulf %62, %72 : vector<8x128xf32>
    %83 = arith.addf %81, %82 : vector<8x128xf32>
    %84 = math.tanh %83 : vector<8x128xf32>
    %85 = arith.mulf %80, %84 : vector<8x128xf32>
    %c1_i32 = arith.constant 1 : i32
    %86 = arith.index_cast %c1_i32 : i32 to index
    %c0_38 = arith.constant 0 : index
    %c0_39 = arith.constant 0 : index
    %87 = vector.load %arg12[%86, %c0_38, %c0_39] : memref<8x8x512xf32, #tpu.memory_space<vmem>>, vector<1x8x512xf32>
    %88 = vector.shape_cast %87 : vector<1x8x512xf32> to vector<8x512xf32>
    %89 = arith.truncf %49 : vector<8x128xf32> to vector<8x128xbf16>
    %cst_40 = arith.constant dense<0.000000e+00> : vector<8x512xf32>
    %90 = tpu.matmul %89, %9, %cst_40 {dimension_numbers = #tpu.dot_dimension_numbers<[1], [0], [0], [1], [0, 0, 1, 1], [], []>} : vector<8x128xbf16>, vector<128x512xbf16>, vector<8x512xf32> -> vector<8x512xf32>
    %91 = arith.addf %88, %90 : vector<8x512xf32>
    %92 = vector.extract_strided_slice %91 {offsets = [0, 0], sizes = [8, 128], strides = [1, 1]} : vector<8x512xf32> to vector<8x128xf32>
    %cst_41 = arith.constant 5.000000e-01 : f32
    %93 = vector.broadcast %cst_41 : f32 to vector<8x128xf32>
    %94 = arith.mulf %93, %92 : vector<8x128xf32>
    %95 = math.tanh %94 : vector<8x128xf32>
    %cst_42 = arith.constant 5.000000e-01 : f32
    %96 = vector.broadcast %cst_42 : f32 to vector<8x128xf32>
    %97 = arith.mulf %96, %95 : vector<8x128xf32>
    %cst_43 = arith.constant 5.000000e-01 : f32
    %98 = vector.broadcast %cst_43 : f32 to vector<8x128xf32>
    %99 = arith.addf %97, %98 : vector<8x128xf32>
    %100 = vector.extract_strided_slice %91 {offsets = [0, 128], sizes = [8, 128], strides = [1, 1]} : vector<8x512xf32> to vector<8x128xf32>
    %cst_44 = arith.constant 5.000000e-01 : f32
    %101 = vector.broadcast %cst_44 : f32 to vector<8x128xf32>
    %102 = arith.mulf %101, %100 : vector<8x128xf32>
    %103 = math.tanh %102 : vector<8x128xf32>
    %cst_45 = arith.constant 5.000000e-01 : f32
    %104 = vector.broadcast %cst_45 : f32 to vector<8x128xf32>
    %105 = arith.mulf %104, %103 : vector<8x128xf32>
    %cst_46 = arith.constant 5.000000e-01 : f32
    %106 = vector.broadcast %cst_46 : f32 to vector<8x128xf32>
    %107 = arith.addf %105, %106 : vector<8x128xf32>
    %108 = vector.extract_strided_slice %91 {offsets = [0, 256], sizes = [8, 128], strides = [1, 1]} : vector<8x512xf32> to vector<8x128xf32>
    %109 = math.tanh %108 : vector<8x128xf32>
    %110 = vector.extract_strided_slice %91 {offsets = [0, 384], sizes = [8, 128], strides = [1, 1]} : vector<8x512xf32> to vector<8x128xf32>
    %cst_47 = arith.constant 5.000000e-01 : f32
    %111 = vector.broadcast %cst_47 : f32 to vector<8x128xf32>
    %112 = arith.mulf %111, %110 : vector<8x128xf32>
    %113 = math.tanh %112 : vector<8x128xf32>
    %cst_48 = arith.constant 5.000000e-01 : f32
    %114 = vector.broadcast %cst_48 : f32 to vector<8x128xf32>
    %115 = arith.mulf %114, %113 : vector<8x128xf32>
    %cst_49 = arith.constant 5.000000e-01 : f32
    %116 = vector.broadcast %cst_49 : f32 to vector<8x128xf32>
    %117 = arith.addf %115, %116 : vector<8x128xf32>
    %118 = arith.mulf %107, %47 : vector<8x128xf32>
    %119 = arith.mulf %99, %109 : vector<8x128xf32>
    %120 = arith.addf %118, %119 : vector<8x128xf32>
    %121 = math.tanh %120 : vector<8x128xf32>
    %122 = arith.mulf %117, %121 : vector<8x128xf32>
    %123 = tpu.concatenate %122, %85 in 1 : vector<8x128xf32>, vector<8x128xf32> -> vector<8x256xf32>
    %124 = arith.truncf %123 : vector<8x256xf32> to vector<8x256xbf16>
    %cst_50 = arith.constant dense<0.000000e+00> : vector<8x512xf32>
    %125 = tpu.matmul %124, %10, %cst_50 {dimension_numbers = #tpu.dot_dimension_numbers<[1], [0], [0], [1], [0, 0, 1, 1], [], []>} : vector<8x256xbf16>, vector<256x512xbf16>, vector<8x512xf32> -> vector<8x512xf32>
    %126 = vector.broadcast %11 : vector<1x512xf32> to vector<8x512xf32>
    %127 = arith.addf %125, %126 : vector<8x512xf32>
    %128 = vector.extract_strided_slice %127 {offsets = [0, 0], sizes = [8, 128], strides = [1, 1]} : vector<8x512xf32> to vector<8x128xf32>
    %cst_51 = arith.constant 5.000000e-01 : f32
    %129 = vector.broadcast %cst_51 : f32 to vector<8x128xf32>
    %130 = arith.mulf %129, %128 : vector<8x128xf32>
    %131 = math.tanh %130 : vector<8x128xf32>
    %cst_52 = arith.constant 5.000000e-01 : f32
    %132 = vector.broadcast %cst_52 : f32 to vector<8x128xf32>
    %133 = arith.mulf %132, %131 : vector<8x128xf32>
    %cst_53 = arith.constant 5.000000e-01 : f32
    %134 = vector.broadcast %cst_53 : f32 to vector<8x128xf32>
    %135 = arith.addf %133, %134 : vector<8x128xf32>
    %136 = vector.extract_strided_slice %127 {offsets = [0, 128], sizes = [8, 128], strides = [1, 1]} : vector<8x512xf32> to vector<8x128xf32>
    %cst_54 = arith.constant 5.000000e-01 : f32
    %137 = vector.broadcast %cst_54 : f32 to vector<8x128xf32>
    %138 = arith.mulf %137, %136 : vector<8x128xf32>
    %139 = math.tanh %138 : vector<8x128xf32>
    %cst_55 = arith.constant 5.000000e-01 : f32
    %140 = vector.broadcast %cst_55 : f32 to vector<8x128xf32>
    %141 = arith.mulf %140, %139 : vector<8x128xf32>
    %cst_56 = arith.constant 5.000000e-01 : f32
    %142 = vector.broadcast %cst_56 : f32 to vector<8x128xf32>
    %143 = arith.addf %141, %142 : vector<8x128xf32>
    %144 = vector.extract_strided_slice %127 {offsets = [0, 256], sizes = [8, 128], strides = [1, 1]} : vector<8x512xf32> to vector<8x128xf32>
    %145 = math.tanh %144 : vector<8x128xf32>
    %146 = vector.extract_strided_slice %127 {offsets = [0, 384], sizes = [8, 128], strides = [1, 1]} : vector<8x512xf32> to vector<8x128xf32>
    %cst_57 = arith.constant 5.000000e-01 : f32
    %147 = vector.broadcast %cst_57 : f32 to vector<8x128xf32>
    %148 = arith.mulf %147, %146 : vector<8x128xf32>
    %149 = math.tanh %148 : vector<8x128xf32>
    %cst_58 = arith.constant 5.000000e-01 : f32
    %150 = vector.broadcast %cst_58 : f32 to vector<8x128xf32>
    %151 = arith.mulf %150, %149 : vector<8x128xf32>
    %cst_59 = arith.constant 5.000000e-01 : f32
    %152 = vector.broadcast %cst_59 : f32 to vector<8x128xf32>
    %153 = arith.addf %151, %152 : vector<8x128xf32>
    %154 = arith.mulf %143, %83 : vector<8x128xf32>
    %155 = arith.mulf %135, %145 : vector<8x128xf32>
    %156 = arith.addf %154, %155 : vector<8x128xf32>
    %157 = math.tanh %156 : vector<8x128xf32>
    %158 = arith.mulf %153, %157 : vector<8x128xf32>
    %c2_i32 = arith.constant 2 : i32
    %159 = arith.index_cast %c2_i32 : i32 to index
    %c0_60 = arith.constant 0 : index
    %c0_61 = arith.constant 0 : index
    %160 = vector.load %arg12[%159, %c0_60, %c0_61] : memref<8x8x512xf32, #tpu.memory_space<vmem>>, vector<1x8x512xf32>
    %161 = vector.shape_cast %160 : vector<1x8x512xf32> to vector<8x512xf32>
    %162 = arith.truncf %122 : vector<8x128xf32> to vector<8x128xbf16>
    %cst_62 = arith.constant dense<0.000000e+00> : vector<8x512xf32>
    %163 = tpu.matmul %162, %9, %cst_62 {dimension_numbers = #tpu.dot_dimension_numbers<[1], [0], [0], [1], [0, 0, 1, 1], [], []>} : vector<8x128xbf16>, vector<128x512xbf16>, vector<8x512xf32> -> vector<8x512xf32>
    %164 = arith.addf %161, %163 : vector<8x512xf32>
    %165 = vector.extract_strided_slice %164 {offsets = [0, 0], sizes = [8, 128], strides = [1, 1]} : vector<8x512xf32> to vector<8x128xf32>
    %cst_63 = arith.constant 5.000000e-01 : f32
    %166 = vector.broadcast %cst_63 : f32 to vector<8x128xf32>
    %167 = arith.mulf %166, %165 : vector<8x128xf32>
    %168 = math.tanh %167 : vector<8x128xf32>
    %cst_64 = arith.constant 5.000000e-01 : f32
    %169 = vector.broadcast %cst_64 : f32 to vector<8x128xf32>
    %170 = arith.mulf %169, %168 : vector<8x128xf32>
    %cst_65 = arith.constant 5.000000e-01 : f32
    %171 = vector.broadcast %cst_65 : f32 to vector<8x128xf32>
    %172 = arith.addf %170, %171 : vector<8x128xf32>
    %173 = vector.extract_strided_slice %164 {offsets = [0, 128], sizes = [8, 128], strides = [1, 1]} : vector<8x512xf32> to vector<8x128xf32>
    %cst_66 = arith.constant 5.000000e-01 : f32
    %174 = vector.broadcast %cst_66 : f32 to vector<8x128xf32>
    %175 = arith.mulf %174, %173 : vector<8x128xf32>
    %176 = math.tanh %175 : vector<8x128xf32>
    %cst_67 = arith.constant 5.000000e-01 : f32
    %177 = vector.broadcast %cst_67 : f32 to vector<8x128xf32>
    %178 = arith.mulf %177, %176 : vector<8x128xf32>
    %cst_68 = arith.constant 5.000000e-01 : f32
    %179 = vector.broadcast %cst_68 : f32 to vector<8x128xf32>
    %180 = arith.addf %178, %179 : vector<8x128xf32>
    %181 = vector.extract_strided_slice %164 {offsets = [0, 256], sizes = [8, 128], strides = [1, 1]} : vector<8x512xf32> to vector<8x128xf32>
    %182 = math.tanh %181 : vector<8x128xf32>
    %183 = vector.extract_strided_slice %164 {offsets = [0, 384], sizes = [8, 128], strides = [1, 1]} : vector<8x512xf32> to vector<8x128xf32>
    %cst_69 = arith.constant 5.000000e-01 : f32
    %184 = vector.broadcast %cst_69 : f32 to vector<8x128xf32>
    %185 = arith.mulf %184, %183 : vector<8x128xf32>
    %186 = math.tanh %185 : vector<8x128xf32>
    %cst_70 = arith.constant 5.000000e-01 : f32
    %187 = vector.broadcast %cst_70 : f32 to vector<8x128xf32>
    %188 = arith.mulf %187, %186 : vector<8x128xf32>
    %cst_71 = arith.constant 5.000000e-01 : f32
    %189 = vector.broadcast %cst_71 : f32 to vector<8x128xf32>
    %190 = arith.addf %188, %189 : vector<8x128xf32>
    %191 = arith.mulf %180, %120 : vector<8x128xf32>
    %192 = arith.mulf %172, %182 : vector<8x128xf32>
    %193 = arith.addf %191, %192 : vector<8x128xf32>
    %194 = math.tanh %193 : vector<8x128xf32>
    %195 = arith.mulf %190, %194 : vector<8x128xf32>
    %196 = tpu.concatenate %195, %158 in 1 : vector<8x128xf32>, vector<8x128xf32> -> vector<8x256xf32>
    %197 = arith.truncf %196 : vector<8x256xf32> to vector<8x256xbf16>
    %cst_72 = arith.constant dense<0.000000e+00> : vector<8x512xf32>
    %198 = tpu.matmul %197, %10, %cst_72 {dimension_numbers = #tpu.dot_dimension_numbers<[1], [0], [0], [1], [0, 0, 1, 1], [], []>} : vector<8x256xbf16>, vector<256x512xbf16>, vector<8x512xf32> -> vector<8x512xf32>
    %199 = vector.broadcast %11 : vector<1x512xf32> to vector<8x512xf32>
    %200 = arith.addf %198, %199 : vector<8x512xf32>
    %201 = vector.extract_strided_slice %200 {offsets = [0, 0], sizes = [8, 128], strides = [1, 1]} : vector<8x512xf32> to vector<8x128xf32>
    %cst_73 = arith.constant 5.000000e-01 : f32
    %202 = vector.broadcast %cst_73 : f32 to vector<8x128xf32>
    %203 = arith.mulf %202, %201 : vector<8x128xf32>
    %204 = math.tanh %203 : vector<8x128xf32>
    %cst_74 = arith.constant 5.000000e-01 : f32
    %205 = vector.broadcast %cst_74 : f32 to vector<8x128xf32>
    %206 = arith.mulf %205, %204 : vector<8x128xf32>
    %cst_75 = arith.constant 5.000000e-01 : f32
    %207 = vector.broadcast %cst_75 : f32 to vector<8x128xf32>
    %208 = arith.addf %206, %207 : vector<8x128xf32>
    %209 = vector.extract_strided_slice %200 {offsets = [0, 128], sizes = [8, 128], strides = [1, 1]} : vector<8x512xf32> to vector<8x128xf32>
    %cst_76 = arith.constant 5.000000e-01 : f32
    %210 = vector.broadcast %cst_76 : f32 to vector<8x128xf32>
    %211 = arith.mulf %210, %209 : vector<8x128xf32>
    %212 = math.tanh %211 : vector<8x128xf32>
    %cst_77 = arith.constant 5.000000e-01 : f32
    %213 = vector.broadcast %cst_77 : f32 to vector<8x128xf32>
    %214 = arith.mulf %213, %212 : vector<8x128xf32>
    %cst_78 = arith.constant 5.000000e-01 : f32
    %215 = vector.broadcast %cst_78 : f32 to vector<8x128xf32>
    %216 = arith.addf %214, %215 : vector<8x128xf32>
    %217 = vector.extract_strided_slice %200 {offsets = [0, 256], sizes = [8, 128], strides = [1, 1]} : vector<8x512xf32> to vector<8x128xf32>
    %218 = math.tanh %217 : vector<8x128xf32>
    %219 = vector.extract_strided_slice %200 {offsets = [0, 384], sizes = [8, 128], strides = [1, 1]} : vector<8x512xf32> to vector<8x128xf32>
    %cst_79 = arith.constant 5.000000e-01 : f32
    %220 = vector.broadcast %cst_79 : f32 to vector<8x128xf32>
    %221 = arith.mulf %220, %219 : vector<8x128xf32>
    %222 = math.tanh %221 : vector<8x128xf32>
    %cst_80 = arith.constant 5.000000e-01 : f32
    %223 = vector.broadcast %cst_80 : f32 to vector<8x128xf32>
    %224 = arith.mulf %223, %222 : vector<8x128xf32>
    %cst_81 = arith.constant 5.000000e-01 : f32
    %225 = vector.broadcast %cst_81 : f32 to vector<8x128xf32>
    %226 = arith.addf %224, %225 : vector<8x128xf32>
    %227 = arith.mulf %216, %156 : vector<8x128xf32>
    %228 = arith.mulf %208, %218 : vector<8x128xf32>
    %229 = arith.addf %227, %228 : vector<8x128xf32>
    %230 = math.tanh %229 : vector<8x128xf32>
    %231 = arith.mulf %226, %230 : vector<8x128xf32>
    %c3_i32 = arith.constant 3 : i32
    %232 = arith.index_cast %c3_i32 : i32 to index
    %c0_82 = arith.constant 0 : index
    %c0_83 = arith.constant 0 : index
    %233 = vector.load %arg12[%232, %c0_82, %c0_83] : memref<8x8x512xf32, #tpu.memory_space<vmem>>, vector<1x8x512xf32>
    %234 = vector.shape_cast %233 : vector<1x8x512xf32> to vector<8x512xf32>
    %235 = arith.truncf %195 : vector<8x128xf32> to vector<8x128xbf16>
    %cst_84 = arith.constant dense<0.000000e+00> : vector<8x512xf32>
    %236 = tpu.matmul %235, %9, %cst_84 {dimension_numbers = #tpu.dot_dimension_numbers<[1], [0], [0], [1], [0, 0, 1, 1], [], []>} : vector<8x128xbf16>, vector<128x512xbf16>, vector<8x512xf32> -> vector<8x512xf32>
    %237 = arith.addf %234, %236 : vector<8x512xf32>
    %238 = vector.extract_strided_slice %237 {offsets = [0, 0], sizes = [8, 128], strides = [1, 1]} : vector<8x512xf32> to vector<8x128xf32>
    %cst_85 = arith.constant 5.000000e-01 : f32
    %239 = vector.broadcast %cst_85 : f32 to vector<8x128xf32>
    %240 = arith.mulf %239, %238 : vector<8x128xf32>
    %241 = math.tanh %240 : vector<8x128xf32>
    %cst_86 = arith.constant 5.000000e-01 : f32
    %242 = vector.broadcast %cst_86 : f32 to vector<8x128xf32>
    %243 = arith.mulf %242, %241 : vector<8x128xf32>
    %cst_87 = arith.constant 5.000000e-01 : f32
    %244 = vector.broadcast %cst_87 : f32 to vector<8x128xf32>
    %245 = arith.addf %243, %244 : vector<8x128xf32>
    %246 = vector.extract_strided_slice %237 {offsets = [0, 128], sizes = [8, 128], strides = [1, 1]} : vector<8x512xf32> to vector<8x128xf32>
    %cst_88 = arith.constant 5.000000e-01 : f32
    %247 = vector.broadcast %cst_88 : f32 to vector<8x128xf32>
    %248 = arith.mulf %247, %246 : vector<8x128xf32>
    %249 = math.tanh %248 : vector<8x128xf32>
    %cst_89 = arith.constant 5.000000e-01 : f32
    %250 = vector.broadcast %cst_89 : f32 to vector<8x128xf32>
    %251 = arith.mulf %250, %249 : vector<8x128xf32>
    %cst_90 = arith.constant 5.000000e-01 : f32
    %252 = vector.broadcast %cst_90 : f32 to vector<8x128xf32>
    %253 = arith.addf %251, %252 : vector<8x128xf32>
    %254 = vector.extract_strided_slice %237 {offsets = [0, 256], sizes = [8, 128], strides = [1, 1]} : vector<8x512xf32> to vector<8x128xf32>
    %255 = math.tanh %254 : vector<8x128xf32>
    %256 = vector.extract_strided_slice %237 {offsets = [0, 384], sizes = [8, 128], strides = [1, 1]} : vector<8x512xf32> to vector<8x128xf32>
    %cst_91 = arith.constant 5.000000e-01 : f32
    %257 = vector.broadcast %cst_91 : f32 to vector<8x128xf32>
    %258 = arith.mulf %257, %256 : vector<8x128xf32>
    %259 = math.tanh %258 : vector<8x128xf32>
    %cst_92 = arith.constant 5.000000e-01 : f32
    %260 = vector.broadcast %cst_92 : f32 to vector<8x128xf32>
    %261 = arith.mulf %260, %259 : vector<8x128xf32>
    %cst_93 = arith.constant 5.000000e-01 : f32
    %262 = vector.broadcast %cst_93 : f32 to vector<8x128xf32>
    %263 = arith.addf %261, %262 : vector<8x128xf32>
    %264 = arith.mulf %253, %193 : vector<8x128xf32>
    %265 = arith.mulf %245, %255 : vector<8x128xf32>
    %266 = arith.addf %264, %265 : vector<8x128xf32>
    %267 = math.tanh %266 : vector<8x128xf32>
    %268 = arith.mulf %263, %267 : vector<8x128xf32>
    %269 = tpu.concatenate %268, %231 in 1 : vector<8x128xf32>, vector<8x128xf32> -> vector<8x256xf32>
    %270 = arith.truncf %269 : vector<8x256xf32> to vector<8x256xbf16>
    %cst_94 = arith.constant dense<0.000000e+00> : vector<8x512xf32>
    %271 = tpu.matmul %270, %10, %cst_94 {dimension_numbers = #tpu.dot_dimension_numbers<[1], [0], [0], [1], [0, 0, 1, 1], [], []>} : vector<8x256xbf16>, vector<256x512xbf16>, vector<8x512xf32> -> vector<8x512xf32>
    %272 = vector.broadcast %11 : vector<1x512xf32> to vector<8x512xf32>
    %273 = arith.addf %271, %272 : vector<8x512xf32>
    %274 = vector.extract_strided_slice %273 {offsets = [0, 0], sizes = [8, 128], strides = [1, 1]} : vector<8x512xf32> to vector<8x128xf32>
    %cst_95 = arith.constant 5.000000e-01 : f32
    %275 = vector.broadcast %cst_95 : f32 to vector<8x128xf32>
    %276 = arith.mulf %275, %274 : vector<8x128xf32>
    %277 = math.tanh %276 : vector<8x128xf32>
    %cst_96 = arith.constant 5.000000e-01 : f32
    %278 = vector.broadcast %cst_96 : f32 to vector<8x128xf32>
    %279 = arith.mulf %278, %277 : vector<8x128xf32>
    %cst_97 = arith.constant 5.000000e-01 : f32
    %280 = vector.broadcast %cst_97 : f32 to vector<8x128xf32>
    %281 = arith.addf %279, %280 : vector<8x128xf32>
    %282 = vector.extract_strided_slice %273 {offsets = [0, 128], sizes = [8, 128], strides = [1, 1]} : vector<8x512xf32> to vector<8x128xf32>
    %cst_98 = arith.constant 5.000000e-01 : f32
    %283 = vector.broadcast %cst_98 : f32 to vector<8x128xf32>
    %284 = arith.mulf %283, %282 : vector<8x128xf32>
    %285 = math.tanh %284 : vector<8x128xf32>
    %cst_99 = arith.constant 5.000000e-01 : f32
    %286 = vector.broadcast %cst_99 : f32 to vector<8x128xf32>
    %287 = arith.mulf %286, %285 : vector<8x128xf32>
    %cst_100 = arith.constant 5.000000e-01 : f32
    %288 = vector.broadcast %cst_100 : f32 to vector<8x128xf32>
    %289 = arith.addf %287, %288 : vector<8x128xf32>
    %290 = vector.extract_strided_slice %273 {offsets = [0, 256], sizes = [8, 128], strides = [1, 1]} : vector<8x512xf32> to vector<8x128xf32>
    %291 = math.tanh %290 : vector<8x128xf32>
    %292 = vector.extract_strided_slice %273 {offsets = [0, 384], sizes = [8, 128], strides = [1, 1]} : vector<8x512xf32> to vector<8x128xf32>
    %cst_101 = arith.constant 5.000000e-01 : f32
    %293 = vector.broadcast %cst_101 : f32 to vector<8x128xf32>
    %294 = arith.mulf %293, %292 : vector<8x128xf32>
    %295 = math.tanh %294 : vector<8x128xf32>
    %cst_102 = arith.constant 5.000000e-01 : f32
    %296 = vector.broadcast %cst_102 : f32 to vector<8x128xf32>
    %297 = arith.mulf %296, %295 : vector<8x128xf32>
    %cst_103 = arith.constant 5.000000e-01 : f32
    %298 = vector.broadcast %cst_103 : f32 to vector<8x128xf32>
    %299 = arith.addf %297, %298 : vector<8x128xf32>
    %300 = arith.mulf %289, %229 : vector<8x128xf32>
    %301 = arith.mulf %281, %291 : vector<8x128xf32>
    %302 = arith.addf %300, %301 : vector<8x128xf32>
    %303 = math.tanh %302 : vector<8x128xf32>
    %304 = arith.mulf %299, %303 : vector<8x128xf32>
    %c4_i32 = arith.constant 4 : i32
    %305 = arith.index_cast %c4_i32 : i32 to index
    %c0_104 = arith.constant 0 : index
    %c0_105 = arith.constant 0 : index
    %306 = vector.load %arg12[%305, %c0_104, %c0_105] : memref<8x8x512xf32, #tpu.memory_space<vmem>>, vector<1x8x512xf32>
    %307 = vector.shape_cast %306 : vector<1x8x512xf32> to vector<8x512xf32>
    %308 = arith.truncf %268 : vector<8x128xf32> to vector<8x128xbf16>
    %cst_106 = arith.constant dense<0.000000e+00> : vector<8x512xf32>
    %309 = tpu.matmul %308, %9, %cst_106 {dimension_numbers = #tpu.dot_dimension_numbers<[1], [0], [0], [1], [0, 0, 1, 1], [], []>} : vector<8x128xbf16>, vector<128x512xbf16>, vector<8x512xf32> -> vector<8x512xf32>
    %310 = arith.addf %307, %309 : vector<8x512xf32>
    %311 = vector.extract_strided_slice %310 {offsets = [0, 0], sizes = [8, 128], strides = [1, 1]} : vector<8x512xf32> to vector<8x128xf32>
    %cst_107 = arith.constant 5.000000e-01 : f32
    %312 = vector.broadcast %cst_107 : f32 to vector<8x128xf32>
    %313 = arith.mulf %312, %311 : vector<8x128xf32>
    %314 = math.tanh %313 : vector<8x128xf32>
    %cst_108 = arith.constant 5.000000e-01 : f32
    %315 = vector.broadcast %cst_108 : f32 to vector<8x128xf32>
    %316 = arith.mulf %315, %314 : vector<8x128xf32>
    %cst_109 = arith.constant 5.000000e-01 : f32
    %317 = vector.broadcast %cst_109 : f32 to vector<8x128xf32>
    %318 = arith.addf %316, %317 : vector<8x128xf32>
    %319 = vector.extract_strided_slice %310 {offsets = [0, 128], sizes = [8, 128], strides = [1, 1]} : vector<8x512xf32> to vector<8x128xf32>
    %cst_110 = arith.constant 5.000000e-01 : f32
    %320 = vector.broadcast %cst_110 : f32 to vector<8x128xf32>
    %321 = arith.mulf %320, %319 : vector<8x128xf32>
    %322 = math.tanh %321 : vector<8x128xf32>
    %cst_111 = arith.constant 5.000000e-01 : f32
    %323 = vector.broadcast %cst_111 : f32 to vector<8x128xf32>
    %324 = arith.mulf %323, %322 : vector<8x128xf32>
    %cst_112 = arith.constant 5.000000e-01 : f32
    %325 = vector.broadcast %cst_112 : f32 to vector<8x128xf32>
    %326 = arith.addf %324, %325 : vector<8x128xf32>
    %327 = vector.extract_strided_slice %310 {offsets = [0, 256], sizes = [8, 128], strides = [1, 1]} : vector<8x512xf32> to vector<8x128xf32>
    %328 = math.tanh %327 : vector<8x128xf32>
    %329 = vector.extract_strided_slice %310 {offsets = [0, 384], sizes = [8, 128], strides = [1, 1]} : vector<8x512xf32> to vector<8x128xf32>
    %cst_113 = arith.constant 5.000000e-01 : f32
    %330 = vector.broadcast %cst_113 : f32 to vector<8x128xf32>
    %331 = arith.mulf %330, %329 : vector<8x128xf32>
    %332 = math.tanh %331 : vector<8x128xf32>
    %cst_114 = arith.constant 5.000000e-01 : f32
    %333 = vector.broadcast %cst_114 : f32 to vector<8x128xf32>
    %334 = arith.mulf %333, %332 : vector<8x128xf32>
    %cst_115 = arith.constant 5.000000e-01 : f32
    %335 = vector.broadcast %cst_115 : f32 to vector<8x128xf32>
    %336 = arith.addf %334, %335 : vector<8x128xf32>
    %337 = arith.mulf %326, %266 : vector<8x128xf32>
    %338 = arith.mulf %318, %328 : vector<8x128xf32>
    %339 = arith.addf %337, %338 : vector<8x128xf32>
    %340 = math.tanh %339 : vector<8x128xf32>
    %341 = arith.mulf %336, %340 : vector<8x128xf32>
    %342 = tpu.concatenate %341, %304 in 1 : vector<8x128xf32>, vector<8x128xf32> -> vector<8x256xf32>
    %343 = arith.truncf %342 : vector<8x256xf32> to vector<8x256xbf16>
    %cst_116 = arith.constant dense<0.000000e+00> : vector<8x512xf32>
    %344 = tpu.matmul %343, %10, %cst_116 {dimension_numbers = #tpu.dot_dimension_numbers<[1], [0], [0], [1], [0, 0, 1, 1], [], []>} : vector<8x256xbf16>, vector<256x512xbf16>, vector<8x512xf32> -> vector<8x512xf32>
    %345 = vector.broadcast %11 : vector<1x512xf32> to vector<8x512xf32>
    %346 = arith.addf %344, %345 : vector<8x512xf32>
    %347 = vector.extract_strided_slice %346 {offsets = [0, 0], sizes = [8, 128], strides = [1, 1]} : vector<8x512xf32> to vector<8x128xf32>
    %cst_117 = arith.constant 5.000000e-01 : f32
    %348 = vector.broadcast %cst_117 : f32 to vector<8x128xf32>
    %349 = arith.mulf %348, %347 : vector<8x128xf32>
    %350 = math.tanh %349 : vector<8x128xf32>
    %cst_118 = arith.constant 5.000000e-01 : f32
    %351 = vector.broadcast %cst_118 : f32 to vector<8x128xf32>
    %352 = arith.mulf %351, %350 : vector<8x128xf32>
    %cst_119 = arith.constant 5.000000e-01 : f32
    %353 = vector.broadcast %cst_119 : f32 to vector<8x128xf32>
    %354 = arith.addf %352, %353 : vector<8x128xf32>
    %355 = vector.extract_strided_slice %346 {offsets = [0, 128], sizes = [8, 128], strides = [1, 1]} : vector<8x512xf32> to vector<8x128xf32>
    %cst_120 = arith.constant 5.000000e-01 : f32
    %356 = vector.broadcast %cst_120 : f32 to vector<8x128xf32>
    %357 = arith.mulf %356, %355 : vector<8x128xf32>
    %358 = math.tanh %357 : vector<8x128xf32>
    %cst_121 = arith.constant 5.000000e-01 : f32
    %359 = vector.broadcast %cst_121 : f32 to vector<8x128xf32>
    %360 = arith.mulf %359, %358 : vector<8x128xf32>
    %cst_122 = arith.constant 5.000000e-01 : f32
    %361 = vector.broadcast %cst_122 : f32 to vector<8x128xf32>
    %362 = arith.addf %360, %361 : vector<8x128xf32>
    %363 = vector.extract_strided_slice %346 {offsets = [0, 256], sizes = [8, 128], strides = [1, 1]} : vector<8x512xf32> to vector<8x128xf32>
    %364 = math.tanh %363 : vector<8x128xf32>
    %365 = vector.extract_strided_slice %346 {offsets = [0, 384], sizes = [8, 128], strides = [1, 1]} : vector<8x512xf32> to vector<8x128xf32>
    %cst_123 = arith.constant 5.000000e-01 : f32
    %366 = vector.broadcast %cst_123 : f32 to vector<8x128xf32>
    %367 = arith.mulf %366, %365 : vector<8x128xf32>
    %368 = math.tanh %367 : vector<8x128xf32>
    %cst_124 = arith.constant 5.000000e-01 : f32
    %369 = vector.broadcast %cst_124 : f32 to vector<8x128xf32>
    %370 = arith.mulf %369, %368 : vector<8x128xf32>
    %cst_125 = arith.constant 5.000000e-01 : f32
    %371 = vector.broadcast %cst_125 : f32 to vector<8x128xf32>
    %372 = arith.addf %370, %371 : vector<8x128xf32>
    %373 = arith.mulf %362, %302 : vector<8x128xf32>
    %374 = arith.mulf %354, %364 : vector<8x128xf32>
    %375 = arith.addf %373, %374 : vector<8x128xf32>
    %376 = math.tanh %375 : vector<8x128xf32>
    %377 = arith.mulf %372, %376 : vector<8x128xf32>
    %c5_i32 = arith.constant 5 : i32
    %378 = arith.index_cast %c5_i32 : i32 to index
    %c0_126 = arith.constant 0 : index
    %c0_127 = arith.constant 0 : index
    %379 = vector.load %arg12[%378, %c0_126, %c0_127] : memref<8x8x512xf32, #tpu.memory_space<vmem>>, vector<1x8x512xf32>
    %380 = vector.shape_cast %379 : vector<1x8x512xf32> to vector<8x512xf32>
    %381 = arith.truncf %341 : vector<8x128xf32> to vector<8x128xbf16>
    %cst_128 = arith.constant dense<0.000000e+00> : vector<8x512xf32>
    %382 = tpu.matmul %381, %9, %cst_128 {dimension_numbers = #tpu.dot_dimension_numbers<[1], [0], [0], [1], [0, 0, 1, 1], [], []>} : vector<8x128xbf16>, vector<128x512xbf16>, vector<8x512xf32> -> vector<8x512xf32>
    %383 = arith.addf %380, %382 : vector<8x512xf32>
    %384 = vector.extract_strided_slice %383 {offsets = [0, 0], sizes = [8, 128], strides = [1, 1]} : vector<8x512xf32> to vector<8x128xf32>
    %cst_129 = arith.constant 5.000000e-01 : f32
    %385 = vector.broadcast %cst_129 : f32 to vector<8x128xf32>
    %386 = arith.mulf %385, %384 : vector<8x128xf32>
    %387 = math.tanh %386 : vector<8x128xf32>
    %cst_130 = arith.constant 5.000000e-01 : f32
    %388 = vector.broadcast %cst_130 : f32 to vector<8x128xf32>
    %389 = arith.mulf %388, %387 : vector<8x128xf32>
    %cst_131 = arith.constant 5.000000e-01 : f32
    %390 = vector.broadcast %cst_131 : f32 to vector<8x128xf32>
    %391 = arith.addf %389, %390 : vector<8x128xf32>
    %392 = vector.extract_strided_slice %383 {offsets = [0, 128], sizes = [8, 128], strides = [1, 1]} : vector<8x512xf32> to vector<8x128xf32>
    %cst_132 = arith.constant 5.000000e-01 : f32
    %393 = vector.broadcast %cst_132 : f32 to vector<8x128xf32>
    %394 = arith.mulf %393, %392 : vector<8x128xf32>
    %395 = math.tanh %394 : vector<8x128xf32>
    %cst_133 = arith.constant 5.000000e-01 : f32
    %396 = vector.broadcast %cst_133 : f32 to vector<8x128xf32>
    %397 = arith.mulf %396, %395 : vector<8x128xf32>
    %cst_134 = arith.constant 5.000000e-01 : f32
    %398 = vector.broadcast %cst_134 : f32 to vector<8x128xf32>
    %399 = arith.addf %397, %398 : vector<8x128xf32>
    %400 = vector.extract_strided_slice %383 {offsets = [0, 256], sizes = [8, 128], strides = [1, 1]} : vector<8x512xf32> to vector<8x128xf32>
    %401 = math.tanh %400 : vector<8x128xf32>
    %402 = vector.extract_strided_slice %383 {offsets = [0, 384], sizes = [8, 128], strides = [1, 1]} : vector<8x512xf32> to vector<8x128xf32>
    %cst_135 = arith.constant 5.000000e-01 : f32
    %403 = vector.broadcast %cst_135 : f32 to vector<8x128xf32>
    %404 = arith.mulf %403, %402 : vector<8x128xf32>
    %405 = math.tanh %404 : vector<8x128xf32>
    %cst_136 = arith.constant 5.000000e-01 : f32
    %406 = vector.broadcast %cst_136 : f32 to vector<8x128xf32>
    %407 = arith.mulf %406, %405 : vector<8x128xf32>
    %cst_137 = arith.constant 5.000000e-01 : f32
    %408 = vector.broadcast %cst_137 : f32 to vector<8x128xf32>
    %409 = arith.addf %407, %408 : vector<8x128xf32>
    %410 = arith.mulf %399, %339 : vector<8x128xf32>
    %411 = arith.mulf %391, %401 : vector<8x128xf32>
    %412 = arith.addf %410, %411 : vector<8x128xf32>
    %413 = math.tanh %412 : vector<8x128xf32>
    %414 = arith.mulf %409, %413 : vector<8x128xf32>
    %415 = tpu.concatenate %414, %377 in 1 : vector<8x128xf32>, vector<8x128xf32> -> vector<8x256xf32>
    %416 = arith.truncf %415 : vector<8x256xf32> to vector<8x256xbf16>
    %cst_138 = arith.constant dense<0.000000e+00> : vector<8x512xf32>
    %417 = tpu.matmul %416, %10, %cst_138 {dimension_numbers = #tpu.dot_dimension_numbers<[1], [0], [0], [1], [0, 0, 1, 1], [], []>} : vector<8x256xbf16>, vector<256x512xbf16>, vector<8x512xf32> -> vector<8x512xf32>
    %418 = vector.broadcast %11 : vector<1x512xf32> to vector<8x512xf32>
    %419 = arith.addf %417, %418 : vector<8x512xf32>
    %420 = vector.extract_strided_slice %419 {offsets = [0, 0], sizes = [8, 128], strides = [1, 1]} : vector<8x512xf32> to vector<8x128xf32>
    %cst_139 = arith.constant 5.000000e-01 : f32
    %421 = vector.broadcast %cst_139 : f32 to vector<8x128xf32>
    %422 = arith.mulf %421, %420 : vector<8x128xf32>
    %423 = math.tanh %422 : vector<8x128xf32>
    %cst_140 = arith.constant 5.000000e-01 : f32
    %424 = vector.broadcast %cst_140 : f32 to vector<8x128xf32>
    %425 = arith.mulf %424, %423 : vector<8x128xf32>
    %cst_141 = arith.constant 5.000000e-01 : f32
    %426 = vector.broadcast %cst_141 : f32 to vector<8x128xf32>
    %427 = arith.addf %425, %426 : vector<8x128xf32>
    %428 = vector.extract_strided_slice %419 {offsets = [0, 128], sizes = [8, 128], strides = [1, 1]} : vector<8x512xf32> to vector<8x128xf32>
    %cst_142 = arith.constant 5.000000e-01 : f32
    %429 = vector.broadcast %cst_142 : f32 to vector<8x128xf32>
    %430 = arith.mulf %429, %428 : vector<8x128xf32>
    %431 = math.tanh %430 : vector<8x128xf32>
    %cst_143 = arith.constant 5.000000e-01 : f32
    %432 = vector.broadcast %cst_143 : f32 to vector<8x128xf32>
    %433 = arith.mulf %432, %431 : vector<8x128xf32>
    %cst_144 = arith.constant 5.000000e-01 : f32
    %434 = vector.broadcast %cst_144 : f32 to vector<8x128xf32>
    %435 = arith.addf %433, %434 : vector<8x128xf32>
    %436 = vector.extract_strided_slice %419 {offsets = [0, 256], sizes = [8, 128], strides = [1, 1]} : vector<8x512xf32> to vector<8x128xf32>
    %437 = math.tanh %436 : vector<8x128xf32>
    %438 = vector.extract_strided_slice %419 {offsets = [0, 384], sizes = [8, 128], strides = [1, 1]} : vector<8x512xf32> to vector<8x128xf32>
    %cst_145 = arith.constant 5.000000e-01 : f32
    %439 = vector.broadcast %cst_145 : f32 to vector<8x128xf32>
    %440 = arith.mulf %439, %438 : vector<8x128xf32>
    %441 = math.tanh %440 : vector<8x128xf32>
    %cst_146 = arith.constant 5.000000e-01 : f32
    %442 = vector.broadcast %cst_146 : f32 to vector<8x128xf32>
    %443 = arith.mulf %442, %441 : vector<8x128xf32>
    %cst_147 = arith.constant 5.000000e-01 : f32
    %444 = vector.broadcast %cst_147 : f32 to vector<8x128xf32>
    %445 = arith.addf %443, %444 : vector<8x128xf32>
    %446 = arith.mulf %435, %375 : vector<8x128xf32>
    %447 = arith.mulf %427, %437 : vector<8x128xf32>
    %448 = arith.addf %446, %447 : vector<8x128xf32>
    %449 = math.tanh %448 : vector<8x128xf32>
    %450 = arith.mulf %445, %449 : vector<8x128xf32>
    %c6_i32 = arith.constant 6 : i32
    %451 = arith.index_cast %c6_i32 : i32 to index
    %c0_148 = arith.constant 0 : index
    %c0_149 = arith.constant 0 : index
    %452 = vector.load %arg12[%451, %c0_148, %c0_149] : memref<8x8x512xf32, #tpu.memory_space<vmem>>, vector<1x8x512xf32>
    %453 = vector.shape_cast %452 : vector<1x8x512xf32> to vector<8x512xf32>
    %454 = arith.truncf %414 : vector<8x128xf32> to vector<8x128xbf16>
    %cst_150 = arith.constant dense<0.000000e+00> : vector<8x512xf32>
    %455 = tpu.matmul %454, %9, %cst_150 {dimension_numbers = #tpu.dot_dimension_numbers<[1], [0], [0], [1], [0, 0, 1, 1], [], []>} : vector<8x128xbf16>, vector<128x512xbf16>, vector<8x512xf32> -> vector<8x512xf32>
    %456 = arith.addf %453, %455 : vector<8x512xf32>
    %457 = vector.extract_strided_slice %456 {offsets = [0, 0], sizes = [8, 128], strides = [1, 1]} : vector<8x512xf32> to vector<8x128xf32>
    %cst_151 = arith.constant 5.000000e-01 : f32
    %458 = vector.broadcast %cst_151 : f32 to vector<8x128xf32>
    %459 = arith.mulf %458, %457 : vector<8x128xf32>
    %460 = math.tanh %459 : vector<8x128xf32>
    %cst_152 = arith.constant 5.000000e-01 : f32
    %461 = vector.broadcast %cst_152 : f32 to vector<8x128xf32>
    %462 = arith.mulf %461, %460 : vector<8x128xf32>
    %cst_153 = arith.constant 5.000000e-01 : f32
    %463 = vector.broadcast %cst_153 : f32 to vector<8x128xf32>
    %464 = arith.addf %462, %463 : vector<8x128xf32>
    %465 = vector.extract_strided_slice %456 {offsets = [0, 128], sizes = [8, 128], strides = [1, 1]} : vector<8x512xf32> to vector<8x128xf32>
    %cst_154 = arith.constant 5.000000e-01 : f32
    %466 = vector.broadcast %cst_154 : f32 to vector<8x128xf32>
    %467 = arith.mulf %466, %465 : vector<8x128xf32>
    %468 = math.tanh %467 : vector<8x128xf32>
    %cst_155 = arith.constant 5.000000e-01 : f32
    %469 = vector.broadcast %cst_155 : f32 to vector<8x128xf32>
    %470 = arith.mulf %469, %468 : vector<8x128xf32>
    %cst_156 = arith.constant 5.000000e-01 : f32
    %471 = vector.broadcast %cst_156 : f32 to vector<8x128xf32>
    %472 = arith.addf %470, %471 : vector<8x128xf32>
    %473 = vector.extract_strided_slice %456 {offsets = [0, 256], sizes = [8, 128], strides = [1, 1]} : vector<8x512xf32> to vector<8x128xf32>
    %474 = math.tanh %473 : vector<8x128xf32>
    %475 = vector.extract_strided_slice %456 {offsets = [0, 384], sizes = [8, 128], strides = [1, 1]} : vector<8x512xf32> to vector<8x128xf32>
    %cst_157 = arith.constant 5.000000e-01 : f32
    %476 = vector.broadcast %cst_157 : f32 to vector<8x128xf32>
    %477 = arith.mulf %476, %475 : vector<8x128xf32>
    %478 = math.tanh %477 : vector<8x128xf32>
    %cst_158 = arith.constant 5.000000e-01 : f32
    %479 = vector.broadcast %cst_158 : f32 to vector<8x128xf32>
    %480 = arith.mulf %479, %478 : vector<8x128xf32>
    %cst_159 = arith.constant 5.000000e-01 : f32
    %481 = vector.broadcast %cst_159 : f32 to vector<8x128xf32>
    %482 = arith.addf %480, %481 : vector<8x128xf32>
    %483 = arith.mulf %472, %412 : vector<8x128xf32>
    %484 = arith.mulf %464, %474 : vector<8x128xf32>
    %485 = arith.addf %483, %484 : vector<8x128xf32>
    %486 = math.tanh %485 : vector<8x128xf32>
    %487 = arith.mulf %482, %486 : vector<8x128xf32>
    %488 = tpu.concatenate %487, %450 in 1 : vector<8x128xf32>, vector<8x128xf32> -> vector<8x256xf32>
    %489 = arith.truncf %488 : vector<8x256xf32> to vector<8x256xbf16>
    %cst_160 = arith.constant dense<0.000000e+00> : vector<8x512xf32>
    %490 = tpu.matmul %489, %10, %cst_160 {dimension_numbers = #tpu.dot_dimension_numbers<[1], [0], [0], [1], [0, 0, 1, 1], [], []>} : vector<8x256xbf16>, vector<256x512xbf16>, vector<8x512xf32> -> vector<8x512xf32>
    %491 = vector.broadcast %11 : vector<1x512xf32> to vector<8x512xf32>
    %492 = arith.addf %490, %491 : vector<8x512xf32>
    %493 = vector.extract_strided_slice %492 {offsets = [0, 0], sizes = [8, 128], strides = [1, 1]} : vector<8x512xf32> to vector<8x128xf32>
    %cst_161 = arith.constant 5.000000e-01 : f32
    %494 = vector.broadcast %cst_161 : f32 to vector<8x128xf32>
    %495 = arith.mulf %494, %493 : vector<8x128xf32>
    %496 = math.tanh %495 : vector<8x128xf32>
    %cst_162 = arith.constant 5.000000e-01 : f32
    %497 = vector.broadcast %cst_162 : f32 to vector<8x128xf32>
    %498 = arith.mulf %497, %496 : vector<8x128xf32>
    %cst_163 = arith.constant 5.000000e-01 : f32
    %499 = vector.broadcast %cst_163 : f32 to vector<8x128xf32>
    %500 = arith.addf %498, %499 : vector<8x128xf32>
    %501 = vector.extract_strided_slice %492 {offsets = [0, 128], sizes = [8, 128], strides = [1, 1]} : vector<8x512xf32> to vector<8x128xf32>
    %cst_164 = arith.constant 5.000000e-01 : f32
    %502 = vector.broadcast %cst_164 : f32 to vector<8x128xf32>
    %503 = arith.mulf %502, %501 : vector<8x128xf32>
    %504 = math.tanh %503 : vector<8x128xf32>
    %cst_165 = arith.constant 5.000000e-01 : f32
    %505 = vector.broadcast %cst_165 : f32 to vector<8x128xf32>
    %506 = arith.mulf %505, %504 : vector<8x128xf32>
    %cst_166 = arith.constant 5.000000e-01 : f32
    %507 = vector.broadcast %cst_166 : f32 to vector<8x128xf32>
    %508 = arith.addf %506, %507 : vector<8x128xf32>
    %509 = vector.extract_strided_slice %492 {offsets = [0, 256], sizes = [8, 128], strides = [1, 1]} : vector<8x512xf32> to vector<8x128xf32>
    %510 = math.tanh %509 : vector<8x128xf32>
    %511 = vector.extract_strided_slice %492 {offsets = [0, 384], sizes = [8, 128], strides = [1, 1]} : vector<8x512xf32> to vector<8x128xf32>
    %cst_167 = arith.constant 5.000000e-01 : f32
    %512 = vector.broadcast %cst_167 : f32 to vector<8x128xf32>
    %513 = arith.mulf %512, %511 : vector<8x128xf32>
    %514 = math.tanh %513 : vector<8x128xf32>
    %cst_168 = arith.constant 5.000000e-01 : f32
    %515 = vector.broadcast %cst_168 : f32 to vector<8x128xf32>
    %516 = arith.mulf %515, %514 : vector<8x128xf32>
    %cst_169 = arith.constant 5.000000e-01 : f32
    %517 = vector.broadcast %cst_169 : f32 to vector<8x128xf32>
    %518 = arith.addf %516, %517 : vector<8x128xf32>
    %519 = arith.mulf %508, %448 : vector<8x128xf32>
    %520 = arith.mulf %500, %510 : vector<8x128xf32>
    %521 = arith.addf %519, %520 : vector<8x128xf32>
    %522 = math.tanh %521 : vector<8x128xf32>
    %523 = arith.mulf %518, %522 : vector<8x128xf32>
    %c7_i32 = arith.constant 7 : i32
    %524 = arith.index_cast %c7_i32 : i32 to index
    %c0_170 = arith.constant 0 : index
    %c0_171 = arith.constant 0 : index
    %525 = vector.load %arg12[%524, %c0_170, %c0_171] : memref<8x8x512xf32, #tpu.memory_space<vmem>>, vector<1x8x512xf32>
    %526 = vector.shape_cast %525 : vector<1x8x512xf32> to vector<8x512xf32>
    %527 = arith.truncf %487 : vector<8x128xf32> to vector<8x128xbf16>
    %cst_172 = arith.constant dense<0.000000e+00> : vector<8x512xf32>
    %528 = tpu.matmul %527, %9, %cst_172 {dimension_numbers = #tpu.dot_dimension_numbers<[1], [0], [0], [1], [0, 0, 1, 1], [], []>} : vector<8x128xbf16>, vector<128x512xbf16>, vector<8x512xf32> -> vector<8x512xf32>
    %529 = arith.addf %526, %528 : vector<8x512xf32>
    %530 = vector.extract_strided_slice %529 {offsets = [0, 0], sizes = [8, 128], strides = [1, 1]} : vector<8x512xf32> to vector<8x128xf32>
    %cst_173 = arith.constant 5.000000e-01 : f32
    %531 = vector.broadcast %cst_173 : f32 to vector<8x128xf32>
    %532 = arith.mulf %531, %530 : vector<8x128xf32>
    %533 = math.tanh %532 : vector<8x128xf32>
    %cst_174 = arith.constant 5.000000e-01 : f32
    %534 = vector.broadcast %cst_174 : f32 to vector<8x128xf32>
    %535 = arith.mulf %534, %533 : vector<8x128xf32>
    %cst_175 = arith.constant 5.000000e-01 : f32
    %536 = vector.broadcast %cst_175 : f32 to vector<8x128xf32>
    %537 = arith.addf %535, %536 : vector<8x128xf32>
    %538 = vector.extract_strided_slice %529 {offsets = [0, 128], sizes = [8, 128], strides = [1, 1]} : vector<8x512xf32> to vector<8x128xf32>
    %cst_176 = arith.constant 5.000000e-01 : f32
    %539 = vector.broadcast %cst_176 : f32 to vector<8x128xf32>
    %540 = arith.mulf %539, %538 : vector<8x128xf32>
    %541 = math.tanh %540 : vector<8x128xf32>
    %cst_177 = arith.constant 5.000000e-01 : f32
    %542 = vector.broadcast %cst_177 : f32 to vector<8x128xf32>
    %543 = arith.mulf %542, %541 : vector<8x128xf32>
    %cst_178 = arith.constant 5.000000e-01 : f32
    %544 = vector.broadcast %cst_178 : f32 to vector<8x128xf32>
    %545 = arith.addf %543, %544 : vector<8x128xf32>
    %546 = vector.extract_strided_slice %529 {offsets = [0, 256], sizes = [8, 128], strides = [1, 1]} : vector<8x512xf32> to vector<8x128xf32>
    %547 = math.tanh %546 : vector<8x128xf32>
    %548 = vector.extract_strided_slice %529 {offsets = [0, 384], sizes = [8, 128], strides = [1, 1]} : vector<8x512xf32> to vector<8x128xf32>
    %cst_179 = arith.constant 5.000000e-01 : f32
    %549 = vector.broadcast %cst_179 : f32 to vector<8x128xf32>
    %550 = arith.mulf %549, %548 : vector<8x128xf32>
    %551 = math.tanh %550 : vector<8x128xf32>
    %cst_180 = arith.constant 5.000000e-01 : f32
    %552 = vector.broadcast %cst_180 : f32 to vector<8x128xf32>
    %553 = arith.mulf %552, %551 : vector<8x128xf32>
    %cst_181 = arith.constant 5.000000e-01 : f32
    %554 = vector.broadcast %cst_181 : f32 to vector<8x128xf32>
    %555 = arith.addf %553, %554 : vector<8x128xf32>
    %556 = arith.mulf %545, %485 : vector<8x128xf32>
    %557 = arith.mulf %537, %547 : vector<8x128xf32>
    %558 = arith.addf %556, %557 : vector<8x128xf32>
    %559 = math.tanh %558 : vector<8x128xf32>
    %560 = arith.mulf %555, %559 : vector<8x128xf32>
    %561 = tpu.concatenate %560, %523 in 1 : vector<8x128xf32>, vector<8x128xf32> -> vector<8x256xf32>
    %562 = arith.truncf %561 : vector<8x256xf32> to vector<8x256xbf16>
    %cst_182 = arith.constant dense<0.000000e+00> : vector<8x512xf32>
    %563 = tpu.matmul %562, %10, %cst_182 {dimension_numbers = #tpu.dot_dimension_numbers<[1], [0], [0], [1], [0, 0, 1, 1], [], []>} : vector<8x256xbf16>, vector<256x512xbf16>, vector<8x512xf32> -> vector<8x512xf32>
    %564 = vector.broadcast %11 : vector<1x512xf32> to vector<8x512xf32>
    %565 = arith.addf %563, %564 : vector<8x512xf32>
    %566 = vector.extract_strided_slice %565 {offsets = [0, 0], sizes = [8, 128], strides = [1, 1]} : vector<8x512xf32> to vector<8x128xf32>
    %cst_183 = arith.constant 5.000000e-01 : f32
    %567 = vector.broadcast %cst_183 : f32 to vector<8x128xf32>
    %568 = arith.mulf %567, %566 : vector<8x128xf32>
    %569 = math.tanh %568 : vector<8x128xf32>
    %cst_184 = arith.constant 5.000000e-01 : f32
    %570 = vector.broadcast %cst_184 : f32 to vector<8x128xf32>
    %571 = arith.mulf %570, %569 : vector<8x128xf32>
    %cst_185 = arith.constant 5.000000e-01 : f32
    %572 = vector.broadcast %cst_185 : f32 to vector<8x128xf32>
    %573 = arith.addf %571, %572 : vector<8x128xf32>
    %574 = vector.extract_strided_slice %565 {offsets = [0, 128], sizes = [8, 128], strides = [1, 1]} : vector<8x512xf32> to vector<8x128xf32>
    %cst_186 = arith.constant 5.000000e-01 : f32
    %575 = vector.broadcast %cst_186 : f32 to vector<8x128xf32>
    %576 = arith.mulf %575, %574 : vector<8x128xf32>
    %577 = math.tanh %576 : vector<8x128xf32>
    %cst_187 = arith.constant 5.000000e-01 : f32
    %578 = vector.broadcast %cst_187 : f32 to vector<8x128xf32>
    %579 = arith.mulf %578, %577 : vector<8x128xf32>
    %cst_188 = arith.constant 5.000000e-01 : f32
    %580 = vector.broadcast %cst_188 : f32 to vector<8x128xf32>
    %581 = arith.addf %579, %580 : vector<8x128xf32>
    %582 = vector.extract_strided_slice %565 {offsets = [0, 256], sizes = [8, 128], strides = [1, 1]} : vector<8x512xf32> to vector<8x128xf32>
    %583 = math.tanh %582 : vector<8x128xf32>
    %584 = vector.extract_strided_slice %565 {offsets = [0, 384], sizes = [8, 128], strides = [1, 1]} : vector<8x512xf32> to vector<8x128xf32>
    %cst_189 = arith.constant 5.000000e-01 : f32
    %585 = vector.broadcast %cst_189 : f32 to vector<8x128xf32>
    %586 = arith.mulf %585, %584 : vector<8x128xf32>
    %587 = math.tanh %586 : vector<8x128xf32>
    %cst_190 = arith.constant 5.000000e-01 : f32
    %588 = vector.broadcast %cst_190 : f32 to vector<8x128xf32>
    %589 = arith.mulf %588, %587 : vector<8x128xf32>
    %cst_191 = arith.constant 5.000000e-01 : f32
    %590 = vector.broadcast %cst_191 : f32 to vector<8x128xf32>
    %591 = arith.addf %589, %590 : vector<8x128xf32>
    %592 = arith.mulf %581, %521 : vector<8x128xf32>
    %593 = arith.mulf %573, %583 : vector<8x128xf32>
    %594 = arith.addf %592, %593 : vector<8x128xf32>
    %595 = math.tanh %594 : vector<8x128xf32>
    %596 = arith.mulf %591, %595 : vector<8x128xf32>
    %c8_i32 = arith.constant 8 : i32
    %c0_192 = arith.constant 0 : index
    %c0_193 = arith.constant 0 : index
    %597 = vector.load %arg7[%c0_192, %c0_193] : memref<128x32xf32, #tpu.memory_space<vmem>>, vector<128x32xf32>
    %cst_194 = arith.constant dense<0.000000e+00> : vector<8x32xf32>
    %598 = tpu.matmul %596, %597, %cst_194 {dimension_numbers = #tpu.dot_dimension_numbers<[1], [0], [0], [1], [0, 0, 1, 1], [], []>} : vector<8x128xf32>, vector<128x32xf32>, vector<8x32xf32> -> vector<8x32xf32>
    %c0_195 = arith.constant 0 : index
    %c0_196 = arith.constant 0 : index
    %599 = vector.load %arg8[%c0_195, %c0_196] : memref<1x32xf32, #tpu.memory_space<vmem>>, vector<1x32xf32>
    %600 = vector.broadcast %599 : vector<1x32xf32> to vector<8x32xf32>
    %601 = arith.addf %598, %600 : vector<8x32xf32>
    %cst_197 = arith.constant 0.000000e+00 : f32
    %602 = vector.broadcast %cst_197 : f32 to vector<8x32xf32>
    %603 = arith.maximumf %601, %602 : vector<8x32xf32>
    %c0_198 = arith.constant 0 : index
    %c0_199 = arith.constant 0 : index
    %604 = vector.load %arg9[%c0_198, %c0_199] : memref<1x32xf32, #tpu.memory_space<vmem>>, vector<1x32xf32>
    %605 = vector.broadcast %604 : vector<1x32xf32> to vector<8x32xf32>
    %606 = arith.mulf %603, %605 : vector<8x32xf32>
    %cst_200 = arith.constant dense<0.000000e+00> : vector<8xf32>
    %607 = vector.multi_reduction <add>, %606, %cst_200 [1] : vector<8x32xf32> to vector<8xf32>
    %608 = vector.shape_cast %607 : vector<8xf32> to vector<8x1xf32>
    %c0_201 = arith.constant 0 : index
    %609 = memref.load %arg10[%c0_201] : memref<1xf32, #tpu.memory_space<smem>>
    %610 = vector.broadcast %609 : f32 to vector<8x1xf32>
    %611 = arith.addf %608, %610 : vector<8x1xf32>
    %cst_202 = arith.constant 5.000000e-01 : f32
    %612 = vector.broadcast %cst_202 : f32 to vector<8x1xf32>
    %613 = arith.mulf %612, %611 : vector<8x1xf32>
    %614 = math.tanh %613 : vector<8x1xf32>
    %cst_203 = arith.constant 5.000000e-01 : f32
    %615 = vector.broadcast %cst_203 : f32 to vector<8x1xf32>
    %616 = arith.mulf %615, %614 : vector<8x1xf32>
    %cst_204 = arith.constant 5.000000e-01 : f32
    %617 = vector.broadcast %cst_204 : f32 to vector<8x1xf32>
    %618 = arith.addf %616, %617 : vector<8x1xf32>
    %c0_205 = arith.constant 0 : index
    %c0_206 = arith.constant 0 : index
    %619 = vector.load %arg11[%c0_205, %c0_206] : memref<8x1xf32, #tpu.memory_space<vmem>>, vector<8x1xf32>
    tpu.vector_store %arg11[%c0_205, %c0_206], %618 {strides = array<i32>} : memref<8x1xf32, #tpu.memory_space<vmem>>, vector<8x1xf32>,
    return
  }
  func.func @transform_0(%arg0: i32) -> (i32, i32, i32) {
    %c0_i32 = arith.constant 0 : i32
    %c0_i32_0 = arith.constant 0 : i32
    %c0_i32_1 = arith.constant 0 : i32
    return %c0_i32, %arg0, %c0_i32_0 : i32, i32, i32
  }
  func.func @transform_1(%arg0: i32) -> (i32, i32) {
    %c0_i32 = arith.constant 0 : i32
    %c0_i32_0 = arith.constant 0 : i32
    %c0_i32_1 = arith.constant 0 : i32
    return %c0_i32, %c0_i32_0 : i32, i32
  }
  func.func @transform_2(%arg0: i32) -> (i32, i32) {
    %c0_i32 = arith.constant 0 : i32
    %c0_i32_0 = arith.constant 0 : i32
    %c0_i32_1 = arith.constant 0 : i32
    return %c0_i32, %c0_i32_0 : i32, i32
  }
  func.func @transform_3(%arg0: i32) -> (i32, i32) {
    %c0_i32 = arith.constant 0 : i32
    %c0_i32_0 = arith.constant 0 : i32
    %c0_i32_1 = arith.constant 0 : i32
    return %c0_i32, %c0_i32_0 : i32, i32
  }
  func.func @transform_4(%arg0: i32) -> (i32, i32) {
    %c0_i32 = arith.constant 0 : i32
    %c0_i32_0 = arith.constant 0 : i32
    %c0_i32_1 = arith.constant 0 : i32
    return %c0_i32, %c0_i32_0 : i32, i32
  }
  func.func @transform_5(%arg0: i32) -> (i32, i32) {
    %c0_i32 = arith.constant 0 : i32
    %c0_i32_0 = arith.constant 0 : i32
    %c0_i32_1 = arith.constant 0 : i32
    return %c0_i32, %c0_i32_0 : i32, i32
  }
  func.func @transform_6(%arg0: i32) -> (i32, i32) {
    %c0_i32 = arith.constant 0 : i32
    %c0_i32_0 = arith.constant 0 : i32
    %c0_i32_1 = arith.constant 0 : i32
    return %c0_i32, %c0_i32_0 : i32, i32
  }
  func.func @transform_7(%arg0: i32) -> (i32, i32) {
    %c0_i32 = arith.constant 0 : i32
    %c0_i32_0 = arith.constant 0 : i32
    %c0_i32_1 = arith.constant 0 : i32
    return %c0_i32, %c0_i32_0 : i32, i32
  }
  func.func @transform_8(%arg0: i32) -> (i32, i32) {
    %c0_i32 = arith.constant 0 : i32
    %c0_i32_0 = arith.constant 0 : i32
    %c0_i32_1 = arith.constant 0 : i32
    return %c0_i32, %c0_i32_0 : i32, i32
  }
  func.func @transform_9(%arg0: i32) -> i32 {
    %c0_i32 = arith.constant 0 : i32
    %c0_i32_0 = arith.constant 0 : i32
    return %c0_i32 : i32
  }
  func.func @transform_10(%arg0: i32) -> (i32, i32) {
    %c0_i32 = arith.constant 0 : i32
    %c0_i32_0 = arith.constant 0 : i32
    return %arg0, %c0_i32 : i32, i32
  }
}

</mosaic_0001>

<llo_original>
// kernel: tpu_custom_call.1
$region0: #{tpu_custom_call.1}
  #allocation0 [shape = 'u32[]', space=smem, size = 0x4, offset = 0x4, fixed_abs, tag = 'smem constant byte address 0x4 - core index']
  #allocation1 [shape = 'u32[144,128]{1,0:T(1,128)}', space=vmem, size = 0x12000, scoped, tag = 'internal scratch']
  #allocation2 [shape = 'f32[8,8,512]{2,1,0:T(8,128)}', space=vmem, size = 0x20000, scoped, tag = 'scratch operand']
  #allocation3 [shape = 'f32[1]{0:T(128)S(6)}', space=smem, size = 0x200, scoped, tag = 'scoped memory for tpu_custom_call.1']
  %s0 = inlined_call_operand.vmem [shape: f32[8,8,8], index: 0, kind: input, shape index: {}]
  %s1 = inlined_call_operand.vmem [shape: f32[8,512], index: 1, kind: input, shape index: {}]
  %s2 = inlined_call_operand.vmem [shape: f32[1,512], index: 2, kind: input, shape index: {}]
  %s3 = inlined_call_operand.hbm [shape: bf16[128,512], index: 3, kind: input, shape index: {}]
  %s4 = inlined_call_operand.hbm [shape: bf16[256,512], index: 4, kind: input, shape index: {}]
  %s5 = inlined_call_operand.vmem [shape: f32[1,512], index: 5, kind: input, shape index: {}]
  %s6 = inlined_call_operand.vmem [shape: f32[128,32], index: 6, kind: input, shape index: {}]
  %s7 = inlined_call_operand.vmem [shape: f32[1,32], index: 7, kind: input, shape index: {}]
  %s8 = inlined_call_operand.vmem [shape: f32[1,32], index: 8, kind: input, shape index: {}]
  %s9 = inlined_call_operand.<no memory space> [shape: f32[1], index: 9, kind: input, shape index: {}]
  %s10 = inlined_call_operand.vmem [shape: f32[8,1], index: 10, kind: output, shape index: {}]
  %s11 = sld [smem:[#allocation0]]
  $region58: #{tpu_custom_call.1} parent=0
    _
  %s13 = ssub.s32 1, %s11
  %s14 = scalar_select 0, %s13, %s11
  %15 = sst [smem:[#allocation3]] %s9
  $region1: #{tpu_custom_call.1} parent=0
    #allocation4 [shape = 'u8[131072]{0}', space=vmem, size = 0x20000, scoped, tag = 'input window, operand 3, single buffered']
    #allocation5 [shape = 's32[1]{0}', space=sflag, size = 0x4, scoped, tag = 'scoped memory for tpu_custom_call.1']
    #allocation6 [shape = 'u8[262144]{0}', space=vmem, size = 0x40000, scoped, tag = 'input window, operand 4, single buffered']
    #allocation7 [shape = 's32[1]{0}', space=sflag, size = 0x4, scoped, tag = 'scoped memory for tpu_custom_call.1']
    %16 = vsyncpa [#allocation5], 0
    %17 = vsyncpa [#allocation7], 0
    // Predicated region
    $region2: #{tpu_custom_call.1} parent=1 // pred_check
      _
    $region3: #{tpu_custom_call.1} parent=1 // pred_check_branch
      %19 = sbr.rel (0) target = $region5
    $region4: #{tpu_custom_call.1} parent=1 // pred_region
      _
    $region5: #{tpu_custom_call.1} parent=1 // pred_fallthru
      _
    // Predicated region
    $region6: #{tpu_custom_call.1} parent=1 // pred_check
      _
    $region7: #{tpu_custom_call.1} parent=1 // pred_check_branch
      %21 = sbr.rel (0) target = $region9
    $region8: #{tpu_custom_call.1} parent=1 // pred_region
      _
    $region9: #{tpu_custom_call.1} parent=1 // pred_fallthru
      _
    // Predicated region
    $region10: #{tpu_custom_call.1} parent=1 // pred_check
      _
    $region11: #{tpu_custom_call.1} parent=1 // pred_check_branch
      %23 = sbr.rel (0) target = $region13
    $region12: #{tpu_custom_call.1} parent=1 // pred_region
      _
    $region13: #{tpu_custom_call.1} parent=1 // pred_fallthru
      _
    // Predicated region
    $region14: #{tpu_custom_call.1} parent=1 // pred_check
      _
    $region15: #{tpu_custom_call.1} parent=1 // pred_check_branch
      %25 = sbr.rel (0) target = $region17
    $region16: #{tpu_custom_call.1} parent=1 // pred_region
      %s27 = ssub.s32 4096, 4096
      %28 = vsyncadd [#allocation5], %s27
      %s29 = sshll.u32 [#allocation4], 4
      %s30 = int_to_ptr.vmem [resolvable:$true] %s29
      %35 = dma.hbm_to_vmem [thread:$0]  %s3, 4096, %s30, [#allocation5], 256, 256, 16
    $region17: #{tpu_custom_call.1} parent=1 // pred_fallthru
      _
    // Predicated region
    $region18: #{tpu_custom_call.1} parent=1 // pred_check
      _
    $region19: #{tpu_custom_call.1} parent=1 // pred_check_branch
      %37 = sbr.rel (0) target = $region21
    $region20: #{tpu_custom_call.1} parent=1 // pred_region
      %s39 = ssub.s32 8192, 8192
      %40 = vsyncadd [#allocation7], %s39
      %s41 = sshll.u32 [#allocation6], 4
      %s42 = int_to_ptr.vmem [resolvable:$true] %s41
      %47 = dma.hbm_to_vmem [thread:$0]  %s4, 8192, %s42, [#allocation7], 256, 256, 16
    $region21: #{tpu_custom_call.1} parent=1 // pred_fallthru
      _
    // Predicated region
    $region22: #{tpu_custom_call.1} parent=1 // pred_check
      _
    $region23: #{tpu_custom_call.1} parent=1 // pred_check_branch
      %49 = sbr.rel (0) target = $region25
    $region24: #{tpu_custom_call.1} parent=1 // pred_region
      _
    $region25: #{tpu_custom_call.1} parent=1 // pred_fallthru
      _
    // Predicated region
    $region26: #{tpu_custom_call.1} parent=1 // pred_check
      _
    $region27: #{tpu_custom_call.1} parent=1 // pred_check_branch
      %51 = sbr.rel (0) target = $region29
    $region28: #{tpu_custom_call.1} parent=1 // pred_region
      _
    $region29: #{tpu_custom_call.1} parent=1 // pred_fallthru
      _
    // Predicated region
    $region30: #{tpu_custom_call.1} parent=1 // pred_check
      _
    $region31: #{tpu_custom_call.1} parent=1 // pred_check_branch
      %53 = sbr.rel (0) target = $region33
    $region32: #{tpu_custom_call.1} parent=1 // pred_region
      _
    $region33: #{tpu_custom_call.1} parent=1 // pred_fallthru
      _
    // Predicated region
    $region34: #{tpu_custom_call.1} parent=1 // pred_check
      _
    $region35: #{tpu_custom_call.1} parent=1 // pred_check_branch
      %55 = sbr.rel (0) target = $region37
    $region36: #{tpu_custom_call.1} parent=1 // pred_region
      _
    $region37: #{tpu_custom_call.1} parent=1 // pred_fallthru
      _
    // Predicated region
    $region38: #{tpu_custom_call.1} parent=1 // pred_check
      _
    $region39: #{tpu_custom_call.1} parent=1 // pred_check_branch
      %57 = sbr.rel (0) target = $region41
    $region40: #{tpu_custom_call.1} parent=1 // pred_region
      _
    $region41: #{tpu_custom_call.1} parent=1 // pred_fallthru
      _
    // Predicated region
    $region42: #{tpu_custom_call.1} parent=1 // pred_check
      _
    $region43: #{tpu_custom_call.1} parent=1 // pred_check_branch
      %59 = sbr.rel (0) target = $region45
    $region44: #{tpu_custom_call.1} parent=1 // pred_region
      %60 = dma.done [#allocation5], 4096
    $region45: #{tpu_custom_call.1} parent=1 // pred_fallthru
      _
    // Predicated region
    $region46: #{tpu_custom_call.1} parent=1 // pred_check
      _
    $region47: #{tpu_custom_call.1} parent=1 // pred_check_branch
      %62 = sbr.rel (0) target = $region49
    $region48: #{tpu_custom_call.1} parent=1 // pred_region
      %63 = dma.done [#allocation7], 8192
    $region49: #{tpu_custom_call.1} parent=1 // pred_fallthru
      _
    %v65 = vld [vmem:[%s0] sm:$0xff]
    %v66 = vld [vmem:[%s0 + $0x8] sm:$0xff]
    %v67 = vld [vmem:[%s0 + $0x10] sm:$0xff]
    %v68 = vld [vmem:[%s0 + $0x18] sm:$0xff]
    %v69 = vld [vmem:[%s0 + $0x20] sm:$0xff]
    %v70 = vld [vmem:[%s0 + $0x28] sm:$0xff]
    %v71 = vld [vmem:[%s0 + $0x30] sm:$0xff]
    %v72 = vld [vmem:[%s0 + $0x38] sm:$0xff]
    %v73 = vld [vmem:[%s1] sm:$0xff]
    %v74 = vld [vmem:[%s1 + $0x8] sm:$0xff]
    %v75 = vld [vmem:[%s1 + $0x10] sm:$0xff]
    %v76 = vld [vmem:[%s1 + $0x18] sm:$0xff]
    %v77 = vld [vmem:[%s2] sm:$0xf]
    %v79 = vlaneseq
    %v80 = vshrl.u32 %v79, 7
    %v81 = vsub.s32 0, %v80
    %v82 = vrot.slane %v77, %v81
    %v83 = vlaneseq
    %v84 = vshrl.u32 %v83, 7
    %v85 = vsub.s32 1, %v84
    %v86 = vrot.slane %v77, %v85
    %v87 = vlaneseq
    %v88 = vshrl.u32 %v87, 7
    %v89 = vsub.s32 2, %v88
    %v90 = vrot.slane %v77, %v89
    %v91 = vlaneseq
    %v92 = vshrl.u32 %v91, 7
    %v93 = vsub.s32 3, %v92
    %v94 = vrot.slane %v77, %v93
    %vm99 = vcmask 64512
    %v101 = vsel %vm99, %v65, 0
    %v104 = vsel %vm99, %v66, 0
    %v107 = vsel %vm99, %v67, 0
    %v110 = vsel %vm99, %v68, 0
    %v113 = vsel %vm99, %v69, 0
    %v116 = vsel %vm99, %v70, 0
    %v119 = vsel %vm99, %v71, 0
    %v122 = vsel %vm99, %v72, 0
    %124 = vmatprep.subr.mxu0 %v74
    %125 = vmatpush1.msra.mxu0 %v73
    %126 = vmatprep.subr.mxu0 0.0
    %127 = vmatpush1.msra.mxu0 0.0
    %128 = vmatprep.subr.mxu0 0.0
    %129 = vmatpush1.msra.mxu0 0.0
    %130 = vmatprep.subr.mxu0 0.0
    %131 = vmatpush1.msra.mxu0 0.0
    %132 = vmatprep.subr.mxu0 0.0
    %133 = vmatpush1.msra.mxu0 0.0
    %134 = vmatprep.subr.mxu0 0.0
    %135 = vmatpush1.msra.mxu0 0.0
    %136 = vmatprep.subr.mxu0 0.0
    %137 = vmatpush1.msra.mxu0 0.0
    %138 = vmatprep.subr.mxu0 0.0
    %139 = vmatpush1.msra.mxu0 0.0
    %140 = vmatprep.subr.mxu0 0.0
    %141 = vmatpush1.msra.mxu0 0.0
    %142 = vmatprep.subr.mxu0 0.0
    %143 = vmatpush1.msra.mxu0 0.0
    %144 = vmatprep.subr.mxu0 0.0
    %145 = vmatpush1.msra.mxu0 0.0
    %146 = vmatprep.subr.mxu0 0.0
    %147 = vmatpush1.msra.mxu0 0.0
    %148 = vmatprep.subr.mxu0 0.0
    %149 = vmatpush1.msra.mxu0 0.0
    %150 = vmatprep.subr.mxu0 0.0
    %151 = vmatpush1.msra.mxu0 0.0
    %152 = vmatprep.subr.mxu0 0.0
    %153 = vmatpush1.msra.mxu0 0.0
    %154 = vmatprep.subr.mxu0 0.0
    %155 = vmatpush1.msra.mxu0 0.0
    %156 = vmatprep.subr.mxu0 0.0
    %157 = vmatpush1.msra.mxu0 0.0
    %158 = vmatprep.subr.mxu0 0.0
    %159 = vmatpush1.msra.mxu0 0.0
    %160 = vmatprep.subr.mxu0 0.0
    %161 = vmatpush1.msra.mxu0 0.0
    %162 = vmatprep.subr.mxu0 0.0
    %163 = vmatpush1.msra.mxu0 0.0
    %164 = vmatprep.subr.mxu0 0.0
    %165 = vmatpush1.msra.mxu0 0.0
    %166 = vmatprep.subr.mxu0 0.0
    %167 = vmatpush1.msra.mxu0 0.0
    %168 = vmatprep.subr.mxu0 0.0
    %169 = vmatpush1.msra.mxu0 0.0
    %170 = vmatprep.subr.mxu0 0.0
    %171 = vmatpush1.msra.mxu0 0.0
    %172 = vmatprep.subr.mxu0 0.0
    %173 = vmatpush1.msra.mxu0 0.0
    %174 = vmatprep.subr.mxu0 0.0
    %175 = vmatpush1.msra.mxu0 0.0
    %176 = vmatprep.subr.mxu0 0.0
    %177 = vmatpush1.msra.mxu0 0.0
    %178 = vmatprep.subr.mxu0 0.0
    %179 = vmatpush1.msra.mxu0 0.0
    %180 = vmatprep.subr.mxu0 0.0
    %181 = vmatpush1.msra.mxu0 0.0
    %182 = vmatprep.subr.mxu0 0.0
    %183 = vmatpush1.msra.mxu0 0.0
    %184 = vmatprep.subr.mxu0 0.0
    %185 = vmatpush1.msra.mxu0 0.0
    %186 = vmatprep.subr.mxu0 0.0
    %187 = vmatpush1.msra.mxu0 0.0
    %188 = vmatprep.mubr.f32.mxu0 0.0
    %189 = vmatmul.mubr.f32.gmra.mrb[0].mxu0 %v101
    %v190 = vpop.f32.mrb[0].mxu0
    %v191 = vadd.f32 %v82, %v190
    %v192 = vpop.f32.mrb[0].mxu0
    %v193 = vadd.f32 %v86, %v192
    %194 = vmatprep.mubr.f32.mxu0 0.0
    %195 = vmatmul.mubr.f32.gmra.mrb[0].mxu0 %v104
    %v196 = vpop.f32.mrb[0].mxu0
    %v197 = vadd.f32 %v82, %v196
    %v198 = vpop.f32.mrb[0].mxu0
    %v199 = vadd.f32 %v86, %v198
    %200 = vmatprep.mubr.f32.mxu0 0.0
    %201 = vmatmul.mubr.f32.gmra.mrb[0].mxu0 %v107
    %v202 = vpop.f32.mrb[0].mxu0
    %v203 = vadd.f32 %v82, %v202
    %v204 = vpop.f32.mrb[0].mxu0
    %v205 = vadd.f32 %v86, %v204
    %206 = vmatprep.mubr.f32.mxu0 0.0
    %207 = vmatmul.mubr.f32.gmra.mrb[0].mxu0 %v110
    %v208 = vpop.f32.mrb[0].mxu0
    %v209 = vadd.f32 %v82, %v208
    %v210 = vpop.f32.mrb[0].mxu0
    %v211 = vadd.f32 %v86, %v210
    %212 = vmatprep.mubr.f32.mxu0 0.0
    %213 = vmatmul.mubr.f32.gmra.mrb[0].mxu0 %v113
    %v214 = vpop.f32.mrb[0].mxu0
    %v215 = vadd.f32 %v82, %v214
    %v216 = vpop.f32.mrb[0].mxu0
    %v217 = vadd.f32 %v86, %v216
    %218 = vmatprep.mubr.f32.mxu0 0.0
    %219 = vmatmul.mubr.f32.gmra.mrb[0].mxu0 %v116
    %v220 = vpop.f32.mrb[0].mxu0
    %v221 = vadd.f32 %v82, %v220
    %v222 = vpop.f32.mrb[0].mxu0
    %v223 = vadd.f32 %v86, %v222
    %224 = vmatprep.mubr.f32.mxu0 0.0
    %225 = vmatmul.mubr.f32.gmra.mrb[0].mxu0 %v119
    %v226 = vpop.f32.mrb[0].mxu0
    %v227 = vadd.f32 %v82, %v226
    %v228 = vpop.f32.mrb[0].mxu0
    %v229 = vadd.f32 %v86, %v228
    %230 = vmatprep.mubr.f32.mxu0 0.0
    %231 = vmatmul.mubr.f32.gmra.mrb[0].mxu0 %v122
    %v232 = vpop.f32.mrb[0].mxu0
    %v233 = vadd.f32 %v82, %v232
    %v234 = vpop.f32.mrb[0].mxu0
    %v235 = vadd.f32 %v86, %v234
    %236 = vdwg.mxu0
    %237 = vmatprep.subr.mxu0 %v76
    %238 = vmatpush1.msra.mxu0 %v75
    %239 = vmatprep.subr.mxu0 0.0
    %240 = vmatpush1.msra.mxu0 0.0
    %241 = vmatprep.subr.mxu0 0.0
    %242 = vmatpush1.msra.mxu0 0.0
    %243 = vmatprep.subr.mxu0 0.0
    %244 = vmatpush1.msra.mxu0 0.0
    %245 = vmatprep.subr.mxu0 0.0
    %246 = vmatpush1.msra.mxu0 0.0
    %247 = vmatprep.subr.mxu0 0.0
    %248 = vmatpush1.msra.mxu0 0.0
    %249 = vmatprep.subr.mxu0 0.0
    %250 = vmatpush1.msra.mxu0 0.0
    %251 = vmatprep.subr.mxu0 0.0
    %252 = vmatpush1.msra.mxu0 0.0
    %253 = vmatprep.subr.mxu0 0.0
    %254 = vmatpush1.msra.mxu0 0.0
    %255 = vmatprep.subr.mxu0 0.0
    %256 = vmatpush1.msra.mxu0 0.0
    %257 = vmatprep.subr.mxu0 0.0
    %258 = vmatpush1.msra.mxu0 0.0
    %259 = vmatprep.subr.mxu0 0.0
    %260 = vmatpush1.msra.mxu0 0.0
    %261 = vmatprep.subr.mxu0 0.0
    %262 = vmatpush1.msra.mxu0 0.0
    %263 = vmatprep.subr.mxu0 0.0
    %264 = vmatpush1.msra.mxu0 0.0
    %265 = vmatprep.subr.mxu0 0.0
    %266 = vmatpush1.msra.mxu0 0.0
    %267 = vmatprep.subr.mxu0 0.0
    %268 = vmatpush1.msra.mxu0 0.0
    %269 = vmatprep.subr.mxu0 0.0
    %270 = vmatpush1.msra.mxu0 0.0
    %271 = vmatprep.subr.mxu0 0.0
    %272 = vmatpush1.msra.mxu0 0.0
    %273 = vmatprep.subr.mxu0 0.0
    %274 = vmatpush1.msra.mxu0 0.0
    %275 = vmatprep.subr.mxu0 0.0
    %276 = vmatpush1.msra.mxu0 0.0
    %277 = vmatprep.subr.mxu0 0.0
    %278 = vmatpush1.msra.mxu0 0.0
    %279 = vmatprep.subr.mxu0 0.0
    %280 = vmatpush1.msra.mxu0 0.0
    %281 = vmatprep.subr.mxu0 0.0
    %282 = vmatpush1.msra.mxu0 0.0
    %283 = vmatprep.subr.mxu0 0.0
    %284 = vmatpush1.msra.mxu0 0.0
    %285 = vmatprep.subr.mxu0 0.0
    %286 = vmatpush1.msra.mxu0 0.0
    %287 = vmatprep.subr.mxu0 0.0
    %288 = vmatpush1.msra.mxu0 0.0
    %289 = vmatprep.subr.mxu0 0.0
    %290 = vmatpush1.msra.mxu0 0.0
    %291 = vmatprep.subr.mxu0 0.0
    %292 = vmatpush1.msra.mxu0 0.0
    %293 = vmatprep.subr.mxu0 0.0
    %294 = vmatpush1.msra.mxu0 0.0
    %295 = vmatprep.subr.mxu0 0.0
    %296 = vmatpush1.msra.mxu0 0.0
    %297 = vmatprep.subr.mxu0 0.0
    %298 = vmatpush1.msra.mxu0 0.0
    %299 = vmatprep.subr.mxu0 0.0
    %300 = vmatpush1.msra.mxu0 0.0
    %301 = vmatprep.mubr.f32.mxu0 0.0
    %302 = vmatmul.mubr.f32.gmra.mrb[0].mxu0 %v101
    %v303 = vpop.f32.mrb[0].mxu0
    %v304 = vadd.f32 %v90, %v303
    %v305 = vpop.f32.mrb[0].mxu0
    %v306 = vadd.f32 %v94, %v305
    %307 = vmatprep.mubr.f32.mxu0 0.0
    %308 = vmatmul.mubr.f32.gmra.mrb[0].mxu0 %v104
    %v309 = vpop.f32.mrb[0].mxu0
    %v310 = vadd.f32 %v90, %v309
    %v311 = vpop.f32.mrb[0].mxu0
    %v312 = vadd.f32 %v94, %v311
    %313 = vmatprep.mubr.f32.mxu0 0.0
    %314 = vmatmul.mubr.f32.gmra.mrb[0].mxu0 %v107
    %v315 = vpop.f32.mrb[0].mxu0
    %v316 = vadd.f32 %v90, %v315
    %v317 = vpop.f32.mrb[0].mxu0
    %v318 = vadd.f32 %v94, %v317
    %319 = vmatprep.mubr.f32.mxu0 0.0
    %320 = vmatmul.mubr.f32.gmra.mrb[0].mxu0 %v110
    %v321 = vpop.f32.mrb[0].mxu0
    %v322 = vadd.f32 %v90, %v321
    %v323 = vpop.f32.mrb[0].mxu0
    %v324 = vadd.f32 %v94, %v323
    %325 = vmatprep.mubr.f32.mxu0 0.0
    %326 = vmatmul.mubr.f32.gmra.mrb[0].mxu0 %v113
    %v327 = vpop.f32.mrb[0].mxu0
    %v328 = vadd.f32 %v90, %v327
    %v329 = vpop.f32.mrb[0].mxu0
    %v330 = vadd.f32 %v94, %v329
    %331 = vmatprep.mubr.f32.mxu0 0.0
    %332 = vmatmul.mubr.f32.gmra.mrb[0].mxu0 %v116
    %v333 = vpop.f32.mrb[0].mxu0
    %v334 = vadd.f32 %v90, %v333
    %v335 = vpop.f32.mrb[0].mxu0
    %v336 = vadd.f32 %v94, %v335
    %337 = vmatprep.mubr.f32.mxu0 0.0
    %338 = vmatmul.mubr.f32.gmra.mrb[0].mxu0 %v119
    %v339 = vpop.f32.mrb[0].mxu0
    %v340 = vadd.f32 %v90, %v339
    %v341 = vpop.f32.mrb[0].mxu0
    %v342 = vadd.f32 %v94, %v341
    %343 = vmatprep.mubr.f32.mxu0 0.0
    %344 = vmatmul.mubr.f32.gmra.mrb[0].mxu0 %v122
    %v345 = vpop.f32.mrb[0].mxu0
    %v346 = vadd.f32 %v90, %v345
    %v347 = vpop.f32.mrb[0].mxu0
    %v348 = vadd.f32 %v94, %v347
    %349 = vdwg.mxu0
    %350 = vst [vmem:[#allocation2] sm:$0xff] %v191
    %351 = vst [vmem:[#allocation2 + $0x8] sm:$0xff] %v193
    %352 = vst [vmem:[#allocation2 + $0x10] sm:$0xff] %v304
    %353 = vst [vmem:[#allocation2 + $0x18] sm:$0xff] %v306
    %354 = vst [vmem:[#allocation2 + $0x20] sm:$0xff] %v197
    %355 = vst [vmem:[#allocation2 + $0x28] sm:$0xff] %v199
    %356 = vst [vmem:[#allocation2 + $0x30] sm:$0xff] %v310
    %357 = vst [vmem:[#allocation2 + $0x38] sm:$0xff] %v312
    %358 = vst [vmem:[#allocation2 + $0x40] sm:$0xff] %v203
    %359 = vst [vmem:[#allocation2 + $0x48] sm:$0xff] %v205
    %360 = vst [vmem:[#allocation2 + $0x50] sm:$0xff] %v316
    %361 = vst [vmem:[#allocation2 + $0x58] sm:$0xff] %v318
    %362 = vst [vmem:[#allocation2 + $0x60] sm:$0xff] %v209
    %363 = vst [vmem:[#allocation2 + $0x68] sm:$0xff] %v211
    %364 = vst [vmem:[#allocation2 + $0x70] sm:$0xff] %v322
    %365 = vst [vmem:[#allocation2 + $0x78] sm:$0xff] %v324
    %366 = vst [vmem:[#allocation2 + $0x80] sm:$0xff] %v215
    %367 = vst [vmem:[#allocation2 + $0x88] sm:$0xff] %v217
    %368 = vst [vmem:[#allocation2 + $0x90] sm:$0xff] %v328
    %369 = vst [vmem:[#allocation2 + $0x98] sm:$0xff] %v330
    %370 = vst [vmem:[#allocation2 + $0xa0] sm:$0xff] %v221
    %371 = vst [vmem:[#allocation2 + $0xa8] sm:$0xff] %v223
    %372 = vst [vmem:[#allocation2 + $0xb0] sm:$0xff] %v334
    %373 = vst [vmem:[#allocation2 + $0xb8] sm:$0xff] %v336
    %374 = vst [vmem:[#allocation2 + $0xc0] sm:$0xff] %v227
    %375 = vst [vmem:[#allocation2 + $0xc8] sm:$0xff] %v229
    %376 = vst [vmem:[#allocation2 + $0xd0] sm:$0xff] %v340
    %377 = vst [vmem:[#allocation2 + $0xd8] sm:$0xff] %v342
    %378 = vst [vmem:[#allocation2 + $0xe0] sm:$0xff] %v233
    %379 = vst [vmem:[#allocation2 + $0xe8] sm:$0xff] %v235
    %380 = vst [vmem:[#allocation2 + $0xf0] sm:$0xff] %v346
    %381 = vst [vmem:[#allocation2 + $0xf8] sm:$0xff] %v348
    %v382 = vld [vmem:[#allocation4] sm:$0xff]
    %v383 = vld [vmem:[#allocation4 + $0x8] sm:$0xff]
    %v384 = vld [vmem:[#allocation4 + $0x10] sm:$0xff]
    %v385 = vld [vmem:[#allocation4 + $0x18] sm:$0xff]
    %v386 = vld [vmem:[#allocation4 + $0x20] sm:$0xff]
    %v387 = vld [vmem:[#allocation4 + $0x28] sm:$0xff]
    %v388 = vld [vmem:[#allocation4 + $0x30] sm:$0xff]
    %v389 = vld [vmem:[#allocation4 + $0x38] sm:$0xff]
    %v390 = vld [vmem:[#allocation4 + $0x40] sm:$0xff]
    %v391 = vld [vmem:[#allocation4 + $0x48] sm:$0xff]
    %v392 = vld [vmem:[#allocation4 + $0x50] sm:$0xff]
    %v393 = vld [vmem:[#allocation4 + $0x58] sm:$0xff]
    %v394 = vld [vmem:[#allocation4 + $0x60] sm:$0xff]
    %v395 = vld [vmem:[#allocation4 + $0x68] sm:$0xff]
    %v396 = vld [vmem:[#allocation4 + $0x70] sm:$0xff]
    %v397 = vld [vmem:[#allocation4 + $0x78] sm:$0xff]
    %v398 = vld [vmem:[#allocation4 + $0x80] sm:$0xff]
    %v399 = vld [vmem:[#allocation4 + $0x88] sm:$0xff]
    %v400 = vld [vmem:[#allocation4 + $0x90] sm:$0xff]
    %v401 = vld [vmem:[#allocation4 + $0x98] sm:$0xff]
    %v402 = vld [vmem:[#allocation4 + $0xa0] sm:$0xff]
    %v403 = vld [vmem:[#allocation4 + $0xa8] sm:$0xff]
    %v404 = vld [vmem:[#allocation4 + $0xb0] sm:$0xff]
    %v405 = vld [vmem:[#allocation4 + $0xb8] sm:$0xff]
    %v406 = vld [vmem:[#allocation4 + $0xc0] sm:$0xff]
    %v407 = vld [vmem:[#allocation4 + $0xc8] sm:$0xff]
    %v408 = vld [vmem:[#allocation4 + $0xd0] sm:$0xff]
    %v409 = vld [vmem:[#allocation4 + $0xd8] sm:$0xff]
    %v410 = vld [vmem:[#allocation4 + $0xe0] sm:$0xff]
    %v411 = vld [vmem:[#allocation4 + $0xe8] sm:$0xff]
    %v412 = vld [vmem:[#allocation4 + $0xf0] sm:$0xff]
    %v413 = vld [vmem:[#allocation4 + $0xf8] sm:$0xff]
    %v414 = vld [vmem:[#allocation6] sm:$0xff]
    %v415 = vld [vmem:[#allocation6 + $0x8] sm:$0xff]
    %v416 = vld [vmem:[#allocation6 + $0x10] sm:$0xff]
    %v417 = vld [vmem:[#allocation6 + $0x18] sm:$0xff]
    %v418 = vld [vmem:[#allocation6 + $0x20] sm:$0xff]
    %v419 = vld [vmem:[#allocation6 + $0x28] sm:$0xff]
    %v420 = vld [vmem:[#allocation6 + $0x30] sm:$0xff]
    %v421 = vld [vmem:[#allocation6 + $0x38] sm:$0xff]
    %v422 = vld [vmem:[#allocation6 + $0x40] sm:$0xff]
    %v423 = vld [vmem:[#allocation6 + $0x48] sm:$0xff]
    %v424 = vld [vmem:[#allocation6 + $0x50] sm:$0xff]
    %v425 = vld [vmem:[#allocation6 + $0x58] sm:$0xff]
    %v426 = vld [vmem:[#allocation6 + $0x60] sm:$0xff]
    %v427 = vld [vmem:[#allocation6 + $0x68] sm:$0xff]
    %v428 = vld [vmem:[#allocation6 + $0x70] sm:$0xff]
    %v429 = vld [vmem:[#allocation6 + $0x78] sm:$0xff]
    %v430 = vld [vmem:[#allocation6 + $0x80] sm:$0xff]
    %v431 = vld [vmem:[#allocation6 + $0x88] sm:$0xff]
    %v432 = vld [vmem:[#allocation6 + $0x90] sm:$0xff]
    %v433 = vld [vmem:[#allocation6 + $0x98] sm:$0xff]
    %v434 = vld [vmem:[#allocation6 + $0xa0] sm:$0xff]
    %v435 = vld [vmem:[#allocation6 + $0xa8] sm:$0xff]
    %v436 = vld [vmem:[#allocation6 + $0xb0] sm:$0xff]
    %v437 = vld [vmem:[#allocation6 + $0xb8] sm:$0xff]
    %v438 = vld [vmem:[#allocation6 + $0xc0] sm:$0xff]
    %v439 = vld [vmem:[#allocation6 + $0xc8] sm:$0xff]
    %v440 = vld [vmem:[#allocation6 + $0xd0] sm:$0xff]
    %v441 = vld [vmem:[#allocation6 + $0xd8] sm:$0xff]
    %v442 = vld [vmem:[#allocation6 + $0xe0] sm:$0xff]
    %v443 = vld [vmem:[#allocation6 + $0xe8] sm:$0xff]
    %v444 = vld [vmem:[#allocation6 + $0xf0] sm:$0xff]
    %v445 = vld [vmem:[#allocation6 + $0xf8] sm:$0xff]
    %v446 = vld [vmem:[#allocation6 + $0x100] sm:$0xff]
    %v447 = vld [vmem:[#allocation6 + $0x108] sm:$0xff]
    %v448 = vld [vmem:[#allocation6 + $0x110] sm:$0xff]
    %v449 = vld [vmem:[#allocation6 + $0x118] sm:$0xff]
    %v450 = vld [vmem:[#allocation6 + $0x120] sm:$0xff]
    %v451 = vld [vmem:[#allocation6 + $0x128] sm:$0xff]
    %v452 = vld [vmem:[#allocation6 + $0x130] sm:$0xff]
    %v453 = vld [vmem:[#allocation6 + $0x138] sm:$0xff]
    %v454 = vld [vmem:[#allocation6 + $0x140] sm:$0xff]
    %v455 = vld [vmem:[#allocation6 + $0x148] sm:$0xff]
    %v456 = vld [vmem:[#allocation6 + $0x150] sm:$0xff]
    %v457 = vld [vmem:[#allocation6 + $0x158] sm:$0xff]
    %v458 = vld [vmem:[#allocation6 + $0x160] sm:$0xff]
    %v459 = vld [vmem:[#allocation6 + $0x168] sm:$0xff]
    %v460 = vld [vmem:[#allocation6 + $0x170] sm:$0xff]
    %v461 = vld [vmem:[#allocation6 + $0x178] sm:$0xff]
    %v462 = vld [vmem:[#allocation6 + $0x180] sm:$0xff]
    %v463 = vld [vmem:[#allocation6 + $0x188] sm:$0xff]
    %v464 = vld [vmem:[#allocation6 + $0x190] sm:$0xff]
    %v465 = vld [vmem:[#allocation6 + $0x198] sm:$0xff]
    %v466 = vld [vmem:[#allocation6 + $0x1a0] sm:$0xff]
    %v467 = vld [vmem:[#allocation6 + $0x1a8] sm:$0xff]
    %v468 = vld [vmem:[#allocation6 + $0x1b0] sm:$0xff]
    %v469 = vld [vmem:[#allocation6 + $0x1b8] sm:$0xff]
    %v470 = vld [vmem:[#allocation6 + $0x1c0] sm:$0xff]
    %v471 = vld [vmem:[#allocation6 + $0x1c8] sm:$0xff]
    %v472 = vld [vmem:[#allocation6 + $0x1d0] sm:$0xff]
    %v473 = vld [vmem:[#allocation6 + $0x1d8] sm:$0xff]
    %v474 = vld [vmem:[#allocation6 + $0x1e0] sm:$0xff]
    %v475 = vld [vmem:[#allocation6 + $0x1e8] sm:$0xff]
    %v476 = vld [vmem:[#allocation6 + $0x1f0] sm:$0xff]
    %v477 = vld [vmem:[#allocation6 + $0x1f8] sm:$0xff]
    %v478 = vld [vmem:[%s5] sm:$0xf]
    %v479 = vld [vmem:[#allocation2] sm:$0xff]
    %v480 = vld [vmem:[#allocation2 + $0x8] sm:$0xff]
    %v481 = vld [vmem:[#allocation2 + $0x10] sm:$0xff]
    %v482 = vld [vmem:[#allocation2 + $0x18] sm:$0xff]
    %v515 = vunpack.c.l.b16 %v382
    %v516 = vunpack.c.h.b16 %v382
    %v517 = vunpack.c.l.b16 %v383
    %v518 = vunpack.c.h.b16 %v383
    %v519 = vunpack.c.l.b16 %v384
    %v520 = vunpack.c.h.b16 %v384
    %v521 = vunpack.c.l.b16 %v385
    %v522 = vunpack.c.h.b16 %v385
    %v523 = vunpack.c.l.b16 %v386
    %v524 = vunpack.c.h.b16 %v386
    %v525 = vunpack.c.l.b16 %v387
    %v526 = vunpack.c.h.b16 %v387
    %v527 = vunpack.c.l.b16 %v388
    %v528 = vunpack.c.h.b16 %v388
    %v529 = vunpack.c.l.b16 %v389
    %v530 = vunpack.c.h.b16 %v389
    %v531 = vunpack.c.l.b16 %v390
    %v532 = vunpack.c.h.b16 %v390
    %v533 = vunpack.c.l.b16 %v391
    %v534 = vunpack.c.h.b16 %v391
    %v535 = vunpack.c.l.b16 %v392
    %v536 = vunpack.c.h.b16 %v392
    %v537 = vunpack.c.l.b16 %v393
    %v538 = vunpack.c.h.b16 %v393
    %v539 = vunpack.c.l.b16 %v394
    %v540 = vunpack.c.h.b16 %v394
    %v541 = vunpack.c.l.b16 %v395
    %v542 = vunpack.c.h.b16 %v395
    %v543 = vunpack.c.l.b16 %v396
    %v544 = vunpack.c.h.b16 %v396
    %v545 = vunpack.c.l.b16 %v397
    %v546 = vunpack.c.h.b16 %v397
    %v547 = vunpack.c.l.b16 %v398
    %v548 = vunpack.c.h.b16 %v398
    %v549 = vunpack.c.l.b16 %v399
    %v550 = vunpack.c.h.b16 %v399
    %v551 = vunpack.c.l.b16 %v400
    %v552 = vunpack.c.h.b16 %v400
    %v553 = vunpack.c.l.b16 %v401
    %v554 = vunpack.c.h.b16 %v401
    %v555 = vunpack.c.l.b16 %v402
    %v556 = vunpack.c.h.b16 %v402
    %v557 = vunpack.c.l.b16 %v403
    %v558 = vunpack.c.h.b16 %v403
    %v559 = vunpack.c.l.b16 %v404
    %v560 = vunpack.c.h.b16 %v404
    %v561 = vunpack.c.l.b16 %v405
    %v562 = vunpack.c.h.b16 %v405
    %v563 = vunpack.c.l.b16 %v406
    %v564 = vunpack.c.h.b16 %v406
    %v565 = vunpack.c.l.b16 %v407
    %v566 = vunpack.c.h.b16 %v407
    %v567 = vunpack.c.l.b16 %v408
    %v568 = vunpack.c.h.b16 %v408
    %v569 = vunpack.c.l.b16 %v409
    %v570 = vunpack.c.h.b16 %v409
    %v571 = vunpack.c.l.b16 %v410
    %v572 = vunpack.c.h.b16 %v410
    %v573 = vunpack.c.l.b16 %v411
    %v574 = vunpack.c.h.b16 %v411
    %v575 = vunpack.c.l.b16 %v412
    %v576 = vunpack.c.h.b16 %v412
    %v577 = vunpack.c.l.b16 %v413
    %v578 = vunpack.c.h.b16 %v413
    %v579 = vpack.c.b16 %v519, %v515
    %v580 = vpack.c.b16 %v520, %v516
    %v581 = vpack.c.b16 %v521, %v517
    %v582 = vpack.c.b16 %v522, %v518
    %v583 = vpack.c.b16 %v527, %v523
    %v584 = vpack.c.b16 %v528, %v524
    %v585 = vpack.c.b16 %v529, %v525
    %v586 = vpack.c.b16 %v530, %v526
    %v587 = vpack.c.b16 %v535, %v531
    %v588 = vpack.c.b16 %v536, %v532
    %v589 = vpack.c.b16 %v537, %v533
    %v590 = vpack.c.b16 %v538, %v534
    %v591 = vpack.c.b16 %v543, %v539
    %v592 = vpack.c.b16 %v544, %v540
    %v593 = vpack.c.b16 %v545, %v541
    %v594 = vpack.c.b16 %v546, %v542
    %v595 = vpack.c.b16 %v551, %v547
    %v596 = vpack.c.b16 %v552, %v548
    %v597 = vpack.c.b16 %v553, %v549
    %v598 = vpack.c.b16 %v554, %v550
    %v599 = vpack.c.b16 %v559, %v555
    %v600 = vpack.c.b16 %v560, %v556
    %v601 = vpack.c.b16 %v561, %v557
    %v602 = vpack.c.b16 %v562, %v558
    %v603 = vpack.c.b16 %v567, %v563
    %v604 = vpack.c.b16 %v568, %v564
    %v605 = vpack.c.b16 %v569, %v565
    %v606 = vpack.c.b16 %v570, %v566
    %v607 = vpack.c.b16 %v575, %v571
    %v608 = vpack.c.b16 %v576, %v572
    %v609 = vpack.c.b16 %v577, %v573
    %v610 = vpack.c.b16 %v578, %v574
    %643 = vmatprep.subr.bf16.mxu0 %v580
    %644 = vmatpush1.bf16.msra.mxu0 %v579
    %645 = vmatprep.subr.bf16.mxu0 %v584
    %646 = vmatpush1.bf16.msra.mxu0 %v583
    %647 = vmatprep.subr.bf16.mxu0 %v588
    %648 = vmatpush1.bf16.msra.mxu0 %v587
    %649 = vmatprep.subr.bf16.mxu0 %v592
    %650 = vmatpush1.bf16.msra.mxu0 %v591
    %651 = vmatprep.subr.bf16.mxu0 %v596
    %652 = vmatpush1.bf16.msra.mxu0 %v595
    %653 = vmatprep.subr.bf16.mxu0 %v600
    %654 = vmatpush1.bf16.msra.mxu0 %v599
    %655 = vmatprep.subr.bf16.mxu0 %v604
    %656 = vmatpush1.bf16.msra.mxu0 %v603
    %657 = vmatprep.subr.bf16.mxu0 %v608
    %658 = vmatpush1.bf16.msra.mxu0 %v607
    %659 = vmatprep.subr.bf16.mxu0 0
    %660 = vmatpush1.bf16.msra.mxu0 0
    %661 = vmatprep.subr.bf16.mxu0 0
    %662 = vmatpush1.bf16.msra.mxu0 0
    %663 = vmatprep.subr.bf16.mxu0 0
    %664 = vmatpush1.bf16.msra.mxu0 0
    %665 = vmatprep.subr.bf16.mxu0 0
    %666 = vmatpush1.bf16.msra.mxu0 0
    %667 = vmatprep.subr.bf16.mxu0 0
    %668 = vmatpush1.bf16.msra.mxu0 0
    %669 = vmatprep.subr.bf16.mxu0 0
    %670 = vmatpush1.bf16.msra.mxu0 0
    %671 = vmatprep.subr.bf16.mxu0 0
    %672 = vmatpush1.bf16.msra.mxu0 0
    %673 = vmatprep.subr.bf16.mxu0 0
    %674 = vmatpush1.bf16.msra.mxu0 0
    %675 = vmatprep.mubr.bf16.mxu0 0
    %676 = vmatmul.mubr.bf16.gmra.mrb[0].mxu0 0
    %v677 = vpop.f32.mrb[0].mxu0
    %v678 = vadd.f32 0.0, %v677
    %v679 = vpop.f32.mrb[0].mxu0
    %v680 = vadd.f32 0.0, %v679
    %v681 = vpop.f32.mrb[0].mxu0
    %v682 = vpop.f32.mrb[0].mxu0
    %683 = vdwg.mxu0
    %684 = vmatprep.subr.bf16.mxu0 %v582
    %685 = vmatpush1.bf16.msra.mxu0 %v581
    %686 = vmatprep.subr.bf16.mxu0 %v586
    %687 = vmatpush1.bf16.msra.mxu0 %v585
    %688 = vmatprep.subr.bf16.mxu0 %v590
    %689 = vmatpush1.bf16.msra.mxu0 %v589
    %690 = vmatprep.subr.bf16.mxu0 %v594
    %691 = vmatpush1.bf16.msra.mxu0 %v593
    %692 = vmatprep.subr.bf16.mxu0 %v598
    %693 = vmatpush1.bf16.msra.mxu0 %v597
    %694 = vmatprep.subr.bf16.mxu0 %v602
    %695 = vmatpush1.bf16.msra.mxu0 %v601
    %696 = vmatprep.subr.bf16.mxu0 %v606
    %697 = vmatpush1.bf16.msra.mxu0 %v605
    %698 = vmatprep.subr.bf16.mxu0 %v610
    %699 = vmatpush1.bf16.msra.mxu0 %v609
    %700 = vmatprep.subr.bf16.mxu0 0
    %701 = vmatpush1.bf16.msra.mxu0 0
    %702 = vmatprep.subr.bf16.mxu0 0
    %703 = vmatpush1.bf16.msra.mxu0 0
    %704 = vmatprep.subr.bf16.mxu0 0
    %705 = vmatpush1.bf16.msra.mxu0 0
    %706 = vmatprep.subr.bf16.mxu0 0
    %707 = vmatpush1.bf16.msra.mxu0 0
    %708 = vmatprep.subr.bf16.mxu0 0
    %709 = vmatpush1.bf16.msra.mxu0 0
    %710 = vmatprep.subr.bf16.mxu0 0
    %711 = vmatpush1.bf16.msra.mxu0 0
    %712 = vmatprep.subr.bf16.mxu0 0
    %713 = vmatpush1.bf16.msra.mxu0 0
    %714 = vmatprep.subr.bf16.mxu0 0
    %715 = vmatpush1.bf16.msra.mxu0 0
    %716 = vmatprep.mubr.bf16.mxu0 0
    %717 = vmatmul.mubr.bf16.gmra.mrb[0].mxu0 0
    %v718 = vpop.f32.mrb[0].mxu0
    %v719 = vadd.f32 0.0, %v718
    %v720 = vpop.f32.mrb[0].mxu0
    %v721 = vadd.f32 0.0, %v720
    %v722 = vpop.f32.mrb[0].mxu0
    %v723 = vpop.f32.mrb[0].mxu0
    %724 = vdwg.mxu0
    %v725 = vadd.f32 %v479, %v678
    %v726 = vadd.f32 %v480, %v680
    %v727 = vadd.f32 %v481, %v719
    %v728 = vadd.f32 %v482, %v721
    %v729 = vmul.f32 %v725, 0.5
    %v730 = vtanh.pop %v729
    %v731 = vmul.f32 %v730, 0.5
    %v732 = vadd.f32 %v731, 0.5
    %v733 = vmul.f32 %v726, 0.5
    %v734 = vtanh.pop %v733
    %v735 = vmul.f32 %v734, 0.5
    %v736 = vadd.f32 %v735, 0.5
    %v737 = vtanh.pop %v727
    %v738 = vmul.f32 %v728, 0.5
    %v739 = vtanh.pop %v738
    %v740 = vmul.f32 %v739, 0.5
    %v741 = vadd.f32 %v740, 0.5
    %v742 = vmul.f32 %v736, 0.0
    %v743 = vmul.f32 %v732, %v737
    %v744 = vadd.f32 %v742, %v743
    %v745 = vtanh.pop %v744
    %v746 = vmul.f32 %v741, %v745
    %v747 = vpack.c.bf16 %v746, %v746
    %v748 = vpack.c.bf16 0.0, 0.0
    %v750 = vlaneseq
    %v751 = vshrl.u32 %v750, 7
    %v752 = vsub.s32 0, %v751
    %v753 = vrot.slane %v478, %v752
    %v754 = vlaneseq
    %v755 = vshrl.u32 %v754, 7
    %v756 = vsub.s32 1, %v755
    %v757 = vrot.slane %v478, %v756
    %v758 = vlaneseq
    %v759 = vshrl.u32 %v758, 7
    %v760 = vsub.s32 2, %v759
    %v761 = vrot.slane %v478, %v760
    %v762 = vlaneseq
    %v763 = vshrl.u32 %v762, 7
    %v764 = vsub.s32 3, %v763
    %v765 = vrot.slane %v478, %v764
    %v834 = vunpack.c.l.b16 %v414
    %v835 = vunpack.c.h.b16 %v414
    %v836 = vunpack.c.l.b16 %v415
    %v837 = vunpack.c.h.b16 %v415
    %v838 = vunpack.c.l.b16 %v416
    %v839 = vunpack.c.h.b16 %v416
    %v840 = vunpack.c.l.b16 %v417
    %v841 = vunpack.c.h.b16 %v417
    %v842 = vunpack.c.l.b16 %v418
    %v843 = vunpack.c.h.b16 %v418
    %v844 = vunpack.c.l.b16 %v419
    %v845 = vunpack.c.h.b16 %v419
    %v846 = vunpack.c.l.b16 %v420
    %v847 = vunpack.c.h.b16 %v420
    %v848 = vunpack.c.l.b16 %v421
    %v849 = vunpack.c.h.b16 %v421
    %v850 = vunpack.c.l.b16 %v422
    %v851 = vunpack.c.h.b16 %v422
    %v852 = vunpack.c.l.b16 %v423
    %v853 = vunpack.c.h.b16 %v423
    %v854 = vunpack.c.l.b16 %v424
    %v855 = vunpack.c.h.b16 %v424
    %v856 = vunpack.c.l.b16 %v425
    %v857 = vunpack.c.h.b16 %v425
    %v858 = vunpack.c.l.b16 %v426
    %v859 = vunpack.c.h.b16 %v426
    %v860 = vunpack.c.l.b16 %v427
    %v861 = vunpack.c.h.b16 %v427
    %v862 = vunpack.c.l.b16 %v428
    %v863 = vunpack.c.h.b16 %v428
    %v864 = vunpack.c.l.b16 %v429
    %v865 = vunpack.c.h.b16 %v429
    %v866 = vunpack.c.l.b16 %v430
    %v867 = vunpack.c.h.b16 %v430
    %v868 = vunpack.c.l.b16 %v431
    %v869 = vunpack.c.h.b16 %v431
    %v870 = vunpack.c.l.b16 %v432
    %v871 = vunpack.c.h.b16 %v432
    %v872 = vunpack.c.l.b16 %v433
    %v873 = vunpack.c.h.b16 %v433
    %v874 = vunpack.c.l.b16 %v434
    %v875 = vunpack.c.h.b16 %v434
    %v876 = vunpack.c.l.b16 %v435
    %v877 = vunpack.c.h.b16 %v435
    %v878 = vunpack.c.l.b16 %v436
    %v879 = vunpack.c.h.b16 %v436
    %v880 = vunpack.c.l.b16 %v437
    %v881 = vunpack.c.h.b16 %v437
    %v882 = vunpack.c.l.b16 %v438
    %v883 = vunpack.c.h.b16 %v438
    %v884 = vunpack.c.l.b16 %v439
    %v885 = vunpack.c.h.b16 %v439
    %v886 = vunpack.c.l.b16 %v440
    %v887 = vunpack.c.h.b16 %v440
    %v888 = vunpack.c.l.b16 %v441
    %v889 = vunpack.c.h.b16 %v441
    %v890 = vunpack.c.l.b16 %v442
    %v891 = vunpack.c.h.b16 %v442
    %v892 = vunpack.c.l.b16 %v443
    %v893 = vunpack.c.h.b16 %v443
    %v894 = vunpack.c.l.b16 %v444
    %v895 = vunpack.c.h.b16 %v444
    %v896 = vunpack.c.l.b16 %v445
    %v897 = vunpack.c.h.b16 %v445
    %v898 = vunpack.c.l.b16 %v446
    %v899 = vunpack.c.h.b16 %v446
    %v900 = vunpack.c.l.b16 %v447
    %v901 = vunpack.c.h.b16 %v447
    %v902 = vunpack.c.l.b16 %v448
    %v903 = vunpack.c.h.b16 %v448
    %v904 = vunpack.c.l.b16 %v449
    %v905 = vunpack.c.h.b16 %v449
    %v906 = vunpack.c.l.b16 %v450
    %v907 = vunpack.c.h.b16 %v450
    %v908 = vunpack.c.l.b16 %v451
    %v909 = vunpack.c.h.b16 %v451
    %v910 = vunpack.c.l.b16 %v452
    %v911 = vunpack.c.h.b16 %v452
    %v912 = vunpack.c.l.b16 %v453
    %v913 = vunpack.c.h.b16 %v453
    %v914 = vunpack.c.l.b16 %v454
    %v915 = vunpack.c.h.b16 %v454
    %v916 = vunpack.c.l.b16 %v455
    %v917 = vunpack.c.h.b16 %v455
    %v918 = vunpack.c.l.b16 %v456
    %v919 = vunpack.c.h.b16 %v456
    %v920 = vunpack.c.l.b16 %v457
    %v921 = vunpack.c.h.b16 %v457
    %v922 = vunpack.c.l.b16 %v458
    %v923 = vunpack.c.h.b16 %v458
    %v924 = vunpack.c.l.b16 %v459
    %v925 = vunpack.c.h.b16 %v459
    %v926 = vunpack.c.l.b16 %v460
    %v927 = vunpack.c.h.b16 %v460
    %v928 = vunpack.c.l.b16 %v461
    %v929 = vunpack.c.h.b16 %v461
    %v930 = vunpack.c.l.b16 %v462
    %v931 = vunpack.c.h.b16 %v462
    %v932 = vunpack.c.l.b16 %v463
    %v933 = vunpack.c.h.b16 %v463
    %v934 = vunpack.c.l.b16 %v464
    %v935 = vunpack.c.h.b16 %v464
    %v936 = vunpack.c.l.b16 %v465
    %v937 = vunpack.c.h.b16 %v465
    %v938 = vunpack.c.l.b16 %v466
    %v939 = vunpack.c.h.b16 %v466
    %v940 = vunpack.c.l.b16 %v467
    %v941 = vunpack.c.h.b16 %v467
    %v942 = vunpack.c.l.b16 %v468
    %v943 = vunpack.c.h.b16 %v468
    %v944 = vunpack.c.l.b16 %v469
    %v945 = vunpack.c.h.b16 %v469
    %v946 = vunpack.c.l.b16 %v470
    %v947 = vunpack.c.h.b16 %v470
    %v948 = vunpack.c.l.b16 %v471
    %v949 = vunpack.c.h.b16 %v471
    %v950 = vunpack.c.l.b16 %v472
    %v951 = vunpack.c.h.b16 %v472
    %v952 = vunpack.c.l.b16 %v473
    %v953 = vunpack.c.h.b16 %v473
    %v954 = vunpack.c.l.b16 %v474
    %v955 = vunpack.c.h.b16 %v474
    %v956 = vunpack.c.l.b16 %v475
    %v957 = vunpack.c.h.b16 %v475
    %v958 = vunpack.c.l.b16 %v476
    %v959 = vunpack.c.h.b16 %v476
    %v960 = vunpack.c.l.b16 %v477
    %v961 = vunpack.c.h.b16 %v477
    %v962 = vpack.c.b16 %v838, %v834
    %v963 = vpack.c.b16 %v839, %v835
    %v964 = vpack.c.b16 %v840, %v836
    %v965 = vpack.c.b16 %v841, %v837
    %v966 = vpack.c.b16 %v846, %v842
    %v967 = vpack.c.b16 %v847, %v843
    %v968 = vpack.c.b16 %v848, %v844
    %v969 = vpack.c.b16 %v849, %v845
    %v970 = vpack.c.b16 %v854, %v850
    %v971 = vpack.c.b16 %v855, %v851
    %v972 = vpack.c.b16 %v856, %v852
    %v973 = vpack.c.b16 %v857, %v853
    %v974 = vpack.c.b16 %v862, %v858
    %v975 = vpack.c.b16 %v863, %v859
    %v976 = vpack.c.b16 %v864, %v860
    %v977 = vpack.c.b16 %v865, %v861
    %v978 = vpack.c.b16 %v870, %v866
    %v979 = vpack.c.b16 %v871, %v867
    %v980 = vpack.c.b16 %v872, %v868
    %v981 = vpack.c.b16 %v873, %v869
    %v982 = vpack.c.b16 %v878, %v874
    %v983 = vpack.c.b16 %v879, %v875
    %v984 = vpack.c.b16 %v880, %v876
    %v985 = vpack.c.b16 %v881, %v877
    %v986 = vpack.c.b16 %v886, %v882
    %v987 = vpack.c.b16 %v887, %v883
    %v988 = vpack.c.b16 %v888, %v884
    %v989 = vpack.c.b16 %v889, %v885
    %v990 = vpack.c.b16 %v894, %v890
    %v991 = vpack.c.b16 %v895, %v891
    %v992 = vpack.c.b16 %v896, %v892
    %v993 = vpack.c.b16 %v897, %v893
    %v994 = vpack.c.b16 %v902, %v898
    %v995 = vpack.c.b16 %v903, %v899
    %v996 = vpack.c.b16 %v904, %v900
    %v997 = vpack.c.b16 %v905, %v901
    %v998 = vpack.c.b16 %v910, %v906
    %v999 = vpack.c.b16 %v911, %v907
    %v1000 = vpack.c.b16 %v912, %v908
    %v1001 = vpack.c.b16 %v913, %v909
    %v1002 = vpack.c.b16 %v918, %v914
    %v1003 = vpack.c.b16 %v919, %v915
    %v1004 = vpack.c.b16 %v920, %v916
    %v1005 = vpack.c.b16 %v921, %v917
    %v1006 = vpack.c.b16 %v926, %v922
    %v1007 = vpack.c.b16 %v927, %v923
    %v1008 = vpack.c.b16 %v928, %v924
    %v1009 = vpack.c.b16 %v929, %v925
    %v1010 = vpack.c.b16 %v934, %v930
    %v1011 = vpack.c.b16 %v935, %v931
    %v1012 = vpack.c.b16 %v936, %v932
    %v1013 = vpack.c.b16 %v937, %v933
    %v1014 = vpack.c.b16 %v942, %v938
    %v1015 = vpack.c.b16 %v943, %v939
    %v1016 = vpack.c.b16 %v944, %v940
    %v1017 = vpack.c.b16 %v945, %v941
    %v1018 = vpack.c.b16 %v950, %v946
    %v1019 = vpack.c.b16 %v951, %v947
    %v1020 = vpack.c.b16 %v952, %v948
    %v1021 = vpack.c.b16 %v953, %v949
    %v1022 = vpack.c.b16 %v958, %v954
    %v1023 = vpack.c.b16 %v959, %v955
    %v1024 = vpack.c.b16 %v960, %v956
    %v1025 = vpack.c.b16 %v961, %v957
    %1090 = vmatprep.subr.bf16.mxu0 %v963
    %1091 = vmatpush1.bf16.msra.mxu0 %v962
    %1092 = vmatprep.subr.bf16.mxu0 %v967
    %1093 = vmatpush1.bf16.msra.mxu0 %v966
    %1094 = vmatprep.subr.bf16.mxu0 %v971
    %1095 = vmatpush1.bf16.msra.mxu0 %v970
    %1096 = vmatprep.subr.bf16.mxu0 %v975
    %1097 = vmatpush1.bf16.msra.mxu0 %v974
    %1098 = vmatprep.subr.bf16.mxu0 %v979
    %1099 = vmatpush1.bf16.msra.mxu0 %v978
    %1100 = vmatprep.subr.bf16.mxu0 %v983
    %1101 = vmatpush1.bf16.msra.mxu0 %v982
    %1102 = vmatprep.subr.bf16.mxu0 %v987
    %1103 = vmatpush1.bf16.msra.mxu0 %v986
    %1104 = vmatprep.subr.bf16.mxu0 %v991
    %1105 = vmatpush1.bf16.msra.mxu0 %v990
    %1106 = vmatprep.subr.bf16.mxu0 %v995
    %1107 = vmatpush1.bf16.msra.mxu0 %v994
    %1108 = vmatprep.subr.bf16.mxu0 %v999
    %1109 = vmatpush1.bf16.msra.mxu0 %v998
    %1110 = vmatprep.subr.bf16.mxu0 %v1003
    %1111 = vmatpush1.bf16.msra.mxu0 %v1002
    %1112 = vmatprep.subr.bf16.mxu0 %v1007
    %1113 = vmatpush1.bf16.msra.mxu0 %v1006
    %1114 = vmatprep.subr.bf16.mxu0 %v1011
    %1115 = vmatpush1.bf16.msra.mxu0 %v1010
    %1116 = vmatprep.subr.bf16.mxu0 %v1015
    %1117 = vmatpush1.bf16.msra.mxu0 %v1014
    %1118 = vmatprep.subr.bf16.mxu0 %v1019
    %1119 = vmatpush1.bf16.msra.mxu0 %v1018
    %1120 = vmatprep.subr.bf16.mxu0 %v1023
    %1121 = vmatpush1.bf16.msra.mxu0 %v1022
    %1122 = vmatprep.mubr.bf16.mxu0 %v748
    %1123 = vmatmul.mubr.bf16.gmra.mrb[0].mxu0 %v747
    %v1124 = vpop.f32.mrb[0].mxu0
    %v1125 = vadd.f32 %v753, %v1124
    %v1126 = vpop.f32.mrb[0].mxu0
    %v1127 = vadd.f32 %v757, %v1126
    %v1128 = vpop.f32.mrb[0].mxu0
    %v1129 = vpop.f32.mrb[0].mxu0
    %1130 = vdwg.mxu0
    %1131 = vmatprep.subr.bf16.mxu0 %v965
    %1132 = vmatpush1.bf16.msra.mxu0 %v964
    %1133 = vmatprep.subr.bf16.mxu0 %v969
    %1134 = vmatpush1.bf16.msra.mxu0 %v968
    %1135 = vmatprep.subr.bf16.mxu0 %v973
    %1136 = vmatpush1.bf16.msra.mxu0 %v972
    %1137 = vmatprep.subr.bf16.mxu0 %v977
    %1138 = vmatpush1.bf16.msra.mxu0 %v976
    %1139 = vmatprep.subr.bf16.mxu0 %v981
    %1140 = vmatpush1.bf16.msra.mxu0 %v980
    %1141 = vmatprep.subr.bf16.mxu0 %v985
    %1142 = vmatpush1.bf16.msra.mxu0 %v984
    %1143 = vmatprep.subr.bf16.mxu0 %v989
    %1144 = vmatpush1.bf16.msra.mxu0 %v988
    %1145 = vmatprep.subr.bf16.mxu0 %v993
    %1146 = vmatpush1.bf16.msra.mxu0 %v992
    %1147 = vmatprep.subr.bf16.mxu0 %v997
    %1148 = vmatpush1.bf16.msra.mxu0 %v996
    %1149 = vmatprep.subr.bf16.mxu0 %v1001
    %1150 = vmatpush1.bf16.msra.mxu0 %v1000
    %1151 = vmatprep.subr.bf16.mxu0 %v1005
    %1152 = vmatpush1.bf16.msra.mxu0 %v1004
    %1153 = vmatprep.subr.bf16.mxu0 %v1009
    %1154 = vmatpush1.bf16.msra.mxu0 %v1008
    %1155 = vmatprep.subr.bf16.mxu0 %v1013
    %1156 = vmatpush1.bf16.msra.mxu0 %v1012
    %1157 = vmatprep.subr.bf16.mxu0 %v1017
    %1158 = vmatpush1.bf16.msra.mxu0 %v1016
    %1159 = vmatprep.subr.bf16.mxu0 %v1021
    %1160 = vmatpush1.bf16.msra.mxu0 %v1020
    %1161 = vmatprep.subr.bf16.mxu0 %v1025
    %1162 = vmatpush1.bf16.msra.mxu0 %v1024
    %1163 = vmatprep.mubr.bf16.mxu0 %v748
    %1164 = vmatmul.mubr.bf16.gmra.mrb[0].mxu0 %v747
    %v1165 = vpop.f32.mrb[0].mxu0
    %v1166 = vadd.f32 %v761, %v1165
    %v1167 = vpop.f32.mrb[0].mxu0
    %v1168 = vadd.f32 %v765, %v1167
    %v1169 = vpop.f32.mrb[0].mxu0
    %v1170 = vpop.f32.mrb[0].mxu0
    %1171 = vdwg.mxu0
    %v1172 = vmul.f32 %v1125, 0.5
    %v1173 = vtanh.pop %v1172
    %v1174 = vmul.f32 %v1173, 0.5
    %v1175 = vadd.f32 %v1174, 0.5
    %v1176 = vmul.f32 %v1127, 0.5
    %v1177 = vtanh.pop %v1176
    %v1178 = vmul.f32 %v1177, 0.5
    %v1179 = vadd.f32 %v1178, 0.5
    %v1180 = vtanh.pop %v1166
    %v1181 = vmul.f32 %v1168, 0.5
    %v1182 = vtanh.pop %v1181
    %v1183 = vmul.f32 %v1182, 0.5
    %v1184 = vadd.f32 %v1183, 0.5
    %v1185 = vmul.f32 %v1179, 0.0
    %v1186 = vmul.f32 %v1175, %v1180
    %v1187 = vadd.f32 %v1185, %v1186
    %v1188 = vtanh.pop %v1187
    %v1189 = vmul.f32 %v1184, %v1188
    %s1190 = scalar_lea.vmem [#allocation2], 32
    %v1191 = vld [vmem:[%s1190] sm:$0xff]
    %v1192 = vld [vmem:[%s1190 + $0x8] sm:$0xff]
    %v1193 = vld [vmem:[%s1190 + $0x10] sm:$0xff]
    %v1194 = vld [vmem:[%s1190 + $0x18] sm:$0xff]
    %1195 = vmatprep.subr.bf16.mxu0 %v580
    %1196 = vmatpush1.bf16.msra.mxu0 %v579
    %1197 = vmatprep.subr.bf16.mxu0 %v584
    %1198 = vmatpush1.bf16.msra.mxu0 %v583
    %1199 = vmatprep.subr.bf16.mxu0 %v588
    %1200 = vmatpush1.bf16.msra.mxu0 %v587
    %1201 = vmatprep.subr.bf16.mxu0 %v592
    %1202 = vmatpush1.bf16.msra.mxu0 %v591
    %1203 = vmatprep.subr.bf16.mxu0 %v596
    %1204 = vmatpush1.bf16.msra.mxu0 %v595
    %1205 = vmatprep.subr.bf16.mxu0 %v600
    %1206 = vmatpush1.bf16.msra.mxu0 %v599
    %1207 = vmatprep.subr.bf16.mxu0 %v604
    %1208 = vmatpush1.bf16.msra.mxu0 %v603
    %1209 = vmatprep.subr.bf16.mxu0 %v608
    %1210 = vmatpush1.bf16.msra.mxu0 %v607
    %1211 = vmatprep.subr.bf16.mxu0 0
    %1212 = vmatpush1.bf16.msra.mxu0 0
    %1213 = vmatprep.subr.bf16.mxu0 0
    %1214 = vmatpush1.bf16.msra.mxu0 0
    %1215 = vmatprep.subr.bf16.mxu0 0
    %1216 = vmatpush1.bf16.msra.mxu0 0
    %1217 = vmatprep.subr.bf16.mxu0 0
    %1218 = vmatpush1.bf16.msra.mxu0 0
    %1219 = vmatprep.subr.bf16.mxu0 0
    %1220 = vmatpush1.bf16.msra.mxu0 0
    %1221 = vmatprep.subr.bf16.mxu0 0
    %1222 = vmatpush1.bf16.msra.mxu0 0
    %1223 = vmatprep.subr.bf16.mxu0 0
    %1224 = vmatpush1.bf16.msra.mxu0 0
    %1225 = vmatprep.subr.bf16.mxu0 0
    %1226 = vmatpush1.bf16.msra.mxu0 0
    %1227 = vmatprep.mubr.bf16.mxu0 0
    %1228 = vmatmul.mubr.bf16.gmra.mrb[0].mxu0 %v747
    %v1229 = vpop.f32.mrb[0].mxu0
    %v1230 = vadd.f32 0.0, %v1229
    %v1231 = vpop.f32.mrb[0].mxu0
    %v1232 = vadd.f32 0.0, %v1231
    %v1233 = vpop.f32.mrb[0].mxu0
    %v1234 = vpop.f32.mrb[0].mxu0
    %1235 = vdwg.mxu0
    %1236 = vmatprep.subr.bf16.mxu0 %v582
    %1237 = vmatpush1.bf16.msra.mxu0 %v581
    %1238 = vmatprep.subr.bf16.mxu0 %v586
    %1239 = vmatpush1.bf16.msra.mxu0 %v585
    %1240 = vmatprep.subr.bf16.mxu0 %v590
    %1241 = vmatpush1.bf16.msra.mxu0 %v589
    %1242 = vmatprep.subr.bf16.mxu0 %v594
    %1243 = vmatpush1.bf16.msra.mxu0 %v593
    %1244 = vmatprep.subr.bf16.mxu0 %v598
    %1245 = vmatpush1.bf16.msra.mxu0 %v597
    %1246 = vmatprep.subr.bf16.mxu0 %v602
    %1247 = vmatpush1.bf16.msra.mxu0 %v601
    %1248 = vmatprep.subr.bf16.mxu0 %v606
    %1249 = vmatpush1.bf16.msra.mxu0 %v605
    %1250 = vmatprep.subr.bf16.mxu0 %v610
    %1251 = vmatpush1.bf16.msra.mxu0 %v609
    %1252 = vmatprep.subr.bf16.mxu0 0
    %1253 = vmatpush1.bf16.msra.mxu0 0
    %1254 = vmatprep.subr.bf16.mxu0 0
    %1255 = vmatpush1.bf16.msra.mxu0 0
    %1256 = vmatprep.subr.bf16.mxu0 0
    %1257 = vmatpush1.bf16.msra.mxu0 0
    %1258 = vmatprep.subr.bf16.mxu0 0
    %1259 = vmatpush1.bf16.msra.mxu0 0
    %1260 = vmatprep.subr.bf16.mxu0 0
    %1261 = vmatpush1.bf16.msra.mxu0 0
    %1262 = vmatprep.subr.bf16.mxu0 0
    %1263 = vmatpush1.bf16.msra.mxu0 0
    %1264 = vmatprep.subr.bf16.mxu0 0
    %1265 = vmatpush1.bf16.msra.mxu0 0
    %1266 = vmatprep.subr.bf16.mxu0 0
    %1267 = vmatpush1.bf16.msra.mxu0 0
    %1268 = vmatprep.mubr.bf16.mxu0 0
    %1269 = vmatmul.mubr.bf16.gmra.mrb[0].mxu0 %v747
    %v1270 = vpop.f32.mrb[0].mxu0
    %v1271 = vadd.f32 0.0, %v1270
    %v1272 = vpop.f32.mrb[0].mxu0
    %v1273 = vadd.f32 0.0, %v1272
    %v1274 = vpop.f32.mrb[0].mxu0
    %v1275 = vpop.f32.mrb[0].mxu0
    %1276 = vdwg.mxu0
    %v1277 = vadd.f32 %v1191, %v1230
    %v1278 = vadd.f32 %v1192, %v1232
    %v1279 = vadd.f32 %v1193, %v1271
    %v1280 = vadd.f32 %v1194, %v1273
    %v1281 = vmul.f32 %v1277, 0.5
    %v1282 = vtanh.pop %v1281
    %v1283 = vmul.f32 %v1282, 0.5
    %v1284 = vadd.f32 %v1283, 0.5
    %v1285 = vmul.f32 %v1278, 0.5
    %v1286 = vtanh.pop %v1285
    %v1287 = vmul.f32 %v1286, 0.5
    %v1288 = vadd.f32 %v1287, 0.5
    %v1289 = vtanh.pop %v1279
    %v1290 = vmul.f32 %v1280, 0.5
    %v1291 = vtanh.pop %v1290
    %v1292 = vmul.f32 %v1291, 0.5
    %v1293 = vadd.f32 %v1292, 0.5
    %v1294 = vmul.f32 %v1288, %v744
    %v1295 = vmul.f32 %v1284, %v1289
    %v1296 = vadd.f32 %v1294, %v1295
    %v1297 = vtanh.pop %v1296
    %v1298 = vmul.f32 %v1293, %v1297
    %v1299 = vpack.c.bf16 %v1298, %v1298
    %v1300 = vpack.c.bf16 %v1189, %v1189
    %1301 = vmatprep.subr.bf16.mxu0 %v963
    %1302 = vmatpush1.bf16.msra.mxu0 %v962
    %1303 = vmatprep.subr.bf16.mxu0 %v967
    %1304 = vmatpush1.bf16.msra.mxu0 %v966
    %1305 = vmatprep.subr.bf16.mxu0 %v971
    %1306 = vmatpush1.bf16.msra.mxu0 %v970
    %1307 = vmatprep.subr.bf16.mxu0 %v975
    %1308 = vmatpush1.bf16.msra.mxu0 %v974
    %1309 = vmatprep.subr.bf16.mxu0 %v979
    %1310 = vmatpush1.bf16.msra.mxu0 %v978
    %1311 = vmatprep.subr.bf16.mxu0 %v983
    %1312 = vmatpush1.bf16.msra.mxu0 %v982
    %1313 = vmatprep.subr.bf16.mxu0 %v987
    %1314 = vmatpush1.bf16.msra.mxu0 %v986
    %1315 = vmatprep.subr.bf16.mxu0 %v991
    %1316 = vmatpush1.bf16.msra.mxu0 %v990
    %1317 = vmatprep.subr.bf16.mxu0 %v995
    %1318 = vmatpush1.bf16.msra.mxu0 %v994
    %1319 = vmatprep.subr.bf16.mxu0 %v999
    %1320 = vmatpush1.bf16.msra.mxu0 %v998
    %1321 = vmatprep.subr.bf16.mxu0 %v1003
    %1322 = vmatpush1.bf16.msra.mxu0 %v1002
    %1323 = vmatprep.subr.bf16.mxu0 %v1007
    %1324 = vmatpush1.bf16.msra.mxu0 %v1006
    %1325 = vmatprep.subr.bf16.mxu0 %v1011
    %1326 = vmatpush1.bf16.msra.mxu0 %v1010
    %1327 = vmatprep.subr.bf16.mxu0 %v1015
    %1328 = vmatpush1.bf16.msra.mxu0 %v1014
    %1329 = vmatprep.subr.bf16.mxu0 %v1019
    %1330 = vmatpush1.bf16.msra.mxu0 %v1018
    %1331 = vmatprep.subr.bf16.mxu0 %v1023
    %1332 = vmatpush1.bf16.msra.mxu0 %v1022
    %1333 = vmatprep.mubr.bf16.mxu0 %v1300
    %1334 = vmatmul.mubr.bf16.gmra.mrb[0].mxu0 %v1299
    %v1335 = vpop.f32.mrb[0].mxu0
    %v1336 = vadd.f32 %v753, %v1335
    %v1337 = vpop.f32.mrb[0].mxu0
    %v1338 = vadd.f32 %v757, %v1337
    %v1339 = vpop.f32.mrb[0].mxu0
    %v1340 = vpop.f32.mrb[0].mxu0
    %1341 = vdwg.mxu0
    %1342 = vmatprep.subr.bf16.mxu0 %v965
    %1343 = vmatpush1.bf16.msra.mxu0 %v964
    %1344 = vmatprep.subr.bf16.mxu0 %v969
    %1345 = vmatpush1.bf16.msra.mxu0 %v968
    %1346 = vmatprep.subr.bf16.mxu0 %v973
    %1347 = vmatpush1.bf16.msra.mxu0 %v972
    %1348 = vmatprep.subr.bf16.mxu0 %v977
    %1349 = vmatpush1.bf16.msra.mxu0 %v976
    %1350 = vmatprep.subr.bf16.mxu0 %v981
    %1351 = vmatpush1.bf16.msra.mxu0 %v980
    %1352 = vmatprep.subr.bf16.mxu0 %v985
    %1353 = vmatpush1.bf16.msra.mxu0 %v984
    %1354 = vmatprep.subr.bf16.mxu0 %v989
    %1355 = vmatpush1.bf16.msra.mxu0 %v988
    %1356 = vmatprep.subr.bf16.mxu0 %v993
    %1357 = vmatpush1.bf16.msra.mxu0 %v992
    %1358 = vmatprep.subr.bf16.mxu0 %v997
    %1359 = vmatpush1.bf16.msra.mxu0 %v996
    %1360 = vmatprep.subr.bf16.mxu0 %v1001
    %1361 = vmatpush1.bf16.msra.mxu0 %v1000
    %1362 = vmatprep.subr.bf16.mxu0 %v1005
    %1363 = vmatpush1.bf16.msra.mxu0 %v1004
    %1364 = vmatprep.subr.bf16.mxu0 %v1009
    %1365 = vmatpush1.bf16.msra.mxu0 %v1008
    %1366 = vmatprep.subr.bf16.mxu0 %v1013
    %1367 = vmatpush1.bf16.msra.mxu0 %v1012
    %1368 = vmatprep.subr.bf16.mxu0 %v1017
    %1369 = vmatpush1.bf16.msra.mxu0 %v1016
    %1370 = vmatprep.subr.bf16.mxu0 %v1021
    %1371 = vmatpush1.bf16.msra.mxu0 %v1020
    %1372 = vmatprep.subr.bf16.mxu0 %v1025
    %1373 = vmatpush1.bf16.msra.mxu0 %v1024
    %1374 = vmatprep.mubr.bf16.mxu0 %v1300
    %1375 = vmatmul.mubr.bf16.gmra.mrb[0].mxu0 %v1299
    %v1376 = vpop.f32.mrb[0].mxu0
    %v1377 = vadd.f32 %v761, %v1376
    %v1378 = vpop.f32.mrb[0].mxu0
    %v1379 = vadd.f32 %v765, %v1378
    %v1380 = vpop.f32.mrb[0].mxu0
    %v1381 = vpop.f32.mrb[0].mxu0
    %1382 = vdwg.mxu0
    %v1383 = vmul.f32 %v1336, 0.5
    %v1384 = vtanh.pop %v1383
    %v1385 = vmul.f32 %v1384, 0.5
    %v1386 = vadd.f32 %v1385, 0.5
    %v1387 = vmul.f32 %v1338, 0.5
    %v1388 = vtanh.pop %v1387
    %v1389 = vmul.f32 %v1388, 0.5
    %v1390 = vadd.f32 %v1389, 0.5
    %v1391 = vtanh.pop %v1377
    %v1392 = vmul.f32 %v1379, 0.5
    %v1393 = vtanh.pop %v1392
    %v1394 = vmul.f32 %v1393, 0.5
    %v1395 = vadd.f32 %v1394, 0.5
    %v1396 = vmul.f32 %v1390, %v1187
    %v1397 = vmul.f32 %v1386, %v1391
    %v1398 = vadd.f32 %v1396, %v1397
    %v1399 = vtanh.pop %v1398
    %v1400 = vmul.f32 %v1395, %v1399
    %s1401 = scalar_lea.vmem [#allocation2], 64
    %v1402 = vld [vmem:[%s1401] sm:$0xff]
    %v1403 = vld [vmem:[%s1401 + $0x8] sm:$0xff]
    %v1404 = vld [vmem:[%s1401 + $0x10] sm:$0xff]
    %v1405 = vld [vmem:[%s1401 + $0x18] sm:$0xff]
    %1406 = vmatprep.subr.bf16.mxu0 %v580
    %1407 = vmatpush1.bf16.msra.mxu0 %v579
    %1408 = vmatprep.subr.bf16.mxu0 %v584
    %1409 = vmatpush1.bf16.msra.mxu0 %v583
    %1410 = vmatprep.subr.bf16.mxu0 %v588
    %1411 = vmatpush1.bf16.msra.mxu0 %v587
    %1412 = vmatprep.subr.bf16.mxu0 %v592
    %1413 = vmatpush1.bf16.msra.mxu0 %v591
    %1414 = vmatprep.subr.bf16.mxu0 %v596
    %1415 = vmatpush1.bf16.msra.mxu0 %v595
    %1416 = vmatprep.subr.bf16.mxu0 %v600
    %1417 = vmatpush1.bf16.msra.mxu0 %v599
    %1418 = vmatprep.subr.bf16.mxu0 %v604
    %1419 = vmatpush1.bf16.msra.mxu0 %v603
    %1420 = vmatprep.subr.bf16.mxu0 %v608
    %1421 = vmatpush1.bf16.msra.mxu0 %v607
    %1422 = vmatprep.subr.bf16.mxu0 0
    %1423 = vmatpush1.bf16.msra.mxu0 0
    %1424 = vmatprep.subr.bf16.mxu0 0
    %1425 = vmatpush1.bf16.msra.mxu0 0
    %1426 = vmatprep.subr.bf16.mxu0 0
    %1427 = vmatpush1.bf16.msra.mxu0 0
    %1428 = vmatprep.subr.bf16.mxu0 0
    %1429 = vmatpush1.bf16.msra.mxu0 0
    %1430 = vmatprep.subr.bf16.mxu0 0
    %1431 = vmatpush1.bf16.msra.mxu0 0
    %1432 = vmatprep.subr.bf16.mxu0 0
    %1433 = vmatpush1.bf16.msra.mxu0 0
    %1434 = vmatprep.subr.bf16.mxu0 0
    %1435 = vmatpush1.bf16.msra.mxu0 0
    %1436 = vmatprep.subr.bf16.mxu0 0
    %1437 = vmatpush1.bf16.msra.mxu0 0
    %1438 = vmatprep.mubr.bf16.mxu0 0
    %1439 = vmatmul.mubr.bf16.gmra.mrb[0].mxu0 %v1299
    %v1440 = vpop.f32.mrb[0].mxu0
    %v1441 = vadd.f32 0.0, %v1440
    %v1442 = vpop.f32.mrb[0].mxu0
    %v1443 = vadd.f32 0.0, %v1442
    %v1444 = vpop.f32.mrb[0].mxu0
    %v1445 = vpop.f32.mrb[0].mxu0
    %1446 = vdwg.mxu0
    %1447 = vmatprep.subr.bf16.mxu0 %v582
    %1448 = vmatpush1.bf16.msra.mxu0 %v581
    %1449 = vmatprep.subr.bf16.mxu0 %v586
    %1450 = vmatpush1.bf16.msra.mxu0 %v585
    %1451 = vmatprep.subr.bf16.mxu0 %v590
    %1452 = vmatpush1.bf16.msra.mxu0 %v589
    %1453 = vmatprep.subr.bf16.mxu0 %v594
    %1454 = vmatpush1.bf16.msra.mxu0 %v593
    %1455 = vmatprep.subr.bf16.mxu0 %v598
    %1456 = vmatpush1.bf16.msra.mxu0 %v597
    %1457 = vmatprep.subr.bf16.mxu0 %v602
    %1458 = vmatpush1.bf16.msra.mxu0 %v601
    %1459 = vmatprep.subr.bf16.mxu0 %v606
    %1460 = vmatpush1.bf16.msra.mxu0 %v605
    %1461 = vmatprep.subr.bf16.mxu0 %v610
    %1462 = vmatpush1.bf16.msra.mxu0 %v609
    %1463 = vmatprep.subr.bf16.mxu0 0
    %1464 = vmatpush1.bf16.msra.mxu0 0
    %1465 = vmatprep.subr.bf16.mxu0 0
    %1466 = vmatpush1.bf16.msra.mxu0 0
    %1467 = vmatprep.subr.bf16.mxu0 0
    %1468 = vmatpush1.bf16.msra.mxu0 0
    %1469 = vmatprep.subr.bf16.mxu0 0
    %1470 = vmatpush1.bf16.msra.mxu0 0
    %1471 = vmatprep.subr.bf16.mxu0 0
    %1472 = vmatpush1.bf16.msra.mxu0 0
    %1473 = vmatprep.subr.bf16.mxu0 0
    %1474 = vmatpush1.bf16.msra.mxu0 0
    %1475 = vmatprep.subr.bf16.mxu0 0
    %1476 = vmatpush1.bf16.msra.mxu0 0
    %1477 = vmatprep.subr.bf16.mxu0 0
    %1478 = vmatpush1.bf16.msra.mxu0 0
    %1479 = vmatprep.mubr.bf16.mxu0 0
    %1480 = vmatmul.mubr.bf16.gmra.mrb[0].mxu0 %v1299
    %v1481 = vpop.f32.mrb[0].mxu0
    %v1482 = vadd.f32 0.0, %v1481
    %v1483 = vpop.f32.mrb[0].mxu0
    %v1484 = vadd.f32 0.0, %v1483
    %v1485 = vpop.f32.mrb[0].mxu0
    %v1486 = vpop.f32.mrb[0].mxu0
    %1487 = vdwg.mxu0
    %v1488 = vadd.f32 %v1402, %v1441
    %v1489 = vadd.f32 %v1403, %v1443
    %v1490 = vadd.f32 %v1404, %v1482
    %v1491 = vadd.f32 %v1405, %v1484
    %v1492 = vmul.f32 %v1488, 0.5
    %v1493 = vtanh.pop %v1492
    %v1494 = vmul.f32 %v1493, 0.5
    %v1495 = vadd.f32 %v1494, 0.5
    %v1496 = vmul.f32 %v1489, 0.5
    %v1497 = vtanh.pop %v1496
    %v1498 = vmul.f32 %v1497, 0.5
    %v1499 = vadd.f32 %v1498, 0.5
    %v1500 = vtanh.pop %v1490
    %v1501 = vmul.f32 %v1491, 0.5
    %v1502 = vtanh.pop %v1501
    %v1503 = vmul.f32 %v1502, 0.5
    %v1504 = vadd.f32 %v1503, 0.5
    %v1505 = vmul.f32 %v1499, %v1296
    %v1506 = vmul.f32 %v1495, %v1500
    %v1507 = vadd.f32 %v1505, %v1506
    %v1508 = vtanh.pop %v1507
    %v1509 = vmul.f32 %v1504, %v1508
    %v1510 = vpack.c.bf16 %v1509, %v1509
    %v1511 = vpack.c.bf16 %v1400, %v1400
    %1512 = vmatprep.subr.bf16.mxu0 %v963
    %1513 = vmatpush1.bf16.msra.mxu0 %v962
    %1514 = vmatprep.subr.bf16.mxu0 %v967
    %1515 = vmatpush1.bf16.msra.mxu0 %v966
    %1516 = vmatprep.subr.bf16.mxu0 %v971
    %1517 = vmatpush1.bf16.msra.mxu0 %v970
    %1518 = vmatprep.subr.bf16.mxu0 %v975
    %1519 = vmatpush1.bf16.msra.mxu0 %v974
    %1520 = vmatprep.subr.bf16.mxu0 %v979
    %1521 = vmatpush1.bf16.msra.mxu0 %v978
    %1522 = vmatprep.subr.bf16.mxu0 %v983
    %1523 = vmatpush1.bf16.msra.mxu0 %v982
    %1524 = vmatprep.subr.bf16.mxu0 %v987
    %1525 = vmatpush1.bf16.msra.mxu0 %v986
    %1526 = vmatprep.subr.bf16.mxu0 %v991
    %1527 = vmatpush1.bf16.msra.mxu0 %v990
    %1528 = vmatprep.subr.bf16.mxu0 %v995
    %1529 = vmatpush1.bf16.msra.mxu0 %v994
    %1530 = vmatprep.subr.bf16.mxu0 %v999
    %1531 = vmatpush1.bf16.msra.mxu0 %v998
    %1532 = vmatprep.subr.bf16.mxu0 %v1003
    %1533 = vmatpush1.bf16.msra.mxu0 %v1002
    %1534 = vmatprep.subr.bf16.mxu0 %v1007
    %1535 = vmatpush1.bf16.msra.mxu0 %v1006
    %1536 = vmatprep.subr.bf16.mxu0 %v1011
    %1537 = vmatpush1.bf16.msra.mxu0 %v1010
    %1538 = vmatprep.subr.bf16.mxu0 %v1015
    %1539 = vmatpush1.bf16.msra.mxu0 %v1014
    %1540 = vmatprep.subr.bf16.mxu0 %v1019
    %1541 = vmatpush1.bf16.msra.mxu0 %v1018
    %1542 = vmatprep.subr.bf16.mxu0 %v1023
    %1543 = vmatpush1.bf16.msra.mxu0 %v1022
    %1544 = vmatprep.mubr.bf16.mxu0 %v1511
    %1545 = vmatmul.mubr.bf16.gmra.mrb[0].mxu0 %v1510
    %v1546 = vpop.f32.mrb[0].mxu0
    %v1547 = vadd.f32 %v753, %v1546
    %v1548 = vpop.f32.mrb[0].mxu0
    %v1549 = vadd.f32 %v757, %v1548
    %v1550 = vpop.f32.mrb[0].mxu0
    %v1551 = vpop.f32.mrb[0].mxu0
    %1552 = vdwg.mxu0
    %1553 = vmatprep.subr.bf16.mxu0 %v965
    %1554 = vmatpush1.bf16.msra.mxu0 %v964
    %1555 = vmatprep.subr.bf16.mxu0 %v969
    %1556 = vmatpush1.bf16.msra.mxu0 %v968
    %1557 = vmatprep.subr.bf16.mxu0 %v973
    %1558 = vmatpush1.bf16.msra.mxu0 %v972
    %1559 = vmatprep.subr.bf16.mxu0 %v977
    %1560 = vmatpush1.bf16.msra.mxu0 %v976
    %1561 = vmatprep.subr.bf16.mxu0 %v981
    %1562 = vmatpush1.bf16.msra.mxu0 %v980
    %1563 = vmatprep.subr.bf16.mxu0 %v985
    %1564 = vmatpush1.bf16.msra.mxu0 %v984
    %1565 = vmatprep.subr.bf16.mxu0 %v989
    %1566 = vmatpush1.bf16.msra.mxu0 %v988
    %1567 = vmatprep.subr.bf16.mxu0 %v993
    %1568 = vmatpush1.bf16.msra.mxu0 %v992
    %1569 = vmatprep.subr.bf16.mxu0 %v997
    %1570 = vmatpush1.bf16.msra.mxu0 %v996
    %1571 = vmatprep.subr.bf16.mxu0 %v1001
    %1572 = vmatpush1.bf16.msra.mxu0 %v1000
    %1573 = vmatprep.subr.bf16.mxu0 %v1005
    %1574 = vmatpush1.bf16.msra.mxu0 %v1004
    %1575 = vmatprep.subr.bf16.mxu0 %v1009
    %1576 = vmatpush1.bf16.msra.mxu0 %v1008
    %1577 = vmatprep.subr.bf16.mxu0 %v1013
    %1578 = vmatpush1.bf16.msra.mxu0 %v1012
    %1579 = vmatprep.subr.bf16.mxu0 %v1017
    %1580 = vmatpush1.bf16.msra.mxu0 %v1016
    %1581 = vmatprep.subr.bf16.mxu0 %v1021
    %1582 = vmatpush1.bf16.msra.mxu0 %v1020
    %1583 = vmatprep.subr.bf16.mxu0 %v1025
    %1584 = vmatpush1.bf16.msra.mxu0 %v1024
    %1585 = vmatprep.mubr.bf16.mxu0 %v1511
    %1586 = vmatmul.mubr.bf16.gmra.mrb[0].mxu0 %v1510
    %v1587 = vpop.f32.mrb[0].mxu0
    %v1588 = vadd.f32 %v761, %v1587
    %v1589 = vpop.f32.mrb[0].mxu0
    %v1590 = vadd.f32 %v765, %v1589
    %v1591 = vpop.f32.mrb[0].mxu0
    %v1592 = vpop.f32.mrb[0].mxu0
    %1593 = vdwg.mxu0
    %v1594 = vmul.f32 %v1547, 0.5
    %v1595 = vtanh.pop %v1594
    %v1596 = vmul.f32 %v1595, 0.5
    %v1597 = vadd.f32 %v1596, 0.5
    %v1598 = vmul.f32 %v1549, 0.5
    %v1599 = vtanh.pop %v1598
    %v1600 = vmul.f32 %v1599, 0.5
    %v1601 = vadd.f32 %v1600, 0.5
    %v1602 = vtanh.pop %v1588
    %v1603 = vmul.f32 %v1590, 0.5
    %v1604 = vtanh.pop %v1603
    %v1605 = vmul.f32 %v1604, 0.5
    %v1606 = vadd.f32 %v1605, 0.5
    %v1607 = vmul.f32 %v1601, %v1398
    %v1608 = vmul.f32 %v1597, %v1602
    %v1609 = vadd.f32 %v1607, %v1608
    %v1610 = vtanh.pop %v1609
    %v1611 = vmul.f32 %v1606, %v1610
    %s1612 = scalar_lea.vmem [#allocation2], 96
    %v1613 = vld [vmem:[%s1612] sm:$0xff]
    %v1614 = vld [vmem:[%s1612 + $0x8] sm:$0xff]
    %v1615 = vld [vmem:[%s1612 + $0x10] sm:$0xff]
    %v1616 = vld [vmem:[%s1612 + $0x18] sm:$0xff]
    %1617 = vmatprep.subr.bf16.mxu0 %v580
    %1618 = vmatpush1.bf16.msra.mxu0 %v579
    %1619 = vmatprep.subr.bf16.mxu0 %v584
    %1620 = vmatpush1.bf16.msra.mxu0 %v583
    %1621 = vmatprep.subr.bf16.mxu0 %v588
    %1622 = vmatpush1.bf16.msra.mxu0 %v587
    %1623 = vmatprep.subr.bf16.mxu0 %v592
    %1624 = vmatpush1.bf16.msra.mxu0 %v591
    %1625 = vmatprep.subr.bf16.mxu0 %v596
    %1626 = vmatpush1.bf16.msra.mxu0 %v595
    %1627 = vmatprep.subr.bf16.mxu0 %v600
    %1628 = vmatpush1.bf16.msra.mxu0 %v599
    %1629 = vmatprep.subr.bf16.mxu0 %v604
    %1630 = vmatpush1.bf16.msra.mxu0 %v603
    %1631 = vmatprep.subr.bf16.mxu0 %v608
    %1632 = vmatpush1.bf16.msra.mxu0 %v607
    %1633 = vmatprep.subr.bf16.mxu0 0
    %1634 = vmatpush1.bf16.msra.mxu0 0
    %1635 = vmatprep.subr.bf16.mxu0 0
    %1636 = vmatpush1.bf16.msra.mxu0 0
    %1637 = vmatprep.subr.bf16.mxu0 0
    %1638 = vmatpush1.bf16.msra.mxu0 0
    %1639 = vmatprep.subr.bf16.mxu0 0
    %1640 = vmatpush1.bf16.msra.mxu0 0
    %1641 = vmatprep.subr.bf16.mxu0 0
    %1642 = vmatpush1.bf16.msra.mxu0 0
    %1643 = vmatprep.subr.bf16.mxu0 0
    %1644 = vmatpush1.bf16.msra.mxu0 0
    %1645 = vmatprep.subr.bf16.mxu0 0
    %1646 = vmatpush1.bf16.msra.mxu0 0
    %1647 = vmatprep.subr.bf16.mxu0 0
    %1648 = vmatpush1.bf16.msra.mxu0 0
    %1649 = vmatprep.mubr.bf16.mxu0 0
    %1650 = vmatmul.mubr.bf16.gmra.mrb[0].mxu0 %v1510
    %v1651 = vpop.f32.mrb[0].mxu0
    %v1652 = vadd.f32 0.0, %v1651
    %v1653 = vpop.f32.mrb[0].mxu0
    %v1654 = vadd.f32 0.0, %v1653
    %v1655 = vpop.f32.mrb[0].mxu0
    %v1656 = vpop.f32.mrb[0].mxu0
    %1657 = vdwg.mxu0
    %1658 = vmatprep.subr.bf16.mxu0 %v582
    %1659 = vmatpush1.bf16.msra.mxu0 %v581
    %1660 = vmatprep.subr.bf16.mxu0 %v586
    %1661 = vmatpush1.bf16.msra.mxu0 %v585
    %1662 = vmatprep.subr.bf16.mxu0 %v590
    %1663 = vmatpush1.bf16.msra.mxu0 %v589
    %1664 = vmatprep.subr.bf16.mxu0 %v594
    %1665 = vmatpush1.bf16.msra.mxu0 %v593
    %1666 = vmatprep.subr.bf16.mxu0 %v598
    %1667 = vmatpush1.bf16.msra.mxu0 %v597
    %1668 = vmatprep.subr.bf16.mxu0 %v602
    %1669 = vmatpush1.bf16.msra.mxu0 %v601
    %1670 = vmatprep.subr.bf16.mxu0 %v606
    %1671 = vmatpush1.bf16.msra.mxu0 %v605
    %1672 = vmatprep.subr.bf16.mxu0 %v610
    %1673 = vmatpush1.bf16.msra.mxu0 %v609
    %1674 = vmatprep.subr.bf16.mxu0 0
    %1675 = vmatpush1.bf16.msra.mxu0 0
    %1676 = vmatprep.subr.bf16.mxu0 0
    %1677 = vmatpush1.bf16.msra.mxu0 0
    %1678 = vmatprep.subr.bf16.mxu0 0
    %1679 = vmatpush1.bf16.msra.mxu0 0
    %1680 = vmatprep.subr.bf16.mxu0 0
    %1681 = vmatpush1.bf16.msra.mxu0 0
    %1682 = vmatprep.subr.bf16.mxu0 0
    %1683 = vmatpush1.bf16.msra.mxu0 0
    %1684 = vmatprep.subr.bf16.mxu0 0
    %1685 = vmatpush1.bf16.msra.mxu0 0
    %1686 = vmatprep.subr.bf16.mxu0 0
    %1687 = vmatpush1.bf16.msra.mxu0 0
    %1688 = vmatprep.subr.bf16.mxu0 0
    %1689 = vmatpush1.bf16.msra.mxu0 0
    %1690 = vmatprep.mubr.bf16.mxu0 0
    %1691 = vmatmul.mubr.bf16.gmra.mrb[0].mxu0 %v1510
    %v1692 = vpop.f32.mrb[0].mxu0
    %v1693 = vadd.f32 0.0, %v1692
    %v1694 = vpop.f32.mrb[0].mxu0
    %v1695 = vadd.f32 0.0, %v1694
    %v1696 = vpop.f32.mrb[0].mxu0
    %v1697 = vpop.f32.mrb[0].mxu0
    %1698 = vdwg.mxu0
    %v1699 = vadd.f32 %v1613, %v1652
    %v1700 = vadd.f32 %v1614, %v1654
    %v1701 = vadd.f32 %v1615, %v1693
    %v1702 = vadd.f32 %v1616, %v1695
    %v1703 = vmul.f32 %v1699, 0.5
    %v1704 = vtanh.pop %v1703
    %v1705 = vmul.f32 %v1704, 0.5
    %v1706 = vadd.f32 %v1705, 0.5
    %v1707 = vmul.f32 %v1700, 0.5
    %v1708 = vtanh.pop %v1707
    %v1709 = vmul.f32 %v1708, 0.5
    %v1710 = vadd.f32 %v1709, 0.5
    %v1711 = vtanh.pop %v1701
    %v1712 = vmul.f32 %v1702, 0.5
    %v1713 = vtanh.pop %v1712
    %v1714 = vmul.f32 %v1713, 0.5
    %v1715 = vadd.f32 %v1714, 0.5
    %v1716 = vmul.f32 %v1710, %v1507
    %v1717 = vmul.f32 %v1706, %v1711
    %v1718 = vadd.f32 %v1716, %v1717
    %v1719 = vtanh.pop %v1718
    %v1720 = vmul.f32 %v1715, %v1719
    %v1721 = vpack.c.bf16 %v1720, %v1720
    %v1722 = vpack.c.bf16 %v1611, %v1611
    %1723 = vmatprep.subr.bf16.mxu0 %v963
    %1724 = vmatpush1.bf16.msra.mxu0 %v962
    %1725 = vmatprep.subr.bf16.mxu0 %v967
    %1726 = vmatpush1.bf16.msra.mxu0 %v966
    %1727 = vmatprep.subr.bf16.mxu0 %v971
    %1728 = vmatpush1.bf16.msra.mxu0 %v970
    %1729 = vmatprep.subr.bf16.mxu0 %v975
    %1730 = vmatpush1.bf16.msra.mxu0 %v974
    %1731 = vmatprep.subr.bf16.mxu0 %v979
    %1732 = vmatpush1.bf16.msra.mxu0 %v978
    %1733 = vmatprep.subr.bf16.mxu0 %v983
    %1734 = vmatpush1.bf16.msra.mxu0 %v982
    %1735 = vmatprep.subr.bf16.mxu0 %v987
    %1736 = vmatpush1.bf16.msra.mxu0 %v986
    %1737 = vmatprep.subr.bf16.mxu0 %v991
    %1738 = vmatpush1.bf16.msra.mxu0 %v990
    %1739 = vmatprep.subr.bf16.mxu0 %v995
    %1740 = vmatpush1.bf16.msra.mxu0 %v994
    %1741 = vmatprep.subr.bf16.mxu0 %v999
    %1742 = vmatpush1.bf16.msra.mxu0 %v998
    %1743 = vmatprep.subr.bf16.mxu0 %v1003
    %1744 = vmatpush1.bf16.msra.mxu0 %v1002
    %1745 = vmatprep.subr.bf16.mxu0 %v1007
    %1746 = vmatpush1.bf16.msra.mxu0 %v1006
    %1747 = vmatprep.subr.bf16.mxu0 %v1011
    %1748 = vmatpush1.bf16.msra.mxu0 %v1010
    %1749 = vmatprep.subr.bf16.mxu0 %v1015
    %1750 = vmatpush1.bf16.msra.mxu0 %v1014
    %1751 = vmatprep.subr.bf16.mxu0 %v1019
    %1752 = vmatpush1.bf16.msra.mxu0 %v1018
    %1753 = vmatprep.subr.bf16.mxu0 %v1023
    %1754 = vmatpush1.bf16.msra.mxu0 %v1022
    %1755 = vmatprep.mubr.bf16.mxu0 %v1722
    %1756 = vmatmul.mubr.bf16.gmra.mrb[0].mxu0 %v1721
    %v1757 = vpop.f32.mrb[0].mxu0
    %v1758 = vadd.f32 %v753, %v1757
    %v1759 = vpop.f32.mrb[0].mxu0
    %v1760 = vadd.f32 %v757, %v1759
    %v1761 = vpop.f32.mrb[0].mxu0
    %v1762 = vpop.f32.mrb[0].mxu0
    %1763 = vdwg.mxu0
    %1764 = vmatprep.subr.bf16.mxu0 %v965
    %1765 = vmatpush1.bf16.msra.mxu0 %v964
    %1766 = vmatprep.subr.bf16.mxu0 %v969
    %1767 = vmatpush1.bf16.msra.mxu0 %v968
    %1768 = vmatprep.subr.bf16.mxu0 %v973
    %1769 = vmatpush1.bf16.msra.mxu0 %v972
    %1770 = vmatprep.subr.bf16.mxu0 %v977
    %1771 = vmatpush1.bf16.msra.mxu0 %v976
    %1772 = vmatprep.subr.bf16.mxu0 %v981
    %1773 = vmatpush1.bf16.msra.mxu0 %v980
    %1774 = vmatprep.subr.bf16.mxu0 %v985
    %1775 = vmatpush1.bf16.msra.mxu0 %v984
    %1776 = vmatprep.subr.bf16.mxu0 %v989
    %1777 = vmatpush1.bf16.msra.mxu0 %v988
    %1778 = vmatprep.subr.bf16.mxu0 %v993
    %1779 = vmatpush1.bf16.msra.mxu0 %v992
    %1780 = vmatprep.subr.bf16.mxu0 %v997
    %1781 = vmatpush1.bf16.msra.mxu0 %v996
    %1782 = vmatprep.subr.bf16.mxu0 %v1001
    %1783 = vmatpush1.bf16.msra.mxu0 %v1000
    %1784 = vmatprep.subr.bf16.mxu0 %v1005
    %1785 = vmatpush1.bf16.msra.mxu0 %v1004
    %1786 = vmatprep.subr.bf16.mxu0 %v1009
    %1787 = vmatpush1.bf16.msra.mxu0 %v1008
    %1788 = vmatprep.subr.bf16.mxu0 %v1013
    %1789 = vmatpush1.bf16.msra.mxu0 %v1012
    %1790 = vmatprep.subr.bf16.mxu0 %v1017
    %1791 = vmatpush1.bf16.msra.mxu0 %v1016
    %1792 = vmatprep.subr.bf16.mxu0 %v1021
    %1793 = vmatpush1.bf16.msra.mxu0 %v1020
    %1794 = vmatprep.subr.bf16.mxu0 %v1025
    %1795 = vmatpush1.bf16.msra.mxu0 %v1024
    %1796 = vmatprep.mubr.bf16.mxu0 %v1722
    %1797 = vmatmul.mubr.bf16.gmra.mrb[0].mxu0 %v1721
    %v1798 = vpop.f32.mrb[0].mxu0
    %v1799 = vadd.f32 %v761, %v1798
    %v1800 = vpop.f32.mrb[0].mxu0
    %v1801 = vadd.f32 %v765, %v1800
    %v1802 = vpop.f32.mrb[0].mxu0
    %v1803 = vpop.f32.mrb[0].mxu0
    %1804 = vdwg.mxu0
    %v1805 = vmul.f32 %v1758, 0.5
    %v1806 = vtanh.pop %v1805
    %v1807 = vmul.f32 %v1806, 0.5
    %v1808 = vadd.f32 %v1807, 0.5
    %v1809 = vmul.f32 %v1760, 0.5
    %v1810 = vtanh.pop %v1809
    %v1811 = vmul.f32 %v1810, 0.5
    %v1812 = vadd.f32 %v1811, 0.5
    %v1813 = vtanh.pop %v1799
    %v1814 = vmul.f32 %v1801, 0.5
    %v1815 = vtanh.pop %v1814
    %v1816 = vmul.f32 %v1815, 0.5
    %v1817 = vadd.f32 %v1816, 0.5
    %v1818 = vmul.f32 %v1812, %v1609
    %v1819 = vmul.f32 %v1808, %v1813
    %v1820 = vadd.f32 %v1818, %v1819
    %v1821 = vtanh.pop %v1820
    %v1822 = vmul.f32 %v1817, %v1821
    %s1823 = scalar_lea.vmem [#allocation2], 128
    %v1824 = vld [vmem:[%s1823] sm:$0xff]
    %v1825 = vld [vmem:[%s1823 + $0x8] sm:$0xff]
    %v1826 = vld [vmem:[%s1823 + $0x10] sm:$0xff]
    %v1827 = vld [vmem:[%s1823 + $0x18] sm:$0xff]
    %1828 = vmatprep.subr.bf16.mxu0 %v580
    %1829 = vmatpush1.bf16.msra.mxu0 %v579
    %1830 = vmatprep.subr.bf16.mxu0 %v584
    %1831 = vmatpush1.bf16.msra.mxu0 %v583
    %1832 = vmatprep.subr.bf16.mxu0 %v588
    %1833 = vmatpush1.bf16.msra.mxu0 %v587
    %1834 = vmatprep.subr.bf16.mxu0 %v592
    %1835 = vmatpush1.bf16.msra.mxu0 %v591
    %1836 = vmatprep.subr.bf16.mxu0 %v596
    %1837 = vmatpush1.bf16.msra.mxu0 %v595
    %1838 = vmatprep.subr.bf16.mxu0 %v600
    %1839 = vmatpush1.bf16.msra.mxu0 %v599
    %1840 = vmatprep.subr.bf16.mxu0 %v604
    %1841 = vmatpush1.bf16.msra.mxu0 %v603
    %1842 = vmatprep.subr.bf16.mxu0 %v608
    %1843 = vmatpush1.bf16.msra.mxu0 %v607
    %1844 = vmatprep.subr.bf16.mxu0 0
    %1845 = vmatpush1.bf16.msra.mxu0 0
    %1846 = vmatprep.subr.bf16.mxu0 0
    %1847 = vmatpush1.bf16.msra.mxu0 0
    %1848 = vmatprep.subr.bf16.mxu0 0
    %1849 = vmatpush1.bf16.msra.mxu0 0
    %1850 = vmatprep.subr.bf16.mxu0 0
    %1851 = vmatpush1.bf16.msra.mxu0 0
    %1852 = vmatprep.subr.bf16.mxu0 0
    %1853 = vmatpush1.bf16.msra.mxu0 0
    %1854 = vmatprep.subr.bf16.mxu0 0
    %1855 = vmatpush1.bf16.msra.mxu0 0
    %1856 = vmatprep.subr.bf16.mxu0 0
    %1857 = vmatpush1.bf16.msra.mxu0 0
    %1858 = vmatprep.subr.bf16.mxu0 0
    %1859 = vmatpush1.bf16.msra.mxu0 0
    %1860 = vmatprep.mubr.bf16.mxu0 0
    %1861 = vmatmul.mubr.bf16.gmra.mrb[0].mxu0 %v1721
    %v1862 = vpop.f32.mrb[0].mxu0
    %v1863 = vadd.f32 0.0, %v1862
    %v1864 = vpop.f32.mrb[0].mxu0
    %v1865 = vadd.f32 0.0, %v1864
    %v1866 = vpop.f32.mrb[0].mxu0
    %v1867 = vpop.f32.mrb[0].mxu0
    %1868 = vdwg.mxu0
    %1869 = vmatprep.subr.bf16.mxu0 %v582
    %1870 = vmatpush1.bf16.msra.mxu0 %v581
    %1871 = vmatprep.subr.bf16.mxu0 %v586
    %1872 = vmatpush1.bf16.msra.mxu0 %v585
    %1873 = vmatprep.subr.bf16.mxu0 %v590
    %1874 = vmatpush1.bf16.msra.mxu0 %v589
    %1875 = vmatprep.subr.bf16.mxu0 %v594
    %1876 = vmatpush1.bf16.msra.mxu0 %v593
    %1877 = vmatprep.subr.bf16.mxu0 %v598
    %1878 = vmatpush1.bf16.msra.mxu0 %v597
    %1879 = vmatprep.subr.bf16.mxu0 %v602
    %1880 = vmatpush1.bf16.msra.mxu0 %v601
    %1881 = vmatprep.subr.bf16.mxu0 %v606
    %1882 = vmatpush1.bf16.msra.mxu0 %v605
    %1883 = vmatprep.subr.bf16.mxu0 %v610
    %1884 = vmatpush1.bf16.msra.mxu0 %v609
    %1885 = vmatprep.subr.bf16.mxu0 0
    %1886 = vmatpush1.bf16.msra.mxu0 0
    %1887 = vmatprep.subr.bf16.mxu0 0
    %1888 = vmatpush1.bf16.msra.mxu0 0
    %1889 = vmatprep.subr.bf16.mxu0 0
    %1890 = vmatpush1.bf16.msra.mxu0 0
    %1891 = vmatprep.subr.bf16.mxu0 0
    %1892 = vmatpush1.bf16.msra.mxu0 0
    %1893 = vmatprep.subr.bf16.mxu0 0
    %1894 = vmatpush1.bf16.msra.mxu0 0
    %1895 = vmatprep.subr.bf16.mxu0 0
    %1896 = vmatpush1.bf16.msra.mxu0 0
    %1897 = vmatprep.subr.bf16.mxu0 0
    %1898 = vmatpush1.bf16.msra.mxu0 0
    %1899 = vmatprep.subr.bf16.mxu0 0
    %1900 = vmatpush1.bf16.msra.mxu0 0
    %1901 = vmatprep.mubr.bf16.mxu0 0
    %1902 = vmatmul.mubr.bf16.gmra.mrb[0].mxu0 %v1721
    %v1903 = vpop.f32.mrb[0].mxu0
    %v1904 = vadd.f32 0.0, %v1903
    %v1905 = vpop.f32.mrb[0].mxu0
    %v1906 = vadd.f32 0.0, %v1905
    %v1907 = vpop.f32.mrb[0].mxu0
    %v1908 = vpop.f32.mrb[0].mxu0
    %1909 = vdwg.mxu0
    %v1910 = vadd.f32 %v1824, %v1863
    %v1911 = vadd.f32 %v1825, %v1865
    %v1912 = vadd.f32 %v1826, %v1904
    %v1913 = vadd.f32 %v1827, %v1906
    %v1914 = vmul.f32 %v1910, 0.5
    %v1915 = vtanh.pop %v1914
    %v1916 = vmul.f32 %v1915, 0.5
    %v1917 = vadd.f32 %v1916, 0.5
    %v1918 = vmul.f32 %v1911, 0.5
    %v1919 = vtanh.pop %v1918
    %v1920 = vmul.f32 %v1919, 0.5
    %v1921 = vadd.f32 %v1920, 0.5
    %v1922 = vtanh.pop %v1912
    %v1923 = vmul.f32 %v1913, 0.5
    %v1924 = vtanh.pop %v1923
    %v1925 = vmul.f32 %v1924, 0.5
    %v1926 = vadd.f32 %v1925, 0.5
    %v1927 = vmul.f32 %v1921, %v1718
    %v1928 = vmul.f32 %v1917, %v1922
    %v1929 = vadd.f32 %v1927, %v1928
    %v1930 = vtanh.pop %v1929
    %v1931 = vmul.f32 %v1926, %v1930
    %v1932 = vpack.c.bf16 %v1931, %v1931
    %v1933 = vpack.c.bf16 %v1822, %v1822
    %1934 = vmatprep.subr.bf16.mxu0 %v963
    %1935 = vmatpush1.bf16.msra.mxu0 %v962
    %1936 = vmatprep.subr.bf16.mxu0 %v967
    %1937 = vmatpush1.bf16.msra.mxu0 %v966
    %1938 = vmatprep.subr.bf16.mxu0 %v971
    %1939 = vmatpush1.bf16.msra.mxu0 %v970
    %1940 = vmatprep.subr.bf16.mxu0 %v975
    %1941 = vmatpush1.bf16.msra.mxu0 %v974
    %1942 = vmatprep.subr.bf16.mxu0 %v979
    %1943 = vmatpush1.bf16.msra.mxu0 %v978
    %1944 = vmatprep.subr.bf16.mxu0 %v983
    %1945 = vmatpush1.bf16.msra.mxu0 %v982
    %1946 = vmatprep.subr.bf16.mxu0 %v987
    %1947 = vmatpush1.bf16.msra.mxu0 %v986
    %1948 = vmatprep.subr.bf16.mxu0 %v991
    %1949 = vmatpush1.bf16.msra.mxu0 %v990
    %1950 = vmatprep.subr.bf16.mxu0 %v995
    %1951 = vmatpush1.bf16.msra.mxu0 %v994
    %1952 = vmatprep.subr.bf16.mxu0 %v999
    %1953 = vmatpush1.bf16.msra.mxu0 %v998
    %1954 = vmatprep.subr.bf16.mxu0 %v1003
    %1955 = vmatpush1.bf16.msra.mxu0 %v1002
    %1956 = vmatprep.subr.bf16.mxu0 %v1007
    %1957 = vmatpush1.bf16.msra.mxu0 %v1006
    %1958 = vmatprep.subr.bf16.mxu0 %v1011
    %1959 = vmatpush1.bf16.msra.mxu0 %v1010
    %1960 = vmatprep.subr.bf16.mxu0 %v1015
    %1961 = vmatpush1.bf16.msra.mxu0 %v1014
    %1962 = vmatprep.subr.bf16.mxu0 %v1019
    %1963 = vmatpush1.bf16.msra.mxu0 %v1018
    %1964 = vmatprep.subr.bf16.mxu0 %v1023
    %1965 = vmatpush1.bf16.msra.mxu0 %v1022
    %1966 = vmatprep.mubr.bf16.mxu0 %v1933
    %1967 = vmatmul.mubr.bf16.gmra.mrb[0].mxu0 %v1932
    %v1968 = vpop.f32.mrb[0].mxu0
    %v1969 = vadd.f32 %v753, %v1968
    %v1970 = vpop.f32.mrb[0].mxu0
    %v1971 = vadd.f32 %v757, %v1970
    %v1972 = vpop.f32.mrb[0].mxu0
    %v1973 = vpop.f32.mrb[0].mxu0
    %1974 = vdwg.mxu0
    %1975 = vmatprep.subr.bf16.mxu0 %v965
    %1976 = vmatpush1.bf16.msra.mxu0 %v964
    %1977 = vmatprep.subr.bf16.mxu0 %v969
    %1978 = vmatpush1.bf16.msra.mxu0 %v968
    %1979 = vmatprep.subr.bf16.mxu0 %v973
    %1980 = vmatpush1.bf16.msra.mxu0 %v972
    %1981 = vmatprep.subr.bf16.mxu0 %v977
    %1982 = vmatpush1.bf16.msra.mxu0 %v976
    %1983 = vmatprep.subr.bf16.mxu0 %v981
    %1984 = vmatpush1.bf16.msra.mxu0 %v980
    %1985 = vmatprep.subr.bf16.mxu0 %v985
    %1986 = vmatpush1.bf16.msra.mxu0 %v984
    %1987 = vmatprep.subr.bf16.mxu0 %v989
    %1988 = vmatpush1.bf16.msra.mxu0 %v988
    %1989 = vmatprep.subr.bf16.mxu0 %v993
    %1990 = vmatpush1.bf16.msra.mxu0 %v992
    %1991 = vmatprep.subr.bf16.mxu0 %v997
    %1992 = vmatpush1.bf16.msra.mxu0 %v996
    %1993 = vmatprep.subr.bf16.mxu0 %v1001
    %1994 = vmatpush1.bf16.msra.mxu0 %v1000
    %1995 = vmatprep.subr.bf16.mxu0 %v1005
    %1996 = vmatpush1.bf16.msra.mxu0 %v1004
    %1997 = vmatprep.subr.bf16.mxu0 %v1009
    %1998 = vmatpush1.bf16.msra.mxu0 %v1008
    %1999 = vmatprep.subr.bf16.mxu0 %v1013
    %2000 = vmatpush1.bf16.msra.mxu0 %v1012
    %2001 = vmatprep.subr.bf16.mxu0 %v1017
    %2002 = vmatpush1.bf16.msra.mxu0 %v1016
    %2003 = vmatprep.subr.bf16.mxu0 %v1021
    %2004 = vmatpush1.bf16.msra.mxu0 %v1020
    %2005 = vmatprep.subr.bf16.mxu0 %v1025
    %2006 = vmatpush1.bf16.msra.mxu0 %v1024
    %2007 = vmatprep.mubr.bf16.mxu0 %v1933
    %2008 = vmatmul.mubr.bf16.gmra.mrb[0].mxu0 %v1932
    %v2009 = vpop.f32.mrb[0].mxu0
    %v2010 = vadd.f32 %v761, %v2009
    %v2011 = vpop.f32.mrb[0].mxu0
    %v2012 = vadd.f32 %v765, %v2011
    %v2013 = vpop.f32.mrb[0].mxu0
    %v2014 = vpop.f32.mrb[0].mxu0
    %2015 = vdwg.mxu0
    %v2016 = vmul.f32 %v1969, 0.5
    %v2017 = vtanh.pop %v2016
    %v2018 = vmul.f32 %v2017, 0.5
    %v2019 = vadd.f32 %v2018, 0.5
    %v2020 = vmul.f32 %v1971, 0.5
    %v2021 = vtanh.pop %v2020
    %v2022 = vmul.f32 %v2021, 0.5
    %v2023 = vadd.f32 %v2022, 0.5
    %v2024 = vtanh.pop %v2010
    %v2025 = vmul.f32 %v2012, 0.5
    %v2026 = vtanh.pop %v2025
    %v2027 = vmul.f32 %v2026, 0.5
    %v2028 = vadd.f32 %v2027, 0.5
    %v2029 = vmul.f32 %v2023, %v1820
    %v2030 = vmul.f32 %v2019, %v2024
    %v2031 = vadd.f32 %v2029, %v2030
    %v2032 = vtanh.pop %v2031
    %v2033 = vmul.f32 %v2028, %v2032
    %s2034 = scalar_lea.vmem [#allocation2], 160
    %v2035 = vld [vmem:[%s2034] sm:$0xff]
    %v2036 = vld [vmem:[%s2034 + $0x8] sm:$0xff]
    %v2037 = vld [vmem:[%s2034 + $0x10] sm:$0xff]
    %v2038 = vld [vmem:[%s2034 + $0x18] sm:$0xff]
    %2039 = vmatprep.subr.bf16.mxu0 %v580
    %2040 = vmatpush1.bf16.msra.mxu0 %v579
    %2041 = vmatprep.subr.bf16.mxu0 %v584
    %2042 = vmatpush1.bf16.msra.mxu0 %v583
    %2043 = vmatprep.subr.bf16.mxu0 %v588
    %2044 = vmatpush1.bf16.msra.mxu0 %v587
    %2045 = vmatprep.subr.bf16.mxu0 %v592
    %2046 = vmatpush1.bf16.msra.mxu0 %v591
    %2047 = vmatprep.subr.bf16.mxu0 %v596
    %2048 = vmatpush1.bf16.msra.mxu0 %v595
    %2049 = vmatprep.subr.bf16.mxu0 %v600
    %2050 = vmatpush1.bf16.msra.mxu0 %v599
    %2051 = vmatprep.subr.bf16.mxu0 %v604
    %2052 = vmatpush1.bf16.msra.mxu0 %v603
    %2053 = vmatprep.subr.bf16.mxu0 %v608
    %2054 = vmatpush1.bf16.msra.mxu0 %v607
    %2055 = vmatprep.subr.bf16.mxu0 0
    %2056 = vmatpush1.bf16.msra.mxu0 0
    %2057 = vmatprep.subr.bf16.mxu0 0
    %2058 = vmatpush1.bf16.msra.mxu0 0
    %2059 = vmatprep.subr.bf16.mxu0 0
    %2060 = vmatpush1.bf16.msra.mxu0 0
    %2061 = vmatprep.subr.bf16.mxu0 0
    %2062 = vmatpush1.bf16.msra.mxu0 0
    %2063 = vmatprep.subr.bf16.mxu0 0
    %2064 = vmatpush1.bf16.msra.mxu0 0
    %2065 = vmatprep.subr.bf16.mxu0 0
    %2066 = vmatpush1.bf16.msra.mxu0 0
    %2067 = vmatprep.subr.bf16.mxu0 0
    %2068 = vmatpush1.bf16.msra.mxu0 0
    %2069 = vmatprep.subr.bf16.mxu0 0
    %2070 = vmatpush1.bf16.msra.mxu0 0
    %2071 = vmatprep.mubr.bf16.mxu0 0
    %2072 = vmatmul.mubr.bf16.gmra.mrb[0].mxu0 %v1932
    %v2073 = vpop.f32.mrb[0].mxu0
    %v2074 = vadd.f32 0.0, %v2073
    %v2075 = vpop.f32.mrb[0].mxu0
    %v2076 = vadd.f32 0.0, %v2075
    %v2077 = vpop.f32.mrb[0].mxu0
    %v2078 = vpop.f32.mrb[0].mxu0
    %2079 = vdwg.mxu0
    %2080 = vmatprep.subr.bf16.mxu0 %v582
    %2081 = vmatpush1.bf16.msra.mxu0 %v581
    %2082 = vmatprep.subr.bf16.mxu0 %v586
    %2083 = vmatpush1.bf16.msra.mxu0 %v585
    %2084 = vmatprep.subr.bf16.mxu0 %v590
    %2085 = vmatpush1.bf16.msra.mxu0 %v589
    %2086 = vmatprep.subr.bf16.mxu0 %v594
    %2087 = vmatpush1.bf16.msra.mxu0 %v593
    %2088 = vmatprep.subr.bf16.mxu0 %v598
    %2089 = vmatpush1.bf16.msra.mxu0 %v597
    %2090 = vmatprep.subr.bf16.mxu0 %v602
    %2091 = vmatpush1.bf16.msra.mxu0 %v601
    %2092 = vmatprep.subr.bf16.mxu0 %v606
    %2093 = vmatpush1.bf16.msra.mxu0 %v605
    %2094 = vmatprep.subr.bf16.mxu0 %v610
    %2095 = vmatpush1.bf16.msra.mxu0 %v609
    %2096 = vmatprep.subr.bf16.mxu0 0
    %2097 = vmatpush1.bf16.msra.mxu0 0
    %2098 = vmatprep.subr.bf16.mxu0 0
    %2099 = vmatpush1.bf16.msra.mxu0 0
    %2100 = vmatprep.subr.bf16.mxu0 0
    %2101 = vmatpush1.bf16.msra.mxu0 0
    %2102 = vmatprep.subr.bf16.mxu0 0
    %2103 = vmatpush1.bf16.msra.mxu0 0
    %2104 = vmatprep.subr.bf16.mxu0 0
    %2105 = vmatpush1.bf16.msra.mxu0 0
    %2106 = vmatprep.subr.bf16.mxu0 0
    %2107 = vmatpush1.bf16.msra.mxu0 0
    %2108 = vmatprep.subr.bf16.mxu0 0
    %2109 = vmatpush1.bf16.msra.mxu0 0
    %2110 = vmatprep.subr.bf16.mxu0 0
    %2111 = vmatpush1.bf16.msra.mxu0 0
    %2112 = vmatprep.mubr.bf16.mxu0 0
    %2113 = vmatmul.mubr.bf16.gmra.mrb[0].mxu0 %v1932
    %v2114 = vpop.f32.mrb[0].mxu0
    %v2115 = vadd.f32 0.0, %v2114
    %v2116 = vpop.f32.mrb[0].mxu0
    %v2117 = vadd.f32 0.0, %v2116
    %v2118 = vpop.f32.mrb[0].mxu0
    %v2119 = vpop.f32.mrb[0].mxu0
    %2120 = vdwg.mxu0
    %v2121 = vadd.f32 %v2035, %v2074
    %v2122 = vadd.f32 %v2036, %v2076
    %v2123 = vadd.f32 %v2037, %v2115
    %v2124 = vadd.f32 %v2038, %v2117
    %v2125 = vmul.f32 %v2121, 0.5
    %v2126 = vtanh.pop %v2125
    %v2127 = vmul.f32 %v2126, 0.5
    %v2128 = vadd.f32 %v2127, 0.5
    %v2129 = vmul.f32 %v2122, 0.5
    %v2130 = vtanh.pop %v2129
    %v2131 = vmul.f32 %v2130, 0.5
    %v2132 = vadd.f32 %v2131, 0.5
    %v2133 = vtanh.pop %v2123
    %v2134 = vmul.f32 %v2124, 0.5
    %v2135 = vtanh.pop %v2134
    %v2136 = vmul.f32 %v2135, 0.5
    %v2137 = vadd.f32 %v2136, 0.5
    %v2138 = vmul.f32 %v2132, %v1929
    %v2139 = vmul.f32 %v2128, %v2133
    %v2140 = vadd.f32 %v2138, %v2139
    %v2141 = vtanh.pop %v2140
    %v2142 = vmul.f32 %v2137, %v2141
    %v2143 = vpack.c.bf16 %v2142, %v2142
    %v2144 = vpack.c.bf16 %v2033, %v2033
    %2145 = vmatprep.subr.bf16.mxu0 %v963
    %2146 = vmatpush1.bf16.msra.mxu0 %v962
    %2147 = vmatprep.subr.bf16.mxu0 %v967
    %2148 = vmatpush1.bf16.msra.mxu0 %v966
    %2149 = vmatprep.subr.bf16.mxu0 %v971
    %2150 = vmatpush1.bf16.msra.mxu0 %v970
    %2151 = vmatprep.subr.bf16.mxu0 %v975
    %2152 = vmatpush1.bf16.msra.mxu0 %v974
    %2153 = vmatprep.subr.bf16.mxu0 %v979
    %2154 = vmatpush1.bf16.msra.mxu0 %v978
    %2155 = vmatprep.subr.bf16.mxu0 %v983
    %2156 = vmatpush1.bf16.msra.mxu0 %v982
    %2157 = vmatprep.subr.bf16.mxu0 %v987
    %2158 = vmatpush1.bf16.msra.mxu0 %v986
    %2159 = vmatprep.subr.bf16.mxu0 %v991
    %2160 = vmatpush1.bf16.msra.mxu0 %v990
    %2161 = vmatprep.subr.bf16.mxu0 %v995
    %2162 = vmatpush1.bf16.msra.mxu0 %v994
    %2163 = vmatprep.subr.bf16.mxu0 %v999
    %2164 = vmatpush1.bf16.msra.mxu0 %v998
    %2165 = vmatprep.subr.bf16.mxu0 %v1003
    %2166 = vmatpush1.bf16.msra.mxu0 %v1002
    %2167 = vmatprep.subr.bf16.mxu0 %v1007
    %2168 = vmatpush1.bf16.msra.mxu0 %v1006
    %2169 = vmatprep.subr.bf16.mxu0 %v1011
    %2170 = vmatpush1.bf16.msra.mxu0 %v1010
    %2171 = vmatprep.subr.bf16.mxu0 %v1015
    %2172 = vmatpush1.bf16.msra.mxu0 %v1014
    %2173 = vmatprep.subr.bf16.mxu0 %v1019
    %2174 = vmatpush1.bf16.msra.mxu0 %v1018
    %2175 = vmatprep.subr.bf16.mxu0 %v1023
    %2176 = vmatpush1.bf16.msra.mxu0 %v1022
    %2177 = vmatprep.mubr.bf16.mxu0 %v2144
    %2178 = vmatmul.mubr.bf16.gmra.mrb[0].mxu0 %v2143
    %v2179 = vpop.f32.mrb[0].mxu0
    %v2180 = vadd.f32 %v753, %v2179
    %v2181 = vpop.f32.mrb[0].mxu0
    %v2182 = vadd.f32 %v757, %v2181
    %v2183 = vpop.f32.mrb[0].mxu0
    %v2184 = vpop.f32.mrb[0].mxu0
    %2185 = vdwg.mxu0
    %2186 = vmatprep.subr.bf16.mxu0 %v965
    %2187 = vmatpush1.bf16.msra.mxu0 %v964
    %2188 = vmatprep.subr.bf16.mxu0 %v969
    %2189 = vmatpush1.bf16.msra.mxu0 %v968
    %2190 = vmatprep.subr.bf16.mxu0 %v973
    %2191 = vmatpush1.bf16.msra.mxu0 %v972
    %2192 = vmatprep.subr.bf16.mxu0 %v977
    %2193 = vmatpush1.bf16.msra.mxu0 %v976
    %2194 = vmatprep.subr.bf16.mxu0 %v981
    %2195 = vmatpush1.bf16.msra.mxu0 %v980
    %2196 = vmatprep.subr.bf16.mxu0 %v985
    %2197 = vmatpush1.bf16.msra.mxu0 %v984
    %2198 = vmatprep.subr.bf16.mxu0 %v989
    %2199 = vmatpush1.bf16.msra.mxu0 %v988
    %2200 = vmatprep.subr.bf16.mxu0 %v993
    %2201 = vmatpush1.bf16.msra.mxu0 %v992
    %2202 = vmatprep.subr.bf16.mxu0 %v997
    %2203 = vmatpush1.bf16.msra.mxu0 %v996
    %2204 = vmatprep.subr.bf16.mxu0 %v1001
    %2205 = vmatpush1.bf16.msra.mxu0 %v1000
    %2206 = vmatprep.subr.bf16.mxu0 %v1005
    %2207 = vmatpush1.bf16.msra.mxu0 %v1004
    %2208 = vmatprep.subr.bf16.mxu0 %v1009
    %2209 = vmatpush1.bf16.msra.mxu0 %v1008
    %2210 = vmatprep.subr.bf16.mxu0 %v1013
    %2211 = vmatpush1.bf16.msra.mxu0 %v1012
    %2212 = vmatprep.subr.bf16.mxu0 %v1017
    %2213 = vmatpush1.bf16.msra.mxu0 %v1016
    %2214 = vmatprep.subr.bf16.mxu0 %v1021
    %2215 = vmatpush1.bf16.msra.mxu0 %v1020
    %2216 = vmatprep.subr.bf16.mxu0 %v1025
    %2217 = vmatpush1.bf16.msra.mxu0 %v1024
    %2218 = vmatprep.mubr.bf16.mxu0 %v2144
    %2219 = vmatmul.mubr.bf16.gmra.mrb[0].mxu0 %v2143
    %v2220 = vpop.f32.mrb[0].mxu0
    %v2221 = vadd.f32 %v761, %v2220
    %v2222 = vpop.f32.mrb[0].mxu0
    %v2223 = vadd.f32 %v765, %v2222
    %v2224 = vpop.f32.mrb[0].mxu0
    %v2225 = vpop.f32.mrb[0].mxu0
    %2226 = vdwg.mxu0
    %v2227 = vmul.f32 %v2180, 0.5
    %v2228 = vtanh.pop %v2227
    %v2229 = vmul.f32 %v2228, 0.5
    %v2230 = vadd.f32 %v2229, 0.5
    %v2231 = vmul.f32 %v2182, 0.5
    %v2232 = vtanh.pop %v2231
    %v2233 = vmul.f32 %v2232, 0.5
    %v2234 = vadd.f32 %v2233, 0.5
    %v2235 = vtanh.pop %v2221
    %v2236 = vmul.f32 %v2223, 0.5
    %v2237 = vtanh.pop %v2236
    %v2238 = vmul.f32 %v2237, 0.5
    %v2239 = vadd.f32 %v2238, 0.5
    %v2240 = vmul.f32 %v2234, %v2031
    %v2241 = vmul.f32 %v2230, %v2235
    %v2242 = vadd.f32 %v2240, %v2241
    %v2243 = vtanh.pop %v2242
    %v2244 = vmul.f32 %v2239, %v2243
    %s2245 = scalar_lea.vmem [#allocation2], 192
    %v2246 = vld [vmem:[%s2245] sm:$0xff]
    %v2247 = vld [vmem:[%s2245 + $0x8] sm:$0xff]
    %v2248 = vld [vmem:[%s2245 + $0x10] sm:$0xff]
    %v2249 = vld [vmem:[%s2245 + $0x18] sm:$0xff]
    %2250 = vmatprep.subr.bf16.mxu0 %v580
    %2251 = vmatpush1.bf16.msra.mxu0 %v579
    %2252 = vmatprep.subr.bf16.mxu0 %v584
    %2253 = vmatpush1.bf16.msra.mxu0 %v583
    %2254 = vmatprep.subr.bf16.mxu0 %v588
    %2255 = vmatpush1.bf16.msra.mxu0 %v587
    %2256 = vmatprep.subr.bf16.mxu0 %v592
    %2257 = vmatpush1.bf16.msra.mxu0 %v591
    %2258 = vmatprep.subr.bf16.mxu0 %v596
    %2259 = vmatpush1.bf16.msra.mxu0 %v595
    %2260 = vmatprep.subr.bf16.mxu0 %v600
    %2261 = vmatpush1.bf16.msra.mxu0 %v599
    %2262 = vmatprep.subr.bf16.mxu0 %v604
    %2263 = vmatpush1.bf16.msra.mxu0 %v603
    %2264 = vmatprep.subr.bf16.mxu0 %v608
    %2265 = vmatpush1.bf16.msra.mxu0 %v607
    %2266 = vmatprep.subr.bf16.mxu0 0
    %2267 = vmatpush1.bf16.msra.mxu0 0
    %2268 = vmatprep.subr.bf16.mxu0 0
    %2269 = vmatpush1.bf16.msra.mxu0 0
    %2270 = vmatprep.subr.bf16.mxu0 0
    %2271 = vmatpush1.bf16.msra.mxu0 0
    %2272 = vmatprep.subr.bf16.mxu0 0
    %2273 = vmatpush1.bf16.msra.mxu0 0
    %2274 = vmatprep.subr.bf16.mxu0 0
    %2275 = vmatpush1.bf16.msra.mxu0 0
    %2276 = vmatprep.subr.bf16.mxu0 0
    %2277 = vmatpush1.bf16.msra.mxu0 0
    %2278 = vmatprep.subr.bf16.mxu0 0
    %2279 = vmatpush1.bf16.msra.mxu0 0
    %2280 = vmatprep.subr.bf16.mxu0 0
    %2281 = vmatpush1.bf16.msra.mxu0 0
    %2282 = vmatprep.mubr.bf16.mxu0 0
    %2283 = vmatmul.mubr.bf16.gmra.mrb[0].mxu0 %v2143
    %v2284 = vpop.f32.mrb[0].mxu0
    %v2285 = vadd.f32 0.0, %v2284
    %v2286 = vpop.f32.mrb[0].mxu0
    %v2287 = vadd.f32 0.0, %v2286
    %v2288 = vpop.f32.mrb[0].mxu0
    %v2289 = vpop.f32.mrb[0].mxu0
    %2290 = vdwg.mxu0
    %2291 = vmatprep.subr.bf16.mxu0 %v582
    %2292 = vmatpush1.bf16.msra.mxu0 %v581
    %2293 = vmatprep.subr.bf16.mxu0 %v586
    %2294 = vmatpush1.bf16.msra.mxu0 %v585
    %2295 = vmatprep.subr.bf16.mxu0 %v590
    %2296 = vmatpush1.bf16.msra.mxu0 %v589
    %2297 = vmatprep.subr.bf16.mxu0 %v594
    %2298 = vmatpush1.bf16.msra.mxu0 %v593
    %2299 = vmatprep.subr.bf16.mxu0 %v598
    %2300 = vmatpush1.bf16.msra.mxu0 %v597
    %2301 = vmatprep.subr.bf16.mxu0 %v602
    %2302 = vmatpush1.bf16.msra.mxu0 %v601
    %2303 = vmatprep.subr.bf16.mxu0 %v606
    %2304 = vmatpush1.bf16.msra.mxu0 %v605
    %2305 = vmatprep.subr.bf16.mxu0 %v610
    %2306 = vmatpush1.bf16.msra.mxu0 %v609
    %2307 = vmatprep.subr.bf16.mxu0 0
    %2308 = vmatpush1.bf16.msra.mxu0 0
    %2309 = vmatprep.subr.bf16.mxu0 0
    %2310 = vmatpush1.bf16.msra.mxu0 0
    %2311 = vmatprep.subr.bf16.mxu0 0
    %2312 = vmatpush1.bf16.msra.mxu0 0
    %2313 = vmatprep.subr.bf16.mxu0 0
    %2314 = vmatpush1.bf16.msra.mxu0 0
    %2315 = vmatprep.subr.bf16.mxu0 0
    %2316 = vmatpush1.bf16.msra.mxu0 0
    %2317 = vmatprep.subr.bf16.mxu0 0
    %2318 = vmatpush1.bf16.msra.mxu0 0
    %2319 = vmatprep.subr.bf16.mxu0 0
    %2320 = vmatpush1.bf16.msra.mxu0 0
    %2321 = vmatprep.subr.bf16.mxu0 0
    %2322 = vmatpush1.bf16.msra.mxu0 0
    %2323 = vmatprep.mubr.bf16.mxu0 0
    %2324 = vmatmul.mubr.bf16.gmra.mrb[0].mxu0 %v2143
    %v2325 = vpop.f32.mrb[0].mxu0
    %v2326 = vadd.f32 0.0, %v2325
    %v2327 = vpop.f32.mrb[0].mxu0
    %v2328 = vadd.f32 0.0, %v2327
    %v2329 = vpop.f32.mrb[0].mxu0
    %v2330 = vpop.f32.mrb[0].mxu0
    %2331 = vdwg.mxu0
    %v2332 = vadd.f32 %v2246, %v2285
    %v2333 = vadd.f32 %v2247, %v2287
    %v2334 = vadd.f32 %v2248, %v2326
    %v2335 = vadd.f32 %v2249, %v2328
    %v2336 = vmul.f32 %v2332, 0.5
    %v2337 = vtanh.pop %v2336
    %v2338 = vmul.f32 %v2337, 0.5
    %v2339 = vadd.f32 %v2338, 0.5
    %v2340 = vmul.f32 %v2333, 0.5
    %v2341 = vtanh.pop %v2340
    %v2342 = vmul.f32 %v2341, 0.5
    %v2343 = vadd.f32 %v2342, 0.5
    %v2344 = vtanh.pop %v2334
    %v2345 = vmul.f32 %v2335, 0.5
    %v2346 = vtanh.pop %v2345
    %v2347 = vmul.f32 %v2346, 0.5
    %v2348 = vadd.f32 %v2347, 0.5
    %v2349 = vmul.f32 %v2343, %v2140
    %v2350 = vmul.f32 %v2339, %v2344
    %v2351 = vadd.f32 %v2349, %v2350
    %v2352 = vtanh.pop %v2351
    %v2353 = vmul.f32 %v2348, %v2352
    %v2354 = vpack.c.bf16 %v2353, %v2353
    %v2355 = vpack.c.bf16 %v2244, %v2244
    %2356 = vmatprep.subr.bf16.mxu0 %v963
    %2357 = vmatpush1.bf16.msra.mxu0 %v962
    %2358 = vmatprep.subr.bf16.mxu0 %v967
    %2359 = vmatpush1.bf16.msra.mxu0 %v966
    %2360 = vmatprep.subr.bf16.mxu0 %v971
    %2361 = vmatpush1.bf16.msra.mxu0 %v970
    %2362 = vmatprep.subr.bf16.mxu0 %v975
    %2363 = vmatpush1.bf16.msra.mxu0 %v974
    %2364 = vmatprep.subr.bf16.mxu0 %v979
    %2365 = vmatpush1.bf16.msra.mxu0 %v978
    %2366 = vmatprep.subr.bf16.mxu0 %v983
    %2367 = vmatpush1.bf16.msra.mxu0 %v982
    %2368 = vmatprep.subr.bf16.mxu0 %v987
    %2369 = vmatpush1.bf16.msra.mxu0 %v986
    %2370 = vmatprep.subr.bf16.mxu0 %v991
    %2371 = vmatpush1.bf16.msra.mxu0 %v990
    %2372 = vmatprep.subr.bf16.mxu0 %v995
    %2373 = vmatpush1.bf16.msra.mxu0 %v994
    %2374 = vmatprep.subr.bf16.mxu0 %v999
    %2375 = vmatpush1.bf16.msra.mxu0 %v998
    %2376 = vmatprep.subr.bf16.mxu0 %v1003
    %2377 = vmatpush1.bf16.msra.mxu0 %v1002
    %2378 = vmatprep.subr.bf16.mxu0 %v1007
    %2379 = vmatpush1.bf16.msra.mxu0 %v1006
    %2380 = vmatprep.subr.bf16.mxu0 %v1011
    %2381 = vmatpush1.bf16.msra.mxu0 %v1010
    %2382 = vmatprep.subr.bf16.mxu0 %v1015
    %2383 = vmatpush1.bf16.msra.mxu0 %v1014
    %2384 = vmatprep.subr.bf16.mxu0 %v1019
    %2385 = vmatpush1.bf16.msra.mxu0 %v1018
    %2386 = vmatprep.subr.bf16.mxu0 %v1023
    %2387 = vmatpush1.bf16.msra.mxu0 %v1022
    %2388 = vmatprep.mubr.bf16.mxu0 %v2355
    %2389 = vmatmul.mubr.bf16.gmra.mrb[0].mxu0 %v2354
    %v2390 = vpop.f32.mrb[0].mxu0
    %v2391 = vadd.f32 %v753, %v2390
    %v2392 = vpop.f32.mrb[0].mxu0
    %v2393 = vadd.f32 %v757, %v2392
    %v2394 = vpop.f32.mrb[0].mxu0
    %v2395 = vpop.f32.mrb[0].mxu0
    %2396 = vdwg.mxu0
    %2397 = vmatprep.subr.bf16.mxu0 %v965
    %2398 = vmatpush1.bf16.msra.mxu0 %v964
    %2399 = vmatprep.subr.bf16.mxu0 %v969
    %2400 = vmatpush1.bf16.msra.mxu0 %v968
    %2401 = vmatprep.subr.bf16.mxu0 %v973
    %2402 = vmatpush1.bf16.msra.mxu0 %v972
    %2403 = vmatprep.subr.bf16.mxu0 %v977
    %2404 = vmatpush1.bf16.msra.mxu0 %v976
    %2405 = vmatprep.subr.bf16.mxu0 %v981
    %2406 = vmatpush1.bf16.msra.mxu0 %v980
    %2407 = vmatprep.subr.bf16.mxu0 %v985
    %2408 = vmatpush1.bf16.msra.mxu0 %v984
    %2409 = vmatprep.subr.bf16.mxu0 %v989
    %2410 = vmatpush1.bf16.msra.mxu0 %v988
    %2411 = vmatprep.subr.bf16.mxu0 %v993
    %2412 = vmatpush1.bf16.msra.mxu0 %v992
    %2413 = vmatprep.subr.bf16.mxu0 %v997
    %2414 = vmatpush1.bf16.msra.mxu0 %v996
    %2415 = vmatprep.subr.bf16.mxu0 %v1001
    %2416 = vmatpush1.bf16.msra.mxu0 %v1000
    %2417 = vmatprep.subr.bf16.mxu0 %v1005
    %2418 = vmatpush1.bf16.msra.mxu0 %v1004
    %2419 = vmatprep.subr.bf16.mxu0 %v1009
    %2420 = vmatpush1.bf16.msra.mxu0 %v1008
    %2421 = vmatprep.subr.bf16.mxu0 %v1013
    %2422 = vmatpush1.bf16.msra.mxu0 %v1012
    %2423 = vmatprep.subr.bf16.mxu0 %v1017
    %2424 = vmatpush1.bf16.msra.mxu0 %v1016
    %2425 = vmatprep.subr.bf16.mxu0 %v1021
    %2426 = vmatpush1.bf16.msra.mxu0 %v1020
    %2427 = vmatprep.subr.bf16.mxu0 %v1025
    %2428 = vmatpush1.bf16.msra.mxu0 %v1024
    %2429 = vmatprep.mubr.bf16.mxu0 %v2355
    %2430 = vmatmul.mubr.bf16.gmra.mrb[0].mxu0 %v2354
    %v2431 = vpop.f32.mrb[0].mxu0
    %v2432 = vadd.f32 %v761, %v2431
    %v2433 = vpop.f32.mrb[0].mxu0
    %v2434 = vadd.f32 %v765, %v2433
    %v2435 = vpop.f32.mrb[0].mxu0
    %v2436 = vpop.f32.mrb[0].mxu0
    %2437 = vdwg.mxu0
    %v2438 = vmul.f32 %v2391, 0.5
    %v2439 = vtanh.pop %v2438
    %v2440 = vmul.f32 %v2439, 0.5
    %v2441 = vadd.f32 %v2440, 0.5
    %v2442 = vmul.f32 %v2393, 0.5
    %v2443 = vtanh.pop %v2442
    %v2444 = vmul.f32 %v2443, 0.5
    %v2445 = vadd.f32 %v2444, 0.5
    %v2446 = vtanh.pop %v2432
    %v2447 = vmul.f32 %v2434, 0.5
    %v2448 = vtanh.pop %v2447
    %v2449 = vmul.f32 %v2448, 0.5
    %v2450 = vadd.f32 %v2449, 0.5
    %v2451 = vmul.f32 %v2445, %v2242
    %v2452 = vmul.f32 %v2441, %v2446
    %v2453 = vadd.f32 %v2451, %v2452
    %v2454 = vtanh.pop %v2453
    %v2455 = vmul.f32 %v2450, %v2454
    %s2456 = scalar_lea.vmem [#allocation2], 224
    %v2457 = vld [vmem:[%s2456] sm:$0xff]
    %v2458 = vld [vmem:[%s2456 + $0x8] sm:$0xff]
    %v2459 = vld [vmem:[%s2456 + $0x10] sm:$0xff]
    %v2460 = vld [vmem:[%s2456 + $0x18] sm:$0xff]
    %2461 = vmatprep.subr.bf16.mxu0 %v580
    %2462 = vmatpush1.bf16.msra.mxu0 %v579
    %2463 = vmatprep.subr.bf16.mxu0 %v584
    %2464 = vmatpush1.bf16.msra.mxu0 %v583
    %2465 = vmatprep.subr.bf16.mxu0 %v588
    %2466 = vmatpush1.bf16.msra.mxu0 %v587
    %2467 = vmatprep.subr.bf16.mxu0 %v592
    %2468 = vmatpush1.bf16.msra.mxu0 %v591
    %2469 = vmatprep.subr.bf16.mxu0 %v596
    %2470 = vmatpush1.bf16.msra.mxu0 %v595
    %2471 = vmatprep.subr.bf16.mxu0 %v600
    %2472 = vmatpush1.bf16.msra.mxu0 %v599
    %2473 = vmatprep.subr.bf16.mxu0 %v604
    %2474 = vmatpush1.bf16.msra.mxu0 %v603
    %2475 = vmatprep.subr.bf16.mxu0 %v608
    %2476 = vmatpush1.bf16.msra.mxu0 %v607
    %2477 = vmatprep.subr.bf16.mxu0 0
    %2478 = vmatpush1.bf16.msra.mxu0 0
    %2479 = vmatprep.subr.bf16.mxu0 0
    %2480 = vmatpush1.bf16.msra.mxu0 0
    %2481 = vmatprep.subr.bf16.mxu0 0
    %2482 = vmatpush1.bf16.msra.mxu0 0
    %2483 = vmatprep.subr.bf16.mxu0 0
    %2484 = vmatpush1.bf16.msra.mxu0 0
    %2485 = vmatprep.subr.bf16.mxu0 0
    %2486 = vmatpush1.bf16.msra.mxu0 0
    %2487 = vmatprep.subr.bf16.mxu0 0
    %2488 = vmatpush1.bf16.msra.mxu0 0
    %2489 = vmatprep.subr.bf16.mxu0 0
    %2490 = vmatpush1.bf16.msra.mxu0 0
    %2491 = vmatprep.subr.bf16.mxu0 0
    %2492 = vmatpush1.bf16.msra.mxu0 0
    %2493 = vmatprep.mubr.bf16.mxu0 0
    %2494 = vmatmul.mubr.bf16.gmra.mrb[0].mxu0 %v2354
    %v2495 = vpop.f32.mrb[0].mxu0
    %v2496 = vadd.f32 0.0, %v2495
    %v2497 = vpop.f32.mrb[0].mxu0
    %v2498 = vadd.f32 0.0, %v2497
    %v2499 = vpop.f32.mrb[0].mxu0
    %v2500 = vpop.f32.mrb[0].mxu0
    %2501 = vdwg.mxu0
    %2502 = vmatprep.subr.bf16.mxu0 %v582
    %2503 = vmatpush1.bf16.msra.mxu0 %v581
    %2504 = vmatprep.subr.bf16.mxu0 %v586
    %2505 = vmatpush1.bf16.msra.mxu0 %v585
    %2506 = vmatprep.subr.bf16.mxu0 %v590
    %2507 = vmatpush1.bf16.msra.mxu0 %v589
    %2508 = vmatprep.subr.bf16.mxu0 %v594
    %2509 = vmatpush1.bf16.msra.mxu0 %v593
    %2510 = vmatprep.subr.bf16.mxu0 %v598
    %2511 = vmatpush1.bf16.msra.mxu0 %v597
    %2512 = vmatprep.subr.bf16.mxu0 %v602
    %2513 = vmatpush1.bf16.msra.mxu0 %v601
    %2514 = vmatprep.subr.bf16.mxu0 %v606
    %2515 = vmatpush1.bf16.msra.mxu0 %v605
    %2516 = vmatprep.subr.bf16.mxu0 %v610
    %2517 = vmatpush1.bf16.msra.mxu0 %v609
    %2518 = vmatprep.subr.bf16.mxu0 0
    %2519 = vmatpush1.bf16.msra.mxu0 0
    %2520 = vmatprep.subr.bf16.mxu0 0
    %2521 = vmatpush1.bf16.msra.mxu0 0
    %2522 = vmatprep.subr.bf16.mxu0 0
    %2523 = vmatpush1.bf16.msra.mxu0 0
    %2524 = vmatprep.subr.bf16.mxu0 0
    %2525 = vmatpush1.bf16.msra.mxu0 0
    %2526 = vmatprep.subr.bf16.mxu0 0
    %2527 = vmatpush1.bf16.msra.mxu0 0
    %2528 = vmatprep.subr.bf16.mxu0 0
    %2529 = vmatpush1.bf16.msra.mxu0 0
    %2530 = vmatprep.subr.bf16.mxu0 0
    %2531 = vmatpush1.bf16.msra.mxu0 0
    %2532 = vmatprep.subr.bf16.mxu0 0
    %2533 = vmatpush1.bf16.msra.mxu0 0
    %2534 = vmatprep.mubr.bf16.mxu0 0
    %2535 = vmatmul.mubr.bf16.gmra.mrb[0].mxu0 %v2354
    %v2536 = vpop.f32.mrb[0].mxu0
    %v2537 = vadd.f32 0.0, %v2536
    %v2538 = vpop.f32.mrb[0].mxu0
    %v2539 = vadd.f32 0.0, %v2538
    %v2540 = vpop.f32.mrb[0].mxu0
    %v2541 = vpop.f32.mrb[0].mxu0
    %2542 = vdwg.mxu0
    %v2543 = vadd.f32 %v2457, %v2496
    %v2544 = vadd.f32 %v2458, %v2498
    %v2545 = vadd.f32 %v2459, %v2537
    %v2546 = vadd.f32 %v2460, %v2539
    %v2547 = vmul.f32 %v2543, 0.5
    %v2548 = vtanh.pop %v2547
    %v2549 = vmul.f32 %v2548, 0.5
    %v2550 = vadd.f32 %v2549, 0.5
    %v2551 = vmul.f32 %v2544, 0.5
    %v2552 = vtanh.pop %v2551
    %v2553 = vmul.f32 %v2552, 0.5
    %v2554 = vadd.f32 %v2553, 0.5
    %v2555 = vtanh.pop %v2545
    %v2556 = vmul.f32 %v2546, 0.5
    %v2557 = vtanh.pop %v2556
    %v2558 = vmul.f32 %v2557, 0.5
    %v2559 = vadd.f32 %v2558, 0.5
    %v2560 = vmul.f32 %v2554, %v2351
    %v2561 = vmul.f32 %v2550, %v2555
    %v2562 = vadd.f32 %v2560, %v2561
    %v2563 = vtanh.pop %v2562
    %v2564 = vmul.f32 %v2559, %v2563
    %v2565 = vpack.c.bf16 %v2564, %v2564
    %v2566 = vpack.c.bf16 %v2455, %v2455
    %2567 = vmatprep.subr.bf16.mxu0 %v963
    %2568 = vmatpush1.bf16.msra.mxu0 %v962
    %2569 = vmatprep.subr.bf16.mxu0 %v967
    %2570 = vmatpush1.bf16.msra.mxu0 %v966
    %2571 = vmatprep.subr.bf16.mxu0 %v971
    %2572 = vmatpush1.bf16.msra.mxu0 %v970
    %2573 = vmatprep.subr.bf16.mxu0 %v975
    %2574 = vmatpush1.bf16.msra.mxu0 %v974
    %2575 = vmatprep.subr.bf16.mxu0 %v979
    %2576 = vmatpush1.bf16.msra.mxu0 %v978
    %2577 = vmatprep.subr.bf16.mxu0 %v983
    %2578 = vmatpush1.bf16.msra.mxu0 %v982
    %2579 = vmatprep.subr.bf16.mxu0 %v987
    %2580 = vmatpush1.bf16.msra.mxu0 %v986
    %2581 = vmatprep.subr.bf16.mxu0 %v991
    %2582 = vmatpush1.bf16.msra.mxu0 %v990
    %2583 = vmatprep.subr.bf16.mxu0 %v995
    %2584 = vmatpush1.bf16.msra.mxu0 %v994
    %2585 = vmatprep.subr.bf16.mxu0 %v999
    %2586 = vmatpush1.bf16.msra.mxu0 %v998
    %2587 = vmatprep.subr.bf16.mxu0 %v1003
    %2588 = vmatpush1.bf16.msra.mxu0 %v1002
    %2589 = vmatprep.subr.bf16.mxu0 %v1007
    %2590 = vmatpush1.bf16.msra.mxu0 %v1006
    %2591 = vmatprep.subr.bf16.mxu0 %v1011
    %2592 = vmatpush1.bf16.msra.mxu0 %v1010
    %2593 = vmatprep.subr.bf16.mxu0 %v1015
    %2594 = vmatpush1.bf16.msra.mxu0 %v1014
    %2595 = vmatprep.subr.bf16.mxu0 %v1019
    %2596 = vmatpush1.bf16.msra.mxu0 %v1018
    %2597 = vmatprep.subr.bf16.mxu0 %v1023
    %2598 = vmatpush1.bf16.msra.mxu0 %v1022
    %2599 = vmatprep.mubr.bf16.mxu0 %v2566
    %2600 = vmatmul.mubr.bf16.gmra.mrb[0].mxu0 %v2565
    %v2601 = vpop.f32.mrb[0].mxu0
    %v2602 = vadd.f32 %v753, %v2601
    %v2603 = vpop.f32.mrb[0].mxu0
    %v2604 = vadd.f32 %v757, %v2603
    %v2605 = vpop.f32.mrb[0].mxu0
    %v2606 = vpop.f32.mrb[0].mxu0
    %2607 = vdwg.mxu0
    %2608 = vmatprep.subr.bf16.mxu0 %v965
    %2609 = vmatpush1.bf16.msra.mxu0 %v964
    %2610 = vmatprep.subr.bf16.mxu0 %v969
    %2611 = vmatpush1.bf16.msra.mxu0 %v968
    %2612 = vmatprep.subr.bf16.mxu0 %v973
    %2613 = vmatpush1.bf16.msra.mxu0 %v972
    %2614 = vmatprep.subr.bf16.mxu0 %v977
    %2615 = vmatpush1.bf16.msra.mxu0 %v976
    %2616 = vmatprep.subr.bf16.mxu0 %v981
    %2617 = vmatpush1.bf16.msra.mxu0 %v980
    %2618 = vmatprep.subr.bf16.mxu0 %v985
    %2619 = vmatpush1.bf16.msra.mxu0 %v984
    %2620 = vmatprep.subr.bf16.mxu0 %v989
    %2621 = vmatpush1.bf16.msra.mxu0 %v988
    %2622 = vmatprep.subr.bf16.mxu0 %v993
    %2623 = vmatpush1.bf16.msra.mxu0 %v992
    %2624 = vmatprep.subr.bf16.mxu0 %v997
    %2625 = vmatpush1.bf16.msra.mxu0 %v996
    %2626 = vmatprep.subr.bf16.mxu0 %v1001
    %2627 = vmatpush1.bf16.msra.mxu0 %v1000
    %2628 = vmatprep.subr.bf16.mxu0 %v1005
    %2629 = vmatpush1.bf16.msra.mxu0 %v1004
    %2630 = vmatprep.subr.bf16.mxu0 %v1009
    %2631 = vmatpush1.bf16.msra.mxu0 %v1008
    %2632 = vmatprep.subr.bf16.mxu0 %v1013
    %2633 = vmatpush1.bf16.msra.mxu0 %v1012
    %2634 = vmatprep.subr.bf16.mxu0 %v1017
    %2635 = vmatpush1.bf16.msra.mxu0 %v1016
    %2636 = vmatprep.subr.bf16.mxu0 %v1021
    %2637 = vmatpush1.bf16.msra.mxu0 %v1020
    %2638 = vmatprep.subr.bf16.mxu0 %v1025
    %2639 = vmatpush1.bf16.msra.mxu0 %v1024
    %2640 = vmatprep.mubr.bf16.mxu0 %v2566
    %2641 = vmatmul.mubr.bf16.gmra.mrb[0].mxu0 %v2565
    %v2642 = vpop.f32.mrb[0].mxu0
    %v2643 = vadd.f32 %v761, %v2642
    %v2644 = vpop.f32.mrb[0].mxu0
    %v2645 = vadd.f32 %v765, %v2644
    %v2646 = vpop.f32.mrb[0].mxu0
    %v2647 = vpop.f32.mrb[0].mxu0
    %2648 = vdwg.mxu0
    %v2649 = vmul.f32 %v2602, 0.5
    %v2650 = vtanh.pop %v2649
    %v2651 = vmul.f32 %v2650, 0.5
    %v2652 = vadd.f32 %v2651, 0.5
    %v2653 = vmul.f32 %v2604, 0.5
    %v2654 = vtanh.pop %v2653
    %v2655 = vmul.f32 %v2654, 0.5
    %v2656 = vadd.f32 %v2655, 0.5
    %v2657 = vtanh.pop %v2643
    %v2658 = vmul.f32 %v2645, 0.5
    %v2659 = vtanh.pop %v2658
    %v2660 = vmul.f32 %v2659, 0.5
    %v2661 = vadd.f32 %v2660, 0.5
    %v2662 = vmul.f32 %v2656, %v2453
    %v2663 = vmul.f32 %v2652, %v2657
    %v2664 = vadd.f32 %v2662, %v2663
    %v2665 = vtanh.pop %v2664
    %v2666 = vmul.f32 %v2661, %v2665
    %v2667 = vld [vmem:[%s6] sm:$0xff]
    %v2668 = vld [vmem:[%s6 + $0x8] sm:$0xff]
    %v2669 = vld [vmem:[%s6 + $0x10] sm:$0xff]
    %v2670 = vld [vmem:[%s6 + $0x18] sm:$0xff]
    %v2671 = vld [vmem:[%s6 + $0x20] sm:$0xff]
    %v2672 = vld [vmem:[%s6 + $0x28] sm:$0xff]
    %v2673 = vld [vmem:[%s6 + $0x30] sm:$0xff]
    %v2674 = vld [vmem:[%s6 + $0x38] sm:$0xff]
    %v2675 = vld [vmem:[%s6 + $0x40] sm:$0xff]
    %v2676 = vld [vmem:[%s6 + $0x48] sm:$0xff]
    %v2677 = vld [vmem:[%s6 + $0x50] sm:$0xff]
    %v2678 = vld [vmem:[%s6 + $0x58] sm:$0xff]
    %v2679 = vld [vmem:[%s6 + $0x60] sm:$0xff]
    %v2680 = vld [vmem:[%s6 + $0x68] sm:$0xff]
    %v2681 = vld [vmem:[%s6 + $0x70] sm:$0xff]
    %v2682 = vld [vmem:[%s6 + $0x78] sm:$0xff]
    %v2683 = vld [vmem:[%s7] sm:$0x1]
    %v2685 = vlaneseq
    %v2686 = vshrl.u32 %v2685, 7
    %v2687 = vsub.s32 0, %v2686
    %v2688 = vrot.slane %v2683, %v2687
    %2690 = vmatprep.subr.mxu0 0.0
    %2691 = vmatpush1.msra.mxu0 %v2667
    %2692 = vmatprep.subr.mxu0 0.0
    %2693 = vmatpush1.msra.mxu0 %v2668
    %2694 = vmatprep.subr.mxu0 0.0
    %2695 = vmatpush1.msra.mxu0 %v2669
    %2696 = vmatprep.subr.mxu0 0.0
    %2697 = vmatpush1.msra.mxu0 %v2670
    %2698 = vmatprep.subr.mxu0 0.0
    %2699 = vmatpush1.msra.mxu0 %v2671
    %2700 = vmatprep.subr.mxu0 0.0
    %2701 = vmatpush1.msra.mxu0 %v2672
    %2702 = vmatprep.subr.mxu0 0.0
    %2703 = vmatpush1.msra.mxu0 %v2673
    %2704 = vmatprep.subr.mxu0 0.0
    %2705 = vmatpush1.msra.mxu0 %v2674
    %2706 = vmatprep.subr.mxu0 0.0
    %2707 = vmatpush1.msra.mxu0 %v2675
    %2708 = vmatprep.subr.mxu0 0.0
    %2709 = vmatpush1.msra.mxu0 %v2676
    %2710 = vmatprep.subr.mxu0 0.0
    %2711 = vmatpush1.msra.mxu0 %v2677
    %2712 = vmatprep.subr.mxu0 0.0
    %2713 = vmatpush1.msra.mxu0 %v2678
    %2714 = vmatprep.subr.mxu0 0.0
    %2715 = vmatpush1.msra.mxu0 %v2679
    %2716 = vmatprep.subr.mxu0 0.0
    %2717 = vmatpush1.msra.mxu0 %v2680
    %2718 = vmatprep.subr.mxu0 0.0
    %2719 = vmatpush1.msra.mxu0 %v2681
    %2720 = vmatprep.subr.mxu0 0.0
    %2721 = vmatpush1.msra.mxu0 %v2682
    %2722 = vmatprep.subr.mxu0 0.0
    %2723 = vmatpush1.msra.mxu0 0.0
    %2724 = vmatprep.subr.mxu0 0.0
    %2725 = vmatpush1.msra.mxu0 0.0
    %2726 = vmatprep.subr.mxu0 0.0
    %2727 = vmatpush1.msra.mxu0 0.0
    %2728 = vmatprep.subr.mxu0 0.0
    %2729 = vmatpush1.msra.mxu0 0.0
    %2730 = vmatprep.subr.mxu0 0.0
    %2731 = vmatpush1.msra.mxu0 0.0
    %2732 = vmatprep.subr.mxu0 0.0
    %2733 = vmatpush1.msra.mxu0 0.0
    %2734 = vmatprep.subr.mxu0 0.0
    %2735 = vmatpush1.msra.mxu0 0.0
    %2736 = vmatprep.subr.mxu0 0.0
    %2737 = vmatpush1.msra.mxu0 0.0
    %2738 = vmatprep.subr.mxu0 0.0
    %2739 = vmatpush1.msra.mxu0 0.0
    %2740 = vmatprep.subr.mxu0 0.0
    %2741 = vmatpush1.msra.mxu0 0.0
    %2742 = vmatprep.subr.mxu0 0.0
    %2743 = vmatpush1.msra.mxu0 0.0
    %2744 = vmatprep.subr.mxu0 0.0
    %2745 = vmatpush1.msra.mxu0 0.0
    %2746 = vmatprep.subr.mxu0 0.0
    %2747 = vmatpush1.msra.mxu0 0.0
    %2748 = vmatprep.subr.mxu0 0.0
    %2749 = vmatpush1.msra.mxu0 0.0
    %2750 = vmatprep.subr.mxu0 0.0
    %2751 = vmatpush1.msra.mxu0 0.0
    %2752 = vmatprep.subr.mxu0 0.0
    %2753 = vmatpush1.msra.mxu0 0.0
    %2754 = vmatprep.mubr.f32.mxu0 0.0
    %2755 = vmatmul.mubr.f32.gmra.mrb[0].mxu0 %v2666
    %v2756 = vpop.f32.mrb[0].mxu0
    %v2757 = vadd.f32 %v2688, %v2756
    %v2758 = vpop.f32.mrb[0].mxu0
    %2759 = vdwg.mxu0
    %v2760 = vmax.f32 %v2757, 0.0
    %v2761 = vld [vmem:[%s8] sm:$0x1]
    %v2763 = vlaneseq
    %v2764 = vshrl.u32 %v2763, 7
    %v2765 = vsub.s32 0, %v2764
    %v2766 = vrot.slane %v2761, %v2765
    %v2768 = vmul.f32 %v2760, %v2766
    %vm2769 = vcmask 261120
    %v2770 = vsel %vm2769, %v2768, 0.0
    %2771 = vadd.xlane.f32.xlu0 %v2770
    %v2772 = vpop.xlane.xlu0 %2771
    %s2773 = sld [smem:[#allocation3]]
    %v2774 = vstv %s2773
    %v2775 = vadd.f32 %v2772, %v2774
    %v2776 = vmul.f32 %v2775, 0.5
    %v2777 = vtanh.pop %v2776
    %v2778 = vmul.f32 %v2777, 0.5
    %v2779 = vadd.f32 %v2778, 0.5
    %vm2780 = vcmask 7168
    %2781 = vst.msk [vmem:[%s10] sm:$0xff] %vm2780, %v2779
    // Predicated region
    $region50: #{tpu_custom_call.1} parent=1 // pred_check
      _
    $region51: #{tpu_custom_call.1} parent=1 // pred_check_branch
      %2783 = sbr.rel (0) target = $region53
    $region52: #{tpu_custom_call.1} parent=1 // pred_region
      _
    $region53: #{tpu_custom_call.1} parent=1 // pred_fallthru
      _
    // Predicated region
    $region54: #{tpu_custom_call.1} parent=1 // pred_check
      _
    $region55: #{tpu_custom_call.1} parent=1 // pred_check_branch
      %2785 = sbr.rel (0) target = $region57
    $region56: #{tpu_custom_call.1} parent=1 // pred_region
      _
    $region57: #{tpu_custom_call.1} parent=1 // pred_fallthru
      _
    %2786 = vsyncpa [#allocation5], 1
    %2787 = vsyncpa [#allocation7], 1

</llo_original>
